<compile_context>
chip_gen: v7x
topology: tpu7x:2x2x1
jax: 0.10.0
libtpu: 0.0.40
codegen_flags: <defaults>
</compile_context>

<pallas_src>
import numpy as np
import jax
import jax.numpy as jnp
from jax import lax
from jax.experimental import pallas as pl
from jax.experimental.pallas import tpu as pltpu


# ----------------------------- kernel helpers -----------------------------


def _silu(x):
    # x * sigmoid(x).  The reciprocal runs on the EUP (off the VALU slot);
    # approx=False keeps close parity with torch.nn.SiLU.
    return x * pl.reciprocal(1.0 + jnp.exp(-x), approx=False)


def _group_norm(h, num_samples, hw, m_norm, gamma, beta, eps=1e-5):
    """GroupNorm on a (num_samples*hw, C) f32 activation block.

    m_norm is a precomputed (C, C) matrix with m_norm[i, j] = 1/(hw * C/groups)
    where channels i and j share a group, else 0, so a single MXU dot turns the
    per-channel sums into per-channel group means (nn.GroupNorm semantics).
    """
    C = h.shape[-1]
    hb = h.reshape(num_samples, hw, C)

    s = jnp.sum(hb, axis=1)            # (B, C) per-channel sums over H*W
    ss = jnp.sum(hb * hb, axis=1)      # (B, C) per-channel sums of squares

    mean_c = jnp.dot(s, m_norm, preferred_element_type=jnp.float32)    # (B, C)
    msq_c = jnp.dot(ss, m_norm, preferred_element_type=jnp.float32)    # (B, C)
    # TODO(synk): single-pass E[x^2]-mean^2 in f32; switch to a shifted/two-pass
    # variance if |mean| >> std ever makes this diverge from nn.GroupNorm.
    var_c = jnp.maximum(msq_c - mean_c * mean_c, 0.0)
    inv_c = lax.rsqrt(var_c + eps)

    # Fused affine: hn = hb * scale + bias  (2 VPU ops per element).
    scale_c = inv_c * gamma                    # (B, C)
    bias_c = beta - mean_c * scale_c           # (B, C)
    out = hb * scale_c[:, None, :] + bias_c[:, None, :]
    return out.reshape(num_samples * hw, C)


def _pool5_axis(x, axis):
    """5-wide max along `axis`, stride 1, same size.

    Edge-replicated (clamped-index) shifts are exactly equivalent to -inf
    padding under max, so no -inf fill / full-size dynamic_update_slice is
    needed: one 2-element edge concat + 4 statically shifted slices + maxima.
    """
    n = x.shape[axis]

    def sl(a, lo, size):
        idx = [slice(None)] * a.ndim
        idx[axis] = slice(lo, lo + size)
        return a[tuple(idx)]

    first = sl(x, 0, 1)
    last = sl(x, n - 1, 1)
    xp = jnp.concatenate([first, first, x, last, last], axis=axis)   # length n+4
    y = x                                            # center tap (offset 2 in xp)
    for d in (0, 1, 3, 4):
        y = jnp.maximum(y, sl(xp, d, n))
    return y


def _maxpool5_same(x):
    """Separable 5x5 / stride-1 / pad-2 max pool on (B, H, W, C)."""
    # H is an outer (untiled) axis -> shifted slices are cheap block moves;
    # W is the sublane axis -> one small concat + shifted slices per stage.
    # TODO(synk): run the pyramid in bf16 (halves level VMEM and v6e/v7x VPU
    # work) once packed-dtype sublane shifts are validated on all targets.
    return _pool5_axis(_pool5_axis(x, axis=1), axis=2)


# --------------------------------- kernel ---------------------------------


def sppf_kernel(x_ref, w1_ref, g1_ref, b1_ref, m1_ref,
                w2_ref, g2_ref, b2_ref, m2_ref, o_ref):
    BB, H, W, C1 = x_ref.shape
    ch = w1_ref.shape[1]
    c2 = w2_ref.shape[2]
    hw = H * W

    # ---- cv1: 1x1 conv (bf16 MXU, f32 acc) + GroupNorm + SiLU ----
    xf = x_ref[...].reshape(BB * hw, C1).astype(jnp.bfloat16)
    h = jnp.dot(xf, w1_ref[...], preferred_element_type=jnp.float32)
    h = _silu(_group_norm(h, BB, hw, m1_ref[...], g1_ref[...], b1_ref[...]))
    lvl = h.reshape(BB, H, W, ch)                    # pyramid level 0 (f32)

    # ---- cv2 accumulation interleaved with the pooling cascade ----
    # Each level is consumed by its cv2 dot *before* the next pool is produced,
    # so only the current level (+ one padded pool temp) stays live and the
    # channel-axis concat of the reference module never exists.
    def level_dot(level, k):
        a = level.reshape(BB * hw, ch).astype(jnp.bfloat16)
        return jnp.dot(a, w2_ref[k], preferred_element_type=jnp.float32)

    o = level_dot(lvl, 0)
    lvl = _maxpool5_same(lvl)
    o = o + level_dot(lvl, 1)
    lvl = _maxpool5_same(lvl)
    o = o + level_dot(lvl, 2)
    lvl = _maxpool5_same(lvl)
    o = o + level_dot(lvl, 3)

    o = _silu(_group_norm(o, BB, hw, m2_ref[...], g2_ref[...], b2_ref[...]))
    o_ref[...] = o.reshape(BB, H, W, c2).astype(o_ref.dtype)


# -------------------------------- wrapper ---------------------------------


def _same_group_matrix(C, groups, hw):
    """(C, C) matrix: 1/(hw * C/groups) where channels share a group, else 0."""
    cg = C // groups
    ids = np.arange(C) // cg
    m = (ids[:, None] == ids[None, :]).astype(np.float32) / float(hw * cg)
    return jnp.asarray(m)


def _vmem_capacity_bytes():
    # Generation-aware: ~128 MiB on v5e/v6e, 64 MiB per TensorCore on v7x.
    try:
        return int(pltpu.get_tpu_info().vmem_capacity_bytes)
    except Exception:
        return 64 << 20                 # conservative fallback (v7x per-core)


def sppf_pallas(x_nchw, w1, g1, b1, w2, g2, b2):
    """SPPF forward.  x_nchw: (N, C1, H, W) f32 -> (N, C2, H, W) f32.

    w1: (C1, ch)    cv1 1x1-conv weight as a matmul matrix (ch = C1 // 2, no bias)
    w2: (4*ch, C2)  cv2 1x1-conv weight as a matmul matrix (no bias)
    g*/b*: (1, C)   GroupNorm(C // 8, C) affine parameters
    """
    N, C1, H, W = x_nchw.shape
    ch = w1.shape[1]
    c2 = w2.shape[1]
    hw = H * W
    groups1, groups2 = ch // 8, c2 // 8
    assert groups1 >= 1 and ch % groups1 == 0
    assert groups2 >= 1 and c2 % groups2 == 0
    assert w2.shape[0] == 4 * ch

    # NCHW -> NHWC at the boundary only (channels must sit on the lane axis).
    # TODO(synk): keep the surrounding model NHWC (or fold the transpose into the
    # pallas_call with a per-tile transpose) to drop these two extra HBM passes.
    x = jnp.transpose(x_nchw, (0, 2, 3, 1))

    w1b = w1.astype(jnp.bfloat16)
    w2b = w2.reshape(4, ch, c2).astype(jnp.bfloat16)   # per-pyramid-level slabs
    g1 = g1.reshape(1, ch).astype(jnp.float32)
    b1 = b1.reshape(1, ch).astype(jnp.float32)
    g2 = g2.reshape(1, c2).astype(jnp.float32)
    b2 = b2.reshape(1, c2).astype(jnp.float32)
    m1 = _same_group_matrix(ch, groups1, hw)
    m2 = _same_group_matrix(c2, groups2, hw)

    # ---- generation-aware VMEM budgeting / batch-block selection ----
    vmem_cap = _vmem_capacity_bytes()
    # Per-sample working set (bytes): double-buffered in/out blocks + bf16 input
    # cast + cv1/GN f32 activations + live pooled level & pool temp + f32 acc.
    per_sample = hw * (
        2 * 4 * C1              # input block, double-buffered f32
        + 2 * 4 * c2            # output block, double-buffered f32
        + 2 * C1                # bf16 cast of the input rows
        + 4 * ch                # cv1 / GroupNorm f32 activations
        + 3 * 4 * ch            # live pyramid level + pooling temporaries (f32)
        + 4 * c2                # cv2 f32 accumulator
    )
    budget = min(max(vmem_cap // 4, 4 << 20), 40 << 20)   # per-step working set

    # Keep the grid >= 2 steps so double-buffering overlaps DMA with compute and
    # the "parallel" axis can shard across TensorCores (v7x megacore).
    max_bb = max(1, N // 2) if N >= 2 else 1
    bb = 1
    for cand in range(max_bb, 0, -1):
        if N % cand == 0 and cand * per_sample <= budget:
            bb = cand
            break

    vmem_limit = int(min(
        max(2 * bb * per_sample + (4 << 20), 16 << 20),
        max(min(vmem_cap - (16 << 20), 100 << 20), 16 << 20),
    ))

    flops = 2 * N * hw * ch * (C1 + 4 * c2) + 24 * N * hw * ch
    cost = pl.CostEstimate(
        flops=int(flops),
        transcendentals=int(2 * N * hw * (ch + c2)),
        bytes_accessed=int(x.size * x.dtype.itemsize
                           + N * hw * c2 * x.dtype.itemsize
                           + w1b.size * 2 + w2b.size * 2),
    )

    out = pl.pallas_call(
        sppf_kernel,
        out_shape=jax.ShapeDtypeStruct((N, H, W, c2), x.dtype),
        grid_spec=pltpu.PrefetchScalarGridSpec(
            num_scalar_prefetch=0,
            grid=(N // bb,),
            in_specs=[
                pl.BlockSpec((bb, H, W, C1), lambda n: (n, 0, 0, 0)),
                pl.BlockSpec((C1, ch),       lambda n: (0, 0)),
                pl.BlockSpec((1, ch),        lambda n: (0, 0)),
                pl.BlockSpec((1, ch),        lambda n: (0, 0)),
                pl.BlockSpec((ch, ch),       lambda n: (0, 0)),
                pl.BlockSpec((4, ch, c2),    lambda n: (0, 0, 0)),
                pl.BlockSpec((1, c2),        lambda n: (0, 0)),
                pl.BlockSpec((1, c2),        lambda n: (0, 0)),
                pl.BlockSpec((c2, c2),       lambda n: (0, 0)),
            ],
            out_specs=pl.BlockSpec((bb, H, W, c2), lambda n: (n, 0, 0, 0)),
        ),
        compiler_params=pltpu.CompilerParams(
            dimension_semantics=("parallel",),
            vmem_limit_bytes=vmem_limit,
        ),
        cost_estimate=cost,
    )(x, w1b, g1, b1, m1, w2b, g2, b2, m2)

    return jnp.transpose(out, (0, 3, 1, 2))      # NHWC -> NCHW


# ------------------------------- reference --------------------------------


def _sppf_reference(x, w1, g1, b1, w2, g2, b2, eps=1e-5):
    """Pure-JAX NCHW f32 reference matching the PyTorch module."""
    def conv1x1(x, w):                          # w: (Cin, Cout)
        return jnp.einsum("nchw,co->nohw", x, w)

    def group_norm(x, groups, gamma, beta):
        n, c, h, w = x.shape
        xg = x.reshape(n, groups, c // groups, h, w)
        mean = xg.mean(axis=(2, 3, 4), keepdims=True)
        var = xg.var(axis=(2, 3, 4), keepdims=True)
        xn = ((xg - mean) * lax.rsqrt(var + eps)).reshape(n, c, h, w)
        return xn * gamma.reshape(1, c, 1, 1) + beta.reshape(1, c, 1, 1)

    def silu(x):
        return x * jax.nn.sigmoid(x)

    def mp5(x):
        return lax.reduce_window(x, -jnp.inf, lax.max, (1, 1, 5, 5),
                                 (1, 1, 1, 1),
                                 [(0, 0), (0, 0), (2, 2), (2, 2)])

    ch = w1.shape[1]
    c2 = w2.shape[1]
    x1 = silu(group_norm(conv1x1(x, w1), ch // 8, g1.reshape(-1), b1.reshape(-1)))
    y1 = mp5(x1)
    y2 = mp5(y1)
    y3 = mp5(y2)
    cat = jnp.concatenate([x1, y1, y2, y3], axis=1)
    return silu(group_norm(conv1x1(cat, w2), c2 // 8, g2.reshape(-1), b2.reshape(-1)))


# ---------------------------------- main -----------------------------------


if __name__ == "__main__":
    # SPPF(c1=16, c2=16): ch = 8 -> GroupNorm groups = 1 (cv1) and 2 (cv2).
    N, C1, H, W = 2, 16, 16, 16
    C2 = 16
    ch = C1 // 2

    key = jax.random.PRNGKey(0)
    kx, kw1, kw2, kg1, kb1, kg2, kb2 = jax.random.split(key, 7)

    x = jax.random.normal(kx, (N, C1, H, W), dtype=jnp.float32)
    # PyTorch 1x1-conv weights (out, in, 1, 1) are stored here as (in, out).
    w1 = 0.2 * jax.random.normal(kw1, (C1, ch), dtype=jnp.float32)
    w2 = 0.2 * jax.random.normal(kw2, (4 * ch, C2), dtype=jnp.float32)
    g1 = 1.0 + 0.1 * jax.random.normal(kg1, (1, ch), dtype=jnp.float32)
    b1 = 0.1 * jax.random.normal(kb1, (1, ch), dtype=jnp.float32)
    g2 = 1.0 + 0.1 * jax.random.normal(kg2, (1, C2), dtype=jnp.float32)
    b2 = 0.1 * jax.random.normal(kb2, (1, C2), dtype=jnp.float32)

    out = sppf_pallas(x, w1, g1, b1, w2, g2, b2)
    out = jax.block_until_ready(out)
    assert out.shape == (N, C2, H, W), out.shape
    assert bool(jnp.all(jnp.isfinite(out)))

    ref = _sppf_reference(x, w1, g1, b1, w2, g2, b2)
    err = float(jnp.max(jnp.abs(out - ref)))
    assert err < 0.15, f"max abs error vs reference too large: {err}"

    print("KERNEL_OK")
</pallas_src>

<mosaic_0001>
module attributes {stable_mosaic.version = 11 : i64} {
  func.func @sppf_kernel(%arg0: i32, %arg1: memref<1x16x16x16xf32, #tpu.memory_space<vmem>>, %arg2: memref<16x8xbf16, #tpu.memory_space<vmem>>, %arg3: memref<1x8xf32, #tpu.memory_space<vmem>>, %arg4: memref<1x8xf32, #tpu.memory_space<vmem>>, %arg5: memref<8x8xf32, #tpu.memory_space<vmem>>, %arg6: memref<4x8x16xbf16, #tpu.memory_space<vmem>>, %arg7: memref<1x16xf32, #tpu.memory_space<vmem>>, %arg8: memref<1x16xf32, #tpu.memory_space<vmem>>, %arg9: memref<16x16xf32, #tpu.memory_space<vmem>>, %arg10: memref<1x16x16x16xf32, #tpu.memory_space<vmem>>) attributes {dimension_semantics = [#tpu.dimension_semantics<parallel>], iteration_bounds = array<i64: 2>, scalar_prefetch = 0 : i64, scratch_operands = 0 : i64, tpu.core_type = #tpu.core_type<tc>, window_params = [{transform_indices = @transform_0, window_bounds = array<i64: 1, 16, 16, 16>}, {pipeline_mode = #tpu.pipeline_mode<synchronous>, transform_indices = @transform_1, window_bounds = array<i64: 16, 8>}, {pipeline_mode = #tpu.pipeline_mode<synchronous>, transform_indices = @transform_2, window_bounds = array<i64: 1, 8>}, {pipeline_mode = #tpu.pipeline_mode<synchronous>, transform_indices = @transform_3, window_bounds = array<i64: 1, 8>}, {pipeline_mode = #tpu.pipeline_mode<synchronous>, transform_indices = @transform_4, window_bounds = array<i64: 8, 8>}, {pipeline_mode = #tpu.pipeline_mode<synchronous>, transform_indices = @transform_5, window_bounds = array<i64: 4, 8, 16>}, {pipeline_mode = #tpu.pipeline_mode<synchronous>, transform_indices = @transform_6, window_bounds = array<i64: 1, 16>}, {pipeline_mode = #tpu.pipeline_mode<synchronous>, transform_indices = @transform_7, window_bounds = array<i64: 1, 16>}, {pipeline_mode = #tpu.pipeline_mode<synchronous>, transform_indices = @transform_8, window_bounds = array<i64: 16, 16>}, {transform_indices = @transform_9, window_bounds = array<i64: 1, 16, 16, 16>}]} {
    %c0 = arith.constant 0 : index
    %c0_0 = arith.constant 0 : index
    %c0_1 = arith.constant 0 : index
    %c0_2 = arith.constant 0 : index
    %0 = vector.load %arg1[%c0, %c0_0, %c0_1, %c0_2] : memref<1x16x16x16xf32, #tpu.memory_space<vmem>>, vector<1x16x16x16xf32>
    %1 = vector.shape_cast %0 : vector<1x16x16x16xf32> to vector<256x16xf32>
    %2 = arith.truncf %1 : vector<256x16xf32> to vector<256x16xbf16>
    %c0_3 = arith.constant 0 : index
    %c0_4 = arith.constant 0 : index
    %3 = vector.load %arg2[%c0_3, %c0_4] : memref<16x8xbf16, #tpu.memory_space<vmem>>, vector<16x8xbf16>
    %cst = arith.constant dense<0.000000e+00> : vector<256x8xf32>
    %4 = tpu.matmul %2, %3, %cst {dimension_numbers = #tpu.dot_dimension_numbers<[1], [0], [0], [1], [0, 0, 1, 1], [], []>} : vector<256x16xbf16>, vector<16x8xbf16>, vector<256x8xf32> -> vector<256x8xf32>
    %c0_5 = arith.constant 0 : index
    %c0_6 = arith.constant 0 : index
    %5 = vector.load %arg5[%c0_5, %c0_6] : memref<8x8xf32, #tpu.memory_space<vmem>>, vector<8x8xf32>
    %c0_7 = arith.constant 0 : index
    %c0_8 = arith.constant 0 : index
    %6 = vector.load %arg3[%c0_7, %c0_8] : memref<1x8xf32, #tpu.memory_space<vmem>>, vector<1x8xf32>
    %c0_9 = arith.constant 0 : index
    %c0_10 = arith.constant 0 : index
    %7 = vector.load %arg4[%c0_9, %c0_10] : memref<1x8xf32, #tpu.memory_space<vmem>>, vector<1x8xf32>
    %8 = vector.shape_cast %4 : vector<256x8xf32> to vector<1x256x8xf32>
    %cst_11 = arith.constant dense<0.000000e+00> : vector<1x8xf32>
    %9 = vector.multi_reduction <add>, %8, %cst_11 [1] : vector<1x256x8xf32> to vector<1x8xf32>
    %10 = arith.mulf %8, %8 : vector<1x256x8xf32>
    %cst_12 = arith.constant dense<0.000000e+00> : vector<1x8xf32>
    %11 = vector.multi_reduction <add>, %10, %cst_12 [1] : vector<1x256x8xf32> to vector<1x8xf32>
    %cst_13 = arith.constant dense<0.000000e+00> : vector<1x8xf32>
    %12 = tpu.matmul %9, %5, %cst_13 {dimension_numbers = #tpu.dot_dimension_numbers<[1], [0], [0], [1], [0, 0, 1, 1], [], []>} : vector<1x8xf32>, vector<8x8xf32>, vector<1x8xf32> -> vector<1x8xf32>
    %cst_14 = arith.constant dense<0.000000e+00> : vector<1x8xf32>
    %13 = tpu.matmul %11, %5, %cst_14 {dimension_numbers = #tpu.dot_dimension_numbers<[1], [0], [0], [1], [0, 0, 1, 1], [], []>} : vector<1x8xf32>, vector<8x8xf32>, vector<1x8xf32> -> vector<1x8xf32>
    %14 = arith.mulf %12, %12 : vector<1x8xf32>
    %15 = arith.subf %13, %14 : vector<1x8xf32>
    %cst_15 = arith.constant 0.000000e+00 : f32
    %16 = vector.broadcast %cst_15 : f32 to vector<1x8xf32>
    %17 = arith.maximumf %15, %16 : vector<1x8xf32>
    %cst_16 = arith.constant 9.99999974E-6 : f32
    %18 = vector.broadcast %cst_16 : f32 to vector<1x8xf32>
    %19 = arith.addf %17, %18 : vector<1x8xf32>
    %20 = math.rsqrt %19 : vector<1x8xf32>
    %21 = arith.mulf %20, %6 : vector<1x8xf32>
    %22 = arith.mulf %12, %21 : vector<1x8xf32>
    %23 = arith.subf %7, %22 : vector<1x8xf32>
    %24 = vector.shape_cast %21 : vector<1x8xf32> to vector<1x1x8xf32>
    %25 = vector.broadcast %24 : vector<1x1x8xf32> to vector<1x256x8xf32>
    %26 = arith.mulf %8, %25 : vector<1x256x8xf32>
    %27 = vector.shape_cast %23 : vector<1x8xf32> to vector<1x1x8xf32>
    %28 = vector.broadcast %27 : vector<1x1x8xf32> to vector<1x256x8xf32>
    %29 = arith.addf %26, %28 : vector<1x256x8xf32>
    %30 = vector.shape_cast %29 : vector<1x256x8xf32> to vector<256x8xf32>
    %cst_17 = arith.constant 0.000000e+00 : f32
    %31 = vector.broadcast %cst_17 : f32 to vector<256x8xf32>
    %32 = arith.subf %31, %30 : vector<256x8xf32>
    %33 = math.exp %32 : vector<256x8xf32>
    %cst_18 = arith.constant 1.000000e+00 : f32
    %34 = vector.broadcast %cst_18 : f32 to vector<256x8xf32>
    %35 = arith.addf %34, %33 : vector<256x8xf32>
    %36 = tpu.reciprocal %35 : vector<256x8xf32> -> vector<256x8xf32>
    %37 = arith.mulf %30, %36 : vector<256x8xf32>
    %38 = vector.shape_cast %37 : vector<256x8xf32> to vector<1x16x16x8xf32>
    %39 = vector.shape_cast %38 : vector<1x16x16x8xf32> to vector<256x8xf32>
    %40 = arith.truncf %39 : vector<256x8xf32> to vector<256x8xbf16>
    %c0_19 = arith.constant 0 : index
    %c0_20 = arith.constant 0 : index
    %c0_21 = arith.constant 0 : index
    %41 = vector.load %arg6[%c0_19, %c0_20, %c0_21] : memref<4x8x16xbf16, #tpu.memory_space<vmem>>, vector<1x8x16xbf16>
    %42 = vector.shape_cast %41 : vector<1x8x16xbf16> to vector<8x16xbf16>
    %cst_22 = arith.constant dense<0.000000e+00> : vector<256x16xf32>
    %43 = tpu.matmul %40, %42, %cst_22 {dimension_numbers = #tpu.dot_dimension_numbers<[1], [0], [0], [1], [0, 0, 1, 1], [], []>} : vector<256x8xbf16>, vector<8x16xbf16>, vector<256x16xf32> -> vector<256x16xf32>
    %44 = vector.extract_strided_slice %38 {offsets = [0, 0, 0, 0], sizes = [1, 1, 16, 8], strides = [1, 1, 1, 1]} : vector<1x16x16x8xf32> to vector<1x1x16x8xf32>
    %45 = vector.extract_strided_slice %38 {offsets = [0, 15, 0, 0], sizes = [1, 1, 16, 8], strides = [1, 1, 1, 1]} : vector<1x16x16x8xf32> to vector<1x1x16x8xf32>
    %46 = tpu.concatenate %44, %44, %38, %45, %45 in 1 : vector<1x1x16x8xf32>, vector<1x1x16x8xf32>, vector<1x16x16x8xf32>, vector<1x1x16x8xf32>, vector<1x1x16x8xf32> -> vector<1x20x16x8xf32>
    %47 = vector.extract_strided_slice %46 {offsets = [0, 0, 0, 0], sizes = [1, 16, 16, 8], strides = [1, 1, 1, 1]} : vector<1x20x16x8xf32> to vector<1x16x16x8xf32>
    %48 = arith.maximumf %38, %47 : vector<1x16x16x8xf32>
    %49 = vector.extract_strided_slice %46 {offsets = [0, 1, 0, 0], sizes = [1, 16, 16, 8], strides = [1, 1, 1, 1]} : vector<1x20x16x8xf32> to vector<1x16x16x8xf32>
    %50 = arith.maximumf %48, %49 : vector<1x16x16x8xf32>
    %51 = vector.extract_strided_slice %46 {offsets = [0, 3, 0, 0], sizes = [1, 16, 16, 8], strides = [1, 1, 1, 1]} : vector<1x20x16x8xf32> to vector<1x16x16x8xf32>
    %52 = arith.maximumf %50, %51 : vector<1x16x16x8xf32>
    %53 = vector.extract_strided_slice %46 {offsets = [0, 4, 0, 0], sizes = [1, 16, 16, 8], strides = [1, 1, 1, 1]} : vector<1x20x16x8xf32> to vector<1x16x16x8xf32>
    %54 = arith.maximumf %52, %53 : vector<1x16x16x8xf32>
    %55 = vector.extract_strided_slice %54 {offsets = [0, 0, 0, 0], sizes = [1, 16, 1, 8], strides = [1, 1, 1, 1]} : vector<1x16x16x8xf32> to vector<1x16x1x8xf32>
    %56 = vector.extract_strided_slice %54 {offsets = [0, 0, 15, 0], sizes = [1, 16, 1, 8], strides = [1, 1, 1, 1]} : vector<1x16x16x8xf32> to vector<1x16x1x8xf32>
    %57 = tpu.concatenate %55, %55, %54, %56, %56 in 2 : vector<1x16x1x8xf32>, vector<1x16x1x8xf32>, vector<1x16x16x8xf32>, vector<1x16x1x8xf32>, vector<1x16x1x8xf32> -> vector<1x16x20x8xf32>
    %58 = vector.extract_strided_slice %57 {offsets = [0, 0, 0, 0], sizes = [1, 16, 16, 8], strides = [1, 1, 1, 1]} : vector<1x16x20x8xf32> to vector<1x16x16x8xf32>
    %59 = arith.maximumf %54, %58 : vector<1x16x16x8xf32>
    %60 = vector.extract_strided_slice %57 {offsets = [0, 0, 1, 0], sizes = [1, 16, 16, 8], strides = [1, 1, 1, 1]} : vector<1x16x20x8xf32> to vector<1x16x16x8xf32>
    %61 = arith.maximumf %59, %60 : vector<1x16x16x8xf32>
    %62 = vector.extract_strided_slice %57 {offsets = [0, 0, 3, 0], sizes = [1, 16, 16, 8], strides = [1, 1, 1, 1]} : vector<1x16x20x8xf32> to vector<1x16x16x8xf32>
    %63 = arith.maximumf %61, %62 : vector<1x16x16x8xf32>
    %64 = vector.extract_strided_slice %57 {offsets = [0, 0, 4, 0], sizes = [1, 16, 16, 8], strides = [1, 1, 1, 1]} : vector<1x16x20x8xf32> to vector<1x16x16x8xf32>
    %65 = arith.maximumf %63, %64 : vector<1x16x16x8xf32>
    %66 = vector.shape_cast %65 : vector<1x16x16x8xf32> to vector<256x8xf32>
    %67 = arith.truncf %66 : vector<256x8xf32> to vector<256x8xbf16>
    %c1 = arith.constant 1 : index
    %c0_23 = arith.constant 0 : index
    %c0_24 = arith.constant 0 : index
    %68 = vector.load %arg6[%c1, %c0_23, %c0_24] : memref<4x8x16xbf16, #tpu.memory_space<vmem>>, vector<1x8x16xbf16>
    %69 = vector.shape_cast %68 : vector<1x8x16xbf16> to vector<8x16xbf16>
    %cst_25 = arith.constant dense<0.000000e+00> : vector<256x16xf32>
    %70 = tpu.matmul %67, %69, %cst_25 {dimension_numbers = #tpu.dot_dimension_numbers<[1], [0], [0], [1], [0, 0, 1, 1], [], []>} : vector<256x8xbf16>, vector<8x16xbf16>, vector<256x16xf32> -> vector<256x16xf32>
    %71 = arith.addf %43, %70 : vector<256x16xf32>
    %72 = vector.extract_strided_slice %65 {offsets = [0, 0, 0, 0], sizes = [1, 1, 16, 8], strides = [1, 1, 1, 1]} : vector<1x16x16x8xf32> to vector<1x1x16x8xf32>
    %73 = vector.extract_strided_slice %65 {offsets = [0, 15, 0, 0], sizes = [1, 1, 16, 8], strides = [1, 1, 1, 1]} : vector<1x16x16x8xf32> to vector<1x1x16x8xf32>
    %74 = tpu.concatenate %72, %72, %65, %73, %73 in 1 : vector<1x1x16x8xf32>, vector<1x1x16x8xf32>, vector<1x16x16x8xf32>, vector<1x1x16x8xf32>, vector<1x1x16x8xf32> -> vector<1x20x16x8xf32>
    %75 = vector.extract_strided_slice %74 {offsets = [0, 0, 0, 0], sizes = [1, 16, 16, 8], strides = [1, 1, 1, 1]} : vector<1x20x16x8xf32> to vector<1x16x16x8xf32>
    %76 = arith.maximumf %65, %75 : vector<1x16x16x8xf32>
    %77 = vector.extract_strided_slice %74 {offsets = [0, 1, 0, 0], sizes = [1, 16, 16, 8], strides = [1, 1, 1, 1]} : vector<1x20x16x8xf32> to vector<1x16x16x8xf32>
    %78 = arith.maximumf %76, %77 : vector<1x16x16x8xf32>
    %79 = vector.extract_strided_slice %74 {offsets = [0, 3, 0, 0], sizes = [1, 16, 16, 8], strides = [1, 1, 1, 1]} : vector<1x20x16x8xf32> to vector<1x16x16x8xf32>
    %80 = arith.maximumf %78, %79 : vector<1x16x16x8xf32>
    %81 = vector.extract_strided_slice %74 {offsets = [0, 4, 0, 0], sizes = [1, 16, 16, 8], strides = [1, 1, 1, 1]} : vector<1x20x16x8xf32> to vector<1x16x16x8xf32>
    %82 = arith.maximumf %80, %81 : vector<1x16x16x8xf32>
    %83 = vector.extract_strided_slice %82 {offsets = [0, 0, 0, 0], sizes = [1, 16, 1, 8], strides = [1, 1, 1, 1]} : vector<1x16x16x8xf32> to vector<1x16x1x8xf32>
    %84 = vector.extract_strided_slice %82 {offsets = [0, 0, 15, 0], sizes = [1, 16, 1, 8], strides = [1, 1, 1, 1]} : vector<1x16x16x8xf32> to vector<1x16x1x8xf32>
    %85 = tpu.concatenate %83, %83, %82, %84, %84 in 2 : vector<1x16x1x8xf32>, vector<1x16x1x8xf32>, vector<1x16x16x8xf32>, vector<1x16x1x8xf32>, vector<1x16x1x8xf32> -> vector<1x16x20x8xf32>
    %86 = vector.extract_strided_slice %85 {offsets = [0, 0, 0, 0], sizes = [1, 16, 16, 8], strides = [1, 1, 1, 1]} : vector<1x16x20x8xf32> to vector<1x16x16x8xf32>
    %87 = arith.maximumf %82, %86 : vector<1x16x16x8xf32>
    %88 = vector.extract_strided_slice %85 {offsets = [0, 0, 1, 0], sizes = [1, 16, 16, 8], strides = [1, 1, 1, 1]} : vector<1x16x20x8xf32> to vector<1x16x16x8xf32>
    %89 = arith.maximumf %87, %88 : vector<1x16x16x8xf32>
    %90 = vector.extract_strided_slice %85 {offsets = [0, 0, 3, 0], sizes = [1, 16, 16, 8], strides = [1, 1, 1, 1]} : vector<1x16x20x8xf32> to vector<1x16x16x8xf32>
    %91 = arith.maximumf %89, %90 : vector<1x16x16x8xf32>
    %92 = vector.extract_strided_slice %85 {offsets = [0, 0, 4, 0], sizes = [1, 16, 16, 8], strides = [1, 1, 1, 1]} : vector<1x16x20x8xf32> to vector<1x16x16x8xf32>
    %93 = arith.maximumf %91, %92 : vector<1x16x16x8xf32>
    %94 = vector.shape_cast %93 : vector<1x16x16x8xf32> to vector<256x8xf32>
    %95 = arith.truncf %94 : vector<256x8xf32> to vector<256x8xbf16>
    %c2 = arith.constant 2 : index
    %c0_26 = arith.constant 0 : index
    %c0_27 = arith.constant 0 : index
    %96 = vector.load %arg6[%c2, %c0_26, %c0_27] : memref<4x8x16xbf16, #tpu.memory_space<vmem>>, vector<1x8x16xbf16>
    %97 = vector.shape_cast %96 : vector<1x8x16xbf16> to vector<8x16xbf16>
    %cst_28 = arith.constant dense<0.000000e+00> : vector<256x16xf32>
    %98 = tpu.matmul %95, %97, %cst_28 {dimension_numbers = #tpu.dot_dimension_numbers<[1], [0], [0], [1], [0, 0, 1, 1], [], []>} : vector<256x8xbf16>, vector<8x16xbf16>, vector<256x16xf32> -> vector<256x16xf32>
    %99 = arith.addf %71, %98 : vector<256x16xf32>
    %100 = vector.extract_strided_slice %93 {offsets = [0, 0, 0, 0], sizes = [1, 1, 16, 8], strides = [1, 1, 1, 1]} : vector<1x16x16x8xf32> to vector<1x1x16x8xf32>
    %101 = vector.extract_strided_slice %93 {offsets = [0, 15, 0, 0], sizes = [1, 1, 16, 8], strides = [1, 1, 1, 1]} : vector<1x16x16x8xf32> to vector<1x1x16x8xf32>
    %102 = tpu.concatenate %100, %100, %93, %101, %101 in 1 : vector<1x1x16x8xf32>, vector<1x1x16x8xf32>, vector<1x16x16x8xf32>, vector<1x1x16x8xf32>, vector<1x1x16x8xf32> -> vector<1x20x16x8xf32>
    %103 = vector.extract_strided_slice %102 {offsets = [0, 0, 0, 0], sizes = [1, 16, 16, 8], strides = [1, 1, 1, 1]} : vector<1x20x16x8xf32> to vector<1x16x16x8xf32>
    %104 = arith.maximumf %93, %103 : vector<1x16x16x8xf32>
    %105 = vector.extract_strided_slice %102 {offsets = [0, 1, 0, 0], sizes = [1, 16, 16, 8], strides = [1, 1, 1, 1]} : vector<1x20x16x8xf32> to vector<1x16x16x8xf32>
    %106 = arith.maximumf %104, %105 : vector<1x16x16x8xf32>
    %107 = vector.extract_strided_slice %102 {offsets = [0, 3, 0, 0], sizes = [1, 16, 16, 8], strides = [1, 1, 1, 1]} : vector<1x20x16x8xf32> to vector<1x16x16x8xf32>
    %108 = arith.maximumf %106, %107 : vector<1x16x16x8xf32>
    %109 = vector.extract_strided_slice %102 {offsets = [0, 4, 0, 0], sizes = [1, 16, 16, 8], strides = [1, 1, 1, 1]} : vector<1x20x16x8xf32> to vector<1x16x16x8xf32>
    %110 = arith.maximumf %108, %109 : vector<1x16x16x8xf32>
    %111 = vector.extract_strided_slice %110 {offsets = [0, 0, 0, 0], sizes = [1, 16, 1, 8], strides = [1, 1, 1, 1]} : vector<1x16x16x8xf32> to vector<1x16x1x8xf32>
    %112 = vector.extract_strided_slice %110 {offsets = [0, 0, 15, 0], sizes = [1, 16, 1, 8], strides = [1, 1, 1, 1]} : vector<1x16x16x8xf32> to vector<1x16x1x8xf32>
    %113 = tpu.concatenate %111, %111, %110, %112, %112 in 2 : vector<1x16x1x8xf32>, vector<1x16x1x8xf32>, vector<1x16x16x8xf32>, vector<1x16x1x8xf32>, vector<1x16x1x8xf32> -> vector<1x16x20x8xf32>
    %114 = vector.extract_strided_slice %113 {offsets = [0, 0, 0, 0], sizes = [1, 16, 16, 8], strides = [1, 1, 1, 1]} : vector<1x16x20x8xf32> to vector<1x16x16x8xf32>
    %115 = arith.maximumf %110, %114 : vector<1x16x16x8xf32>
    %116 = vector.extract_strided_slice %113 {offsets = [0, 0, 1, 0], sizes = [1, 16, 16, 8], strides = [1, 1, 1, 1]} : vector<1x16x20x8xf32> to vector<1x16x16x8xf32>
    %117 = arith.maximumf %115, %116 : vector<1x16x16x8xf32>
    %118 = vector.extract_strided_slice %113 {offsets = [0, 0, 3, 0], sizes = [1, 16, 16, 8], strides = [1, 1, 1, 1]} : vector<1x16x20x8xf32> to vector<1x16x16x8xf32>
    %119 = arith.maximumf %117, %118 : vector<1x16x16x8xf32>
    %120 = vector.extract_strided_slice %113 {offsets = [0, 0, 4, 0], sizes = [1, 16, 16, 8], strides = [1, 1, 1, 1]} : vector<1x16x20x8xf32> to vector<1x16x16x8xf32>
    %121 = arith.maximumf %119, %120 : vector<1x16x16x8xf32>
    %122 = vector.shape_cast %121 : vector<1x16x16x8xf32> to vector<256x8xf32>
    %123 = arith.truncf %122 : vector<256x8xf32> to vector<256x8xbf16>
    %c3 = arith.constant 3 : index
    %c0_29 = arith.constant 0 : index
    %c0_30 = arith.constant 0 : index
    %124 = vector.load %arg6[%c3, %c0_29, %c0_30] : memref<4x8x16xbf16, #tpu.memory_space<vmem>>, vector<1x8x16xbf16>
    %125 = vector.shape_cast %124 : vector<1x8x16xbf16> to vector<8x16xbf16>
    %cst_31 = arith.constant dense<0.000000e+00> : vector<256x16xf32>
    %126 = tpu.matmul %123, %125, %cst_31 {dimension_numbers = #tpu.dot_dimension_numbers<[1], [0], [0], [1], [0, 0, 1, 1], [], []>} : vector<256x8xbf16>, vector<8x16xbf16>, vector<256x16xf32> -> vector<256x16xf32>
    %127 = arith.addf %99, %126 : vector<256x16xf32>
    %c0_32 = arith.constant 0 : index
    %c0_33 = arith.constant 0 : index
    %128 = vector.load %arg9[%c0_32, %c0_33] : memref<16x16xf32, #tpu.memory_space<vmem>>, vector<16x16xf32>
    %c0_34 = arith.constant 0 : index
    %c0_35 = arith.constant 0 : index
    %129 = vector.load %arg7[%c0_34, %c0_35] : memref<1x16xf32, #tpu.memory_space<vmem>>, vector<1x16xf32>
    %c0_36 = arith.constant 0 : index
    %c0_37 = arith.constant 0 : index
    %130 = vector.load %arg8[%c0_36, %c0_37] : memref<1x16xf32, #tpu.memory_space<vmem>>, vector<1x16xf32>
    %131 = vector.shape_cast %127 : vector<256x16xf32> to vector<1x256x16xf32>
    %cst_38 = arith.constant dense<0.000000e+00> : vector<1x16xf32>
    %132 = vector.multi_reduction <add>, %131, %cst_38 [1] : vector<1x256x16xf32> to vector<1x16xf32>
    %133 = arith.mulf %131, %131 : vector<1x256x16xf32>
    %cst_39 = arith.constant dense<0.000000e+00> : vector<1x16xf32>
    %134 = vector.multi_reduction <add>, %133, %cst_39 [1] : vector<1x256x16xf32> to vector<1x16xf32>
    %cst_40 = arith.constant dense<0.000000e+00> : vector<1x16xf32>
    %135 = tpu.matmul %132, %128, %cst_40 {dimension_numbers = #tpu.dot_dimension_numbers<[1], [0], [0], [1], [0, 0, 1, 1], [], []>} : vector<1x16xf32>, vector<16x16xf32>, vector<1x16xf32> -> vector<1x16xf32>
    %cst_41 = arith.constant dense<0.000000e+00> : vector<1x16xf32>
    %136 = tpu.matmul %134, %128, %cst_41 {dimension_numbers = #tpu.dot_dimension_numbers<[1], [0], [0], [1], [0, 0, 1, 1], [], []>} : vector<1x16xf32>, vector<16x16xf32>, vector<1x16xf32> -> vector<1x16xf32>
    %137 = arith.mulf %135, %135 : vector<1x16xf32>
    %138 = arith.subf %136, %137 : vector<1x16xf32>
    %cst_42 = arith.constant 0.000000e+00 : f32
    %139 = vector.broadcast %cst_42 : f32 to vector<1x16xf32>
    %140 = arith.maximumf %138, %139 : vector<1x16xf32>
    %cst_43 = arith.constant 9.99999974E-6 : f32
    %141 = vector.broadcast %cst_43 : f32 to vector<1x16xf32>
    %142 = arith.addf %140, %141 : vector<1x16xf32>
    %143 = math.rsqrt %142 : vector<1x16xf32>
    %144 = arith.mulf %143, %129 : vector<1x16xf32>
    %145 = arith.mulf %135, %144 : vector<1x16xf32>
    %146 = arith.subf %130, %145 : vector<1x16xf32>
    %147 = vector.shape_cast %144 : vector<1x16xf32> to vector<1x1x16xf32>
    %148 = vector.broadcast %147 : vector<1x1x16xf32> to vector<1x256x16xf32>
    %149 = arith.mulf %131, %148 : vector<1x256x16xf32>
    %150 = vector.shape_cast %146 : vector<1x16xf32> to vector<1x1x16xf32>
    %151 = vector.broadcast %150 : vector<1x1x16xf32> to vector<1x256x16xf32>
    %152 = arith.addf %149, %151 : vector<1x256x16xf32>
    %153 = vector.shape_cast %152 : vector<1x256x16xf32> to vector<256x16xf32>
    %cst_44 = arith.constant 0.000000e+00 : f32
    %154 = vector.broadcast %cst_44 : f32 to vector<256x16xf32>
    %155 = arith.subf %154, %153 : vector<256x16xf32>
    %156 = math.exp %155 : vector<256x16xf32>
    %cst_45 = arith.constant 1.000000e+00 : f32
    %157 = vector.broadcast %cst_45 : f32 to vector<256x16xf32>
    %158 = arith.addf %157, %156 : vector<256x16xf32>
    %159 = tpu.reciprocal %158 : vector<256x16xf32> -> vector<256x16xf32>
    %160 = arith.mulf %153, %159 : vector<256x16xf32>
    %161 = vector.shape_cast %160 : vector<256x16xf32> to vector<1x16x16x16xf32>
    %c0_46 = arith.constant 0 : index
    %c0_47 = arith.constant 0 : index
    %c0_48 = arith.constant 0 : index
    %c0_49 = arith.constant 0 : index
    %162 = vector.load %arg10[%c0_46, %c0_47, %c0_48, %c0_49] : memref<1x16x16x16xf32, #tpu.memory_space<vmem>>, vector<1x16x16x16xf32>
    tpu.vector_store %arg10[%c0_46, %c0_47, %c0_48, %c0_49], %161 {strides = array<i32>} : memref<1x16x16x16xf32, #tpu.memory_space<vmem>>, vector<1x16x16x16xf32>,
    return
  }
  func.func @transform_0(%arg0: i32) -> (i32, i32, i32, i32) {
    %c0_i32 = arith.constant 0 : i32
    %c0_i32_0 = arith.constant 0 : i32
    %c0_i32_1 = arith.constant 0 : i32
    %c0_i32_2 = arith.constant 0 : i32
    return %arg0, %c0_i32, %c0_i32_0, %c0_i32_1 : i32, i32, i32, i32
  }
  func.func @transform_1(%arg0: i32) -> (i32, i32) {
    %c0_i32 = arith.constant 0 : i32
    %c0_i32_0 = arith.constant 0 : i32
    %c0_i32_1 = arith.constant 0 : i32
    return %c0_i32, %c0_i32_0 : i32, i32
  }
  func.func @transform_2(%arg0: i32) -> (i32, i32) {
    %c0_i32 = arith.constant 0 : i32
    %c0_i32_0 = arith.constant 0 : i32
    %c0_i32_1 = arith.constant 0 : i32
    return %c0_i32, %c0_i32_0 : i32, i32
  }
  func.func @transform_3(%arg0: i32) -> (i32, i32) {
    %c0_i32 = arith.constant 0 : i32
    %c0_i32_0 = arith.constant 0 : i32
    %c0_i32_1 = arith.constant 0 : i32
    return %c0_i32, %c0_i32_0 : i32, i32
  }
  func.func @transform_4(%arg0: i32) -> (i32, i32) {
    %c0_i32 = arith.constant 0 : i32
    %c0_i32_0 = arith.constant 0 : i32
    %c0_i32_1 = arith.constant 0 : i32
    return %c0_i32, %c0_i32_0 : i32, i32
  }
  func.func @transform_5(%arg0: i32) -> (i32, i32, i32) {
    %c0_i32 = arith.constant 0 : i32
    %c0_i32_0 = arith.constant 0 : i32
    %c0_i32_1 = arith.constant 0 : i32
    %c0_i32_2 = arith.constant 0 : i32
    return %c0_i32, %c0_i32_0, %c0_i32_1 : i32, i32, i32
  }
  func.func @transform_6(%arg0: i32) -> (i32, i32) {
    %c0_i32 = arith.constant 0 : i32
    %c0_i32_0 = arith.constant 0 : i32
    %c0_i32_1 = arith.constant 0 : i32
    return %c0_i32, %c0_i32_0 : i32, i32
  }
  func.func @transform_7(%arg0: i32) -> (i32, i32) {
    %c0_i32 = arith.constant 0 : i32
    %c0_i32_0 = arith.constant 0 : i32
    %c0_i32_1 = arith.constant 0 : i32
    return %c0_i32, %c0_i32_0 : i32, i32
  }
  func.func @transform_8(%arg0: i32) -> (i32, i32) {
    %c0_i32 = arith.constant 0 : i32
    %c0_i32_0 = arith.constant 0 : i32
    %c0_i32_1 = arith.constant 0 : i32
    return %c0_i32, %c0_i32_0 : i32, i32
  }
  func.func @transform_9(%arg0: i32) -> (i32, i32, i32, i32) {
    %c0_i32 = arith.constant 0 : i32
    %c0_i32_0 = arith.constant 0 : i32
    %c0_i32_1 = arith.constant 0 : i32
    %c0_i32_2 = arith.constant 0 : i32
    return %arg0, %c0_i32, %c0_i32_0, %c0_i32_1 : i32, i32, i32, i32
  }
}

</mosaic_0001>

<llo_original>
// kernel: tpu_custom_call.1
$region0: #{tpu_custom_call.1}
  #allocation0 [shape = 'u32[]', space=smem, size = 0x4, offset = 0x4, fixed_abs, tag = 'smem constant byte address 0x4 - core index']
  #allocation1 [shape = 'u32[144,128]{1,0:T(1,128)}', space=vmem, size = 0x12000, scoped, tag = 'internal scratch']
  %s0 = inlined_call_operand.hbm [shape: f32[2,16,16,16], index: 0, kind: input, shape index: {}]
  %s1 = inlined_call_operand.vmem [shape: bf16[16,8], index: 1, kind: input, shape index: {}]
  %s2 = inlined_call_operand.vmem [shape: f32[1,8], index: 2, kind: input, shape index: {}]
  %s3 = inlined_call_operand.vmem [shape: f32[1,8], index: 3, kind: input, shape index: {}]
  %s4 = inlined_call_operand.hbm [shape: f32[8,8], index: 4, kind: input, shape index: {}]
  %s5 = inlined_call_operand.vmem [shape: bf16[4,8,16], index: 5, kind: input, shape index: {}]
  %s6 = inlined_call_operand.hbm [shape: f32[1,16], index: 6, kind: input, shape index: {}]
  %s7 = inlined_call_operand.vmem [shape: f32[1,16], index: 7, kind: input, shape index: {}]
  %s8 = inlined_call_operand.vmem [shape: f32[16,16], index: 8, kind: input, shape index: {}]
  %s9 = inlined_call_operand.hbm [shape: f32[2,16,16,16], index: 9, kind: output, shape index: {}]
  %s10 = sld [smem:[#allocation0]]
  $region81: #{tpu_custom_call.1} parent=0
    _
  %s12 = ssub.s32 1, %s10
  %s13 = scalar_select 0, %s12, %s10
  $region1: #{tpu_custom_call.1} parent=0
    #allocation2 [shape = 'u8[262144]{0}', space=vmem, size = 0x40000, scoped, tag = 'input window, operand 0']
    #allocation3 [shape = 's32[2]{0}', space=sflag, size = 0x8, scoped, tag = 'scoped memory for tpu_custom_call.1']
    #allocation4 [shape = 's32[2]{0}', space=sflag, size = 0x8, scoped, tag = 'scoped memory for tpu_custom_call.1']
    #allocation5 [shape = 'u8[4096]{0}', space=vmem, size = 0x1000, scoped, tag = 'input window, operand 4, single buffered']
    #allocation6 [shape = 's32[1]{0}', space=sflag, size = 0x4, scoped, tag = 'scoped memory for tpu_custom_call.1']
    #allocation7 [shape = 'u8[512]{0}', space=vmem, size = 0x400, scoped, tag = 'input window, operand 6, single buffered']
    #allocation8 [shape = 'u8[262144]{0}', space=vmem, size = 0x40000, scoped, tag = 'output window, operand 0']
    %14 = vsyncpa [#allocation3], 0
    %s15 = scalar_lea.sflag [#allocation3], 1
    %16 = vsyncpa %s15, 0
    %17 = vsyncpa [#allocation6], 0
    %18 = vsyncpa [#allocation4], 0
    %s19 = scalar_lea.sflag [#allocation4], 1
    %20 = vsyncpa %s19, 0
    loop: start=0, step=1, limit=4
    $region2: #{tpu_custom_call.1} parent=1 // loop_pre_header
      _
    $region3: #{tpu_custom_call.1} parent=1 // loop_header
      %s22 = sphi 0, %s26
      %p23 = scmp.ge.s32.totalorder %s22, 4
      %s32 = sphi 0, %s34
      %s35 = sphi 0, %s32
      %s36 = sphi 0, %s35
      %s52 = sphi 0, %s36
      %s56 = sphi 0, %s56
      %s58 = sphi 0, %s56
      %s59 = sphi 0, %s58
      %s73 = sphi 0, %s59
      %s77 = sphi 0, %s77
      %s79 = sphi 0, %s77
      %s80 = sphi 0, %s79
      %s94 = sphi 0, %s80
      %s98 = sphi 0, %s98
      %s100 = sphi 0, %s98
      %s101 = sphi 0, %s100
      %s115 = sphi 0, %s101
      %s119 = sphi 0, %s119
      %s121 = sphi 0, %s119
      %s122 = sphi 0, %s121
      %s136 = sphi 0, %s122
      %s140 = sphi 0, %s140
      %s142 = sphi 0, %s140
      %s143 = sphi 0, %s142
      %s157 = sphi 0, %s143
      %s161 = sphi 0, %s161
      %s163 = sphi 0, %s161
      %s164 = sphi 0, %s163
      %s178 = sphi 0, %s164
      %s182 = sphi 0, %s182
      %s184 = sphi 0, %s182
      %s185 = sphi 0, %s184
      %s199 = sphi 0, %s185
      %s203 = sphi 0, %s203
      %s205 = sphi 0, %s203
      %s206 = sphi 0, %s205
      %s220 = sphi 0, %s206
      %s226 = sphi 0, %s228
      %s229 = sphi 0, %s226
      %s230 = sphi 0, %s229
      %s246 = sphi 0, %s230
    $region4: #{tpu_custom_call.1} parent=1 // loop_header_branch
      %25 = sbr.rel (%p23) target = $region8
    $region5: #{tpu_custom_call.1} parent=1 // loop_body
      %s27 = ssub.s32 %s22, 1
      %s28 = ssub.s32 %s22, 2
      %s29 = sadd.s32 %s22, 1
      %s30 = ssub.s32 %s22, %s29
      %p31 = scmp.eq.s32.totalorder %s30, 0
      %s33 = sadd.s32 %s32, 1
      %s34 = scalar_select %p31, %s32, %s33
      %p37 = pneg %p31
      %p38 = scmp.eq.s32.totalorder %s22, 1
      %p39 = por %p37, %p38
      %p40 = scmp.ne.s32.totalorder %s32, %s35
      %p41 = scmp.eq.s32.totalorder %s22, 0
      %p42 = por %p40, %p41
      %p43 = scmp.ne.s32.totalorder %s32, %s35
      %p44 = scmp.eq.s32.totalorder %s27, 1
      %p45 = por %p43, %p44
      %p46 = scmp.ne.s32.totalorder %s35, %s36
      %p47 = scmp.eq.s32.totalorder %s27, 0
      %p48 = por %p46, %p47
      %p49 = scmp.ne.s32.totalorder %s35, %s36
      %p50 = scmp.eq.s32.totalorder %s28, 1
      %p51 = por %p49, %p50
      %p53 = scmp.ne.s32.totalorder %s36, %s52
      %p54 = scmp.eq.s32.totalorder %s28, 0
      %p55 = por %p53, %p54
      %s57 = sadd.s32 %s56, 1
      %p60 = scmp.eq.s32.totalorder %s22, 1
      %p61 = scmp.ne.s32.totalorder %s56, %s58
      %p62 = scmp.eq.s32.totalorder %s22, 0
      %p63 = por %p61, %p62
      %p64 = scmp.ne.s32.totalorder %s56, %s58
      %p65 = scmp.eq.s32.totalorder %s27, 1
      %p66 = por %p64, %p65
      %p67 = scmp.ne.s32.totalorder %s58, %s59
      %p68 = scmp.eq.s32.totalorder %s27, 0
      %p69 = por %p67, %p68
      %p70 = scmp.ne.s32.totalorder %s58, %s59
      %p71 = scmp.eq.s32.totalorder %s28, 1
      %p72 = por %p70, %p71
      %p74 = scmp.ne.s32.totalorder %s59, %s73
      %p75 = scmp.eq.s32.totalorder %s28, 0
      %p76 = por %p74, %p75
      %s78 = sadd.s32 %s77, 1
      %p81 = scmp.eq.s32.totalorder %s22, 1
      %p82 = scmp.ne.s32.totalorder %s77, %s79
      %p83 = scmp.eq.s32.totalorder %s22, 0
      %p84 = por %p82, %p83
      %p85 = scmp.ne.s32.totalorder %s77, %s79
      %p86 = scmp.eq.s32.totalorder %s27, 1
      %p87 = por %p85, %p86
      %p88 = scmp.ne.s32.totalorder %s79, %s80
      %p89 = scmp.eq.s32.totalorder %s27, 0
      %p90 = por %p88, %p89
      %p91 = scmp.ne.s32.totalorder %s79, %s80
      %p92 = scmp.eq.s32.totalorder %s28, 1
      %p93 = por %p91, %p92
      %p95 = scmp.ne.s32.totalorder %s80, %s94
      %p96 = scmp.eq.s32.totalorder %s28, 0
      %p97 = por %p95, %p96
      %s99 = sadd.s32 %s98, 1
      %p102 = scmp.eq.s32.totalorder %s22, 1
      %p103 = scmp.ne.s32.totalorder %s98, %s100
      %p104 = scmp.eq.s32.totalorder %s22, 0
      %p105 = por %p103, %p104
      %p106 = scmp.ne.s32.totalorder %s98, %s100
      %p107 = scmp.eq.s32.totalorder %s27, 1
      %p108 = por %p106, %p107
      %p109 = scmp.ne.s32.totalorder %s100, %s101
      %p110 = scmp.eq.s32.totalorder %s27, 0
      %p111 = por %p109, %p110
      %p112 = scmp.ne.s32.totalorder %s100, %s101
      %p113 = scmp.eq.s32.totalorder %s28, 1
      %p114 = por %p112, %p113
      %p116 = scmp.ne.s32.totalorder %s101, %s115
      %p117 = scmp.eq.s32.totalorder %s28, 0
      %p118 = por %p116, %p117
      %s120 = sadd.s32 %s119, 1
      %p123 = scmp.eq.s32.totalorder %s22, 1
      %p124 = scmp.ne.s32.totalorder %s119, %s121
      %p125 = scmp.eq.s32.totalorder %s22, 0
      %p126 = por %p124, %p125
      %p127 = scmp.ne.s32.totalorder %s119, %s121
      %p128 = scmp.eq.s32.totalorder %s27, 1
      %p129 = por %p127, %p128
      %p130 = scmp.ne.s32.totalorder %s121, %s122
      %p131 = scmp.eq.s32.totalorder %s27, 0
      %p132 = por %p130, %p131
      %p133 = scmp.ne.s32.totalorder %s121, %s122
      %p134 = scmp.eq.s32.totalorder %s28, 1
      %p135 = por %p133, %p134
      %p137 = scmp.ne.s32.totalorder %s122, %s136
      %p138 = scmp.eq.s32.totalorder %s28, 0
      %p139 = por %p137, %p138
      %s141 = sadd.s32 %s140, 1
      %p144 = scmp.eq.s32.totalorder %s22, 1
      %p145 = scmp.ne.s32.totalorder %s140, %s142
      %p146 = scmp.eq.s32.totalorder %s22, 0
      %p147 = por %p145, %p146
      %p148 = scmp.ne.s32.totalorder %s140, %s142
      %p149 = scmp.eq.s32.totalorder %s27, 1
      %p150 = por %p148, %p149
      %p151 = scmp.ne.s32.totalorder %s142, %s143
      %p152 = scmp.eq.s32.totalorder %s27, 0
      %p153 = por %p151, %p152
      %p154 = scmp.ne.s32.totalorder %s142, %s143
      %p155 = scmp.eq.s32.totalorder %s28, 1
      %p156 = por %p154, %p155
      %p158 = scmp.ne.s32.totalorder %s143, %s157
      %p159 = scmp.eq.s32.totalorder %s28, 0
      %p160 = por %p158, %p159
      %s162 = sadd.s32 %s161, 1
      %p165 = scmp.eq.s32.totalorder %s22, 1
      %p166 = scmp.ne.s32.totalorder %s161, %s163
      %p167 = scmp.eq.s32.totalorder %s22, 0
      %p168 = por %p166, %p167
      %p169 = scmp.ne.s32.totalorder %s161, %s163
      %p170 = scmp.eq.s32.totalorder %s27, 1
      %p171 = por %p169, %p170
      %p172 = scmp.ne.s32.totalorder %s163, %s164
      %p173 = scmp.eq.s32.totalorder %s27, 0
      %p174 = por %p172, %p173
      %p175 = scmp.ne.s32.totalorder %s163, %s164
      %p176 = scmp.eq.s32.totalorder %s28, 1
      %p177 = por %p175, %p176
      %p179 = scmp.ne.s32.totalorder %s164, %s178
      %p180 = scmp.eq.s32.totalorder %s28, 0
      %p181 = por %p179, %p180
      %s183 = sadd.s32 %s182, 1
      %p186 = scmp.eq.s32.totalorder %s22, 1
      %p187 = scmp.ne.s32.totalorder %s182, %s184
      %p188 = scmp.eq.s32.totalorder %s22, 0
      %p189 = por %p187, %p188
      %p190 = scmp.ne.s32.totalorder %s182, %s184
      %p191 = scmp.eq.s32.totalorder %s27, 1
      %p192 = por %p190, %p191
      %p193 = scmp.ne.s32.totalorder %s184, %s185
      %p194 = scmp.eq.s32.totalorder %s27, 0
      %p195 = por %p193, %p194
      %p196 = scmp.ne.s32.totalorder %s184, %s185
      %p197 = scmp.eq.s32.totalorder %s28, 1
      %p198 = por %p196, %p197
      %p200 = scmp.ne.s32.totalorder %s185, %s199
      %p201 = scmp.eq.s32.totalorder %s28, 0
      %p202 = por %p200, %p201
      %s204 = sadd.s32 %s203, 1
      %p207 = scmp.eq.s32.totalorder %s22, 1
      %p208 = scmp.ne.s32.totalorder %s203, %s205
      %p209 = scmp.eq.s32.totalorder %s22, 0
      %p210 = por %p208, %p209
      %p211 = scmp.ne.s32.totalorder %s203, %s205
      %p212 = scmp.eq.s32.totalorder %s27, 1
      %p213 = por %p211, %p212
      %p214 = scmp.ne.s32.totalorder %s205, %s206
      %p215 = scmp.eq.s32.totalorder %s27, 0
      %p216 = por %p214, %p215
      %p217 = scmp.ne.s32.totalorder %s205, %s206
      %p218 = scmp.eq.s32.totalorder %s28, 1
      %p219 = por %p217, %p218
      %p221 = scmp.ne.s32.totalorder %s206, %s220
      %p222 = scmp.eq.s32.totalorder %s28, 0
      %p223 = por %p221, %p222
      %s224 = ssub.s32 %s22, %s29
      %p225 = scmp.eq.s32.totalorder %s224, 0
      %s227 = sadd.s32 %s226, 1
      %s228 = scalar_select %p225, %s226, %s227
      %p231 = pneg %p225
      %p232 = scmp.eq.s32.totalorder %s22, 1
      %p233 = por %p231, %p232
      %p234 = scmp.ne.s32.totalorder %s226, %s229
      %p235 = scmp.eq.s32.totalorder %s22, 0
      %p236 = por %p234, %p235
      %p237 = scmp.ne.s32.totalorder %s226, %s229
      %p238 = scmp.eq.s32.totalorder %s27, 1
      %p239 = por %p237, %p238
      %p240 = scmp.ne.s32.totalorder %s229, %s230
      %p241 = scmp.eq.s32.totalorder %s27, 0
      %p242 = por %p240, %p241
      %p243 = scmp.ne.s32.totalorder %s229, %s230
      %p244 = scmp.eq.s32.totalorder %s28, 1
      %p245 = por %p243, %p244
      %p247 = scmp.ne.s32.totalorder %s230, %s246
      %p248 = scmp.eq.s32.totalorder %s28, 0
      %p249 = por %p247, %p248
      %p250 = scmp.le.s32.totalorder 1, %s22
      %p251 = scmp.lt.s32.totalorder %s22, 3
      %p252 = pnand %p250, %p251
      %p253 = pneg %p252
      // Predicated region
      $region9: #{tpu_custom_call.1} parent=5 // pred_check
        _
      $region10: #{tpu_custom_call.1} parent=5 // pred_check_branch
        %255 = sbr.rel (%p252) target = $region12
      $region11: #{tpu_custom_call.1} parent=5 // pred_region
        %s256 = ssub.s32 %s22, 1
        // Predicated region
        $region13: #{tpu_custom_call.1} parent=11 // pred_check
          %p257 = pneg %p69
        $region14: #{tpu_custom_call.1} parent=11 // pred_check_branch
          %259 = sbr.rel (%p257) target = $region16
        $region15: #{tpu_custom_call.1} parent=11 // pred_region
          _
        $region16: #{tpu_custom_call.1} parent=11 // pred_fallthru
          _
        // Predicated region
        $region17: #{tpu_custom_call.1} parent=11 // pred_check
          %p260 = pneg %p90
        $region18: #{tpu_custom_call.1} parent=11 // pred_check_branch
          %262 = sbr.rel (%p260) target = $region20
        $region19: #{tpu_custom_call.1} parent=11 // pred_region
          _
        $region20: #{tpu_custom_call.1} parent=11 // pred_fallthru
          _
        // Predicated region
        $region21: #{tpu_custom_call.1} parent=11 // pred_check
          %p263 = pneg %p111
        $region22: #{tpu_custom_call.1} parent=11 // pred_check_branch
          %265 = sbr.rel (%p263) target = $region24
        $region23: #{tpu_custom_call.1} parent=11 // pred_region
          _
        $region24: #{tpu_custom_call.1} parent=11 // pred_fallthru
          _
        // Predicated region
        $region25: #{tpu_custom_call.1} parent=11 // pred_check
          %p266 = pneg %p132
        $region26: #{tpu_custom_call.1} parent=11 // pred_check_branch
          %268 = sbr.rel (%p266) target = $region28
        $region27: #{tpu_custom_call.1} parent=11 // pred_region
          %s270 = ssub.s32 128, 128
          %271 = vsyncadd [#allocation6], %s270
          %s273 = sshll.u32 [#allocation5], 4
          %s274 = int_to_ptr.vmem [resolvable:$true] %s273
          %276 = dma.hbm_to_vmem [thread:$0]  %s4, 128, %s274, [#allocation6]
        $region28: #{tpu_custom_call.1} parent=11 // pred_fallthru
          _
        // Predicated region
        $region29: #{tpu_custom_call.1} parent=11 // pred_check
          %p277 = pneg %p153
        $region30: #{tpu_custom_call.1} parent=11 // pred_check_branch
          %279 = sbr.rel (%p277) target = $region32
        $region31: #{tpu_custom_call.1} parent=11 // pred_region
          _
        $region32: #{tpu_custom_call.1} parent=11 // pred_fallthru
          _
        // Predicated region
        $region33: #{tpu_custom_call.1} parent=11 // pred_check
          %p280 = pneg %p174
        $region34: #{tpu_custom_call.1} parent=11 // pred_check_branch
          %282 = sbr.rel (%p280) target = $region36
        $region35: #{tpu_custom_call.1} parent=11 // pred_region
          %s284 = ssub.s32 16, 16
          %285 = vsyncadd [#allocation6], %s284
          %s287 = sshll.u32 [#allocation7], 4
          %s288 = int_to_ptr.vmem [resolvable:$true] %s287
          %290 = dma.hbm_to_vmem [thread:$0]  %s6, 16, %s288, [#allocation6]
        $region36: #{tpu_custom_call.1} parent=11 // pred_fallthru
          _
        // Predicated region
        $region37: #{tpu_custom_call.1} parent=11 // pred_check
          %p291 = pneg %p195
        $region38: #{tpu_custom_call.1} parent=11 // pred_check_branch
          %293 = sbr.rel (%p291) target = $region40
        $region39: #{tpu_custom_call.1} parent=11 // pred_region
          _
        $region40: #{tpu_custom_call.1} parent=11 // pred_fallthru
          _
        // Predicated region
        $region41: #{tpu_custom_call.1} parent=11 // pred_check
          %p294 = pneg %p216
        $region42: #{tpu_custom_call.1} parent=11 // pred_check_branch
          %296 = sbr.rel (%p294) target = $region44
        $region43: #{tpu_custom_call.1} parent=11 // pred_region
          _
        $region44: #{tpu_custom_call.1} parent=11 // pred_fallthru
          _
      $region12: #{tpu_custom_call.1} parent=5 // pred_fallthru
        _
      %p297 = scmp.lt.s32.totalorder %s22, 2
      // Predicated region
      $region45: #{tpu_custom_call.1} parent=5 // pred_check
        %p298 = pneg %p297
      $region46: #{tpu_custom_call.1} parent=5 // pred_check_branch
        %300 = sbr.rel (%p298) target = $region48
      $region47: #{tpu_custom_call.1} parent=5 // pred_region
        // Predicated region
        $region49: #{tpu_custom_call.1} parent=47 // pred_check
          %p301 = pneg %p42
        $region50: #{tpu_custom_call.1} parent=47 // pred_check_branch
          %303 = sbr.rel (%p301) target = $region52
        $region51: #{tpu_custom_call.1} parent=47 // pred_region
          %s304 = sand.u32 %s32, 1
          %s305 = scalar_lea.sflag [#allocation3], %s304
          %s306 = sand.u32 %s32, 1
          %s307 = smul.addr %s306, 256
          %s308 = scalar_lea.vmem [#allocation2], %s307
          %s310 = ssub.s32 4096, 4096
          %311 = vsyncadd %s305, %s310
          %s312 = smul.addr %s22, 32
          %s313 = smul.addr %s312, 128
          %s314 = scalar_lea.hbm %s0, %s313
          %s315 = sshll.u32 %s308, 4
          %s316 = int_to_ptr.vmem [resolvable:$true] %s315
          %321 = dma.hbm_to_vmem [thread:$0]  %s314, 4096, %s316, %s305, 128, 128, 8
        $region52: #{tpu_custom_call.1} parent=47 // pred_fallthru
          _
      $region48: #{tpu_custom_call.1} parent=5 // pred_fallthru
        _
      %p322 = scmp.le.s32.totalorder 1, %s22
      %p323 = scmp.lt.s32.totalorder %s22, 3
      %p324 = pnand %p322, %p323
      %p325 = pneg %p324
      // Predicated region
      $region53: #{tpu_custom_call.1} parent=5 // pred_check
        _
      $region54: #{tpu_custom_call.1} parent=5 // pred_check_branch
        %327 = sbr.rel (%p324) target = $region56
      $region55: #{tpu_custom_call.1} parent=5 // pred_region
        %s328 = ssub.s32 %s22, 1
        %s329 = sand.u32 %s35, 1
        %s330 = scalar_lea.sflag [#allocation3], %s329
        %s331 = sand.u32 %s35, 1
        %s332 = smul.addr %s331, 256
        %s333 = scalar_lea.vmem [#allocation2], %s332
        // Predicated region
        $region57: #{tpu_custom_call.1} parent=55 // pred_check
          %p334 = pneg %p48
        $region58: #{tpu_custom_call.1} parent=55 // pred_check_branch
          %336 = sbr.rel (%p334) target = $region60
        $region59: #{tpu_custom_call.1} parent=55 // pred_region
          %337 = dma.done %s330, 4096
        $region60: #{tpu_custom_call.1} parent=55 // pred_fallthru
          _
        // Predicated region
        $region61: #{tpu_custom_call.1} parent=55 // pred_check
          %p338 = pneg %p132
        $region62: #{tpu_custom_call.1} parent=55 // pred_check_branch
          %340 = sbr.rel (%p338) target = $region64
        $region63: #{tpu_custom_call.1} parent=55 // pred_region
          %341 = dma.done [#allocation6], 128
        $region64: #{tpu_custom_call.1} parent=55 // pred_fallthru
          _
        // Predicated region
        $region65: #{tpu_custom_call.1} parent=55 // pred_check
          %p342 = pneg %p174
        $region66: #{tpu_custom_call.1} parent=55 // pred_check_branch
          %344 = sbr.rel (%p342) target = $region68
        $region67: #{tpu_custom_call.1} parent=55 // pred_region
          %345 = dma.done [#allocation6], 16
        $region68: #{tpu_custom_call.1} parent=55 // pred_fallthru
          _
        %s346 = sand.u32 %s35, 1
        %s347 = scalar_lea.sflag [#allocation3], %s346
        %s348 = sand.u32 %s35, 1
        %s349 = smul.addr %s348, 256
        %s350 = scalar_lea.vmem [#allocation2], %s349
        %p351 = pneg %p48
        %p352 = pneg %p45
        %p353 = pneg %p69
        %p354 = pneg %p66
        %p355 = pneg %p90
        %p356 = pneg %p87
        %p357 = pneg %p111
        %p358 = pneg %p108
        %p359 = pneg %p132
        %p360 = pneg %p129
        %p361 = pneg %p153
        %p362 = pneg %p150
        %p363 = pneg %p174
        %p364 = pneg %p171
        %p365 = pneg %p195
        %p366 = pneg %p192
        %p367 = pneg %p216
        %p368 = pneg %p213
        %p369 = pneg %p242
        %p370 = pneg %p239
        %s371 = sand.u32 %s229, 1
        %s372 = scalar_lea.sflag [#allocation4], %s371
        %s373 = sand.u32 %s229, 1
        %s374 = smul.addr %s373, 256
        %s375 = scalar_lea.vmem [#allocation8], %s374
        %v377 = vld [vmem:[%s333] sm:$0xff]
        %v378 = vld [vmem:[%s333 + $0x8] sm:$0xff]
        %v379 = vld [vmem:[%s333 + $0x10] sm:$0xff]
        %v380 = vld [vmem:[%s333 + $0x18] sm:$0xff]
        %v381 = vld [vmem:[%s333 + $0x20] sm:$0xff]
        %v382 = vld [vmem:[%s333 + $0x28] sm:$0xff]
        %v383 = vld [vmem:[%s333 + $0x30] sm:$0xff]
        %v384 = vld [vmem:[%s333 + $0x38] sm:$0xff]
        %v385 = vld [vmem:[%s333 + $0x40] sm:$0xff]
        %v386 = vld [vmem:[%s333 + $0x48] sm:$0xff]
        %v387 = vld [vmem:[%s333 + $0x50] sm:$0xff]
        %v388 = vld [vmem:[%s333 + $0x58] sm:$0xff]
        %v389 = vld [vmem:[%s333 + $0x60] sm:$0xff]
        %v390 = vld [vmem:[%s333 + $0x68] sm:$0xff]
        %v391 = vld [vmem:[%s333 + $0x70] sm:$0xff]
        %v392 = vld [vmem:[%s333 + $0x78] sm:$0xff]
        %v393 = vld [vmem:[%s333 + $0x80] sm:$0xff]
        %v394 = vld [vmem:[%s333 + $0x88] sm:$0xff]
        %v395 = vld [vmem:[%s333 + $0x90] sm:$0xff]
        %v396 = vld [vmem:[%s333 + $0x98] sm:$0xff]
        %v397 = vld [vmem:[%s333 + $0xa0] sm:$0xff]
        %v398 = vld [vmem:[%s333 + $0xa8] sm:$0xff]
        %v399 = vld [vmem:[%s333 + $0xb0] sm:$0xff]
        %v400 = vld [vmem:[%s333 + $0xb8] sm:$0xff]
        %v401 = vld [vmem:[%s333 + $0xc0] sm:$0xff]
        %v402 = vld [vmem:[%s333 + $0xc8] sm:$0xff]
        %v403 = vld [vmem:[%s333 + $0xd0] sm:$0xff]
        %v404 = vld [vmem:[%s333 + $0xd8] sm:$0xff]
        %v405 = vld [vmem:[%s333 + $0xe0] sm:$0xff]
        %v406 = vld [vmem:[%s333 + $0xe8] sm:$0xff]
        %v407 = vld [vmem:[%s333 + $0xf0] sm:$0xff]
        %v408 = vld [vmem:[%s333 + $0xf8] sm:$0xff]
        %v409 = vpack.c.bf16 %v378, %v377
        %v410 = vpack.c.bf16 %v380, %v379
        %v411 = vpack.c.bf16 %v382, %v381
        %v412 = vpack.c.bf16 %v384, %v383
        %v413 = vpack.c.bf16 %v386, %v385
        %v414 = vpack.c.bf16 %v388, %v387
        %v415 = vpack.c.bf16 %v390, %v389
        %v416 = vpack.c.bf16 %v392, %v391
        %v417 = vpack.c.bf16 %v394, %v393
        %v418 = vpack.c.bf16 %v396, %v395
        %v419 = vpack.c.bf16 %v398, %v397
        %v420 = vpack.c.bf16 %v400, %v399
        %v421 = vpack.c.bf16 %v402, %v401
        %v422 = vpack.c.bf16 %v404, %v403
        %v423 = vpack.c.bf16 %v406, %v405
        %v424 = vpack.c.bf16 %v408, %v407
        %v425 = vld [vmem:[%s1] sm:$0xf]
        %v426 = vld [vmem:[%s1 + $0x4] sm:$0xf]
        %v429 = vunpack.c.l.b16 %v425
        %v430 = vunpack.c.l.b16 %v426
        %v431 = vpack.c.b16 %v430, %v429
        %vm433 = vcmask 130048
        %v435 = vsel %vm433, %v409, 0
        %v438 = vsel %vm433, %v410, 0
        %v441 = vsel %vm433, %v411, 0
        %v444 = vsel %vm433, %v412, 0
        %v447 = vsel %vm433, %v413, 0
        %v450 = vsel %vm433, %v414, 0
        %v453 = vsel %vm433, %v415, 0
        %v456 = vsel %vm433, %v416, 0
        %v459 = vsel %vm433, %v417, 0
        %v462 = vsel %vm433, %v418, 0
        %v465 = vsel %vm433, %v419, 0
        %v468 = vsel %vm433, %v420, 0
        %v471 = vsel %vm433, %v421, 0
        %v474 = vsel %vm433, %v422, 0
        %v477 = vsel %vm433, %v423, 0
        %v480 = vsel %vm433, %v424, 0
        %482 = vmatprep.subr.bf16.mxu0 0
        %483 = vmatpush1.bf16.msra.mxu0 %v431
        %484 = vmatprep.subr.bf16.mxu0 0
        %485 = vmatpush1.bf16.msra.mxu0 0
        %486 = vmatprep.subr.bf16.mxu0 0
        %487 = vmatpush1.bf16.msra.mxu0 0
        %488 = vmatprep.subr.bf16.mxu0 0
        %489 = vmatpush1.bf16.msra.mxu0 0
        %490 = vmatprep.subr.bf16.mxu0 0
        %491 = vmatpush1.bf16.msra.mxu0 0
        %492 = vmatprep.subr.bf16.mxu0 0
        %493 = vmatpush1.bf16.msra.mxu0 0
        %494 = vmatprep.subr.bf16.mxu0 0
        %495 = vmatpush1.bf16.msra.mxu0 0
        %496 = vmatprep.subr.bf16.mxu0 0
        %497 = vmatpush1.bf16.msra.mxu0 0
        %498 = vmatprep.subr.bf16.mxu0 0
        %499 = vmatpush1.bf16.msra.mxu0 0
        %500 = vmatprep.subr.bf16.mxu0 0
        %501 = vmatpush1.bf16.msra.mxu0 0
        %502 = vmatprep.subr.bf16.mxu0 0
        %503 = vmatpush1.bf16.msra.mxu0 0
        %504 = vmatprep.subr.bf16.mxu0 0
        %505 = vmatpush1.bf16.msra.mxu0 0
        %506 = vmatprep.subr.bf16.mxu0 0
        %507 = vmatpush1.bf16.msra.mxu0 0
        %508 = vmatprep.subr.bf16.mxu0 0
        %509 = vmatpush1.bf16.msra.mxu0 0
        %510 = vmatprep.subr.bf16.mxu0 0
        %511 = vmatpush1.bf16.msra.mxu0 0
        %512 = vmatprep.subr.bf16.mxu0 0
        %513 = vmatpush1.bf16.msra.mxu0 0
        %514 = vmatprep.mubr.bf16.mxu0 0
        %515 = vmatmul.mubr.bf16.gmra.mrb[0].mxu0 %v435
        %v516 = vpop.f32.mrb[0].mxu0
        %v517 = vadd.f32 0.0, %v516
        %v518 = vpop.f32.mrb[0].mxu0
        %v519 = vpop.f32.mrb[0].mxu0
        %v520 = vadd.f32 0.0, %v519
        %v521 = vpop.f32.mrb[0].mxu0
        %522 = vmatprep.mubr.bf16.mxu0 0
        %523 = vmatmul.mubr.bf16.gmra.mrb[0].mxu0 %v438
        %v524 = vpop.f32.mrb[0].mxu0
        %v525 = vadd.f32 0.0, %v524
        %v526 = vpop.f32.mrb[0].mxu0
        %v527 = vpop.f32.mrb[0].mxu0
        %v528 = vadd.f32 0.0, %v527
        %v529 = vpop.f32.mrb[0].mxu0
        %530 = vmatprep.mubr.bf16.mxu0 0
        %531 = vmatmul.mubr.bf16.gmra.mrb[0].mxu0 %v441
        %v532 = vpop.f32.mrb[0].mxu0
        %v533 = vadd.f32 0.0, %v532
        %v534 = vpop.f32.mrb[0].mxu0
        %v535 = vpop.f32.mrb[0].mxu0
        %v536 = vadd.f32 0.0, %v535
        %v537 = vpop.f32.mrb[0].mxu0
        %538 = vmatprep.mubr.bf16.mxu0 0
        %539 = vmatmul.mubr.bf16.gmra.mrb[0].mxu0 %v444
        %v540 = vpop.f32.mrb[0].mxu0
        %v541 = vadd.f32 0.0, %v540
        %v542 = vpop.f32.mrb[0].mxu0
        %v543 = vpop.f32.mrb[0].mxu0
        %v544 = vadd.f32 0.0, %v543
        %v545 = vpop.f32.mrb[0].mxu0
        %546 = vmatprep.mubr.bf16.mxu0 0
        %547 = vmatmul.mubr.bf16.gmra.mrb[0].mxu0 %v447
        %v548 = vpop.f32.mrb[0].mxu0
        %v549 = vadd.f32 0.0, %v548
        %v550 = vpop.f32.mrb[0].mxu0
        %v551 = vpop.f32.mrb[0].mxu0
        %v552 = vadd.f32 0.0, %v551
        %v553 = vpop.f32.mrb[0].mxu0
        %554 = vmatprep.mubr.bf16.mxu0 0
        %555 = vmatmul.mubr.bf16.gmra.mrb[0].mxu0 %v450
        %v556 = vpop.f32.mrb[0].mxu0
        %v557 = vadd.f32 0.0, %v556
        %v558 = vpop.f32.mrb[0].mxu0
        %v559 = vpop.f32.mrb[0].mxu0
        %v560 = vadd.f32 0.0, %v559
        %v561 = vpop.f32.mrb[0].mxu0
        %562 = vmatprep.mubr.bf16.mxu0 0
        %563 = vmatmul.mubr.bf16.gmra.mrb[0].mxu0 %v453
        %v564 = vpop.f32.mrb[0].mxu0
        %v565 = vadd.f32 0.0, %v564
        %v566 = vpop.f32.mrb[0].mxu0
        %v567 = vpop.f32.mrb[0].mxu0
        %v568 = vadd.f32 0.0, %v567
        %v569 = vpop.f32.mrb[0].mxu0
        %570 = vmatprep.mubr.bf16.mxu0 0
        %571 = vmatmul.mubr.bf16.gmra.mrb[0].mxu0 %v456
        %v572 = vpop.f32.mrb[0].mxu0
        %v573 = vadd.f32 0.0, %v572
        %v574 = vpop.f32.mrb[0].mxu0
        %v575 = vpop.f32.mrb[0].mxu0
        %v576 = vadd.f32 0.0, %v575
        %v577 = vpop.f32.mrb[0].mxu0
        %578 = vmatprep.mubr.bf16.mxu0 0
        %579 = vmatmul.mubr.bf16.gmra.mrb[0].mxu0 %v459
        %v580 = vpop.f32.mrb[0].mxu0
        %v581 = vadd.f32 0.0, %v580
        %v582 = vpop.f32.mrb[0].mxu0
        %v583 = vpop.f32.mrb[0].mxu0
        %v584 = vadd.f32 0.0, %v583
        %v585 = vpop.f32.mrb[0].mxu0
        %586 = vmatprep.mubr.bf16.mxu0 0
        %587 = vmatmul.mubr.bf16.gmra.mrb[0].mxu0 %v462
        %v588 = vpop.f32.mrb[0].mxu0
        %v589 = vadd.f32 0.0, %v588
        %v590 = vpop.f32.mrb[0].mxu0
        %v591 = vpop.f32.mrb[0].mxu0
        %v592 = vadd.f32 0.0, %v591
        %v593 = vpop.f32.mrb[0].mxu0
        %594 = vmatprep.mubr.bf16.mxu0 0
        %595 = vmatmul.mubr.bf16.gmra.mrb[0].mxu0 %v465
        %v596 = vpop.f32.mrb[0].mxu0
        %v597 = vadd.f32 0.0, %v596
        %v598 = vpop.f32.mrb[0].mxu0
        %v599 = vpop.f32.mrb[0].mxu0
        %v600 = vadd.f32 0.0, %v599
        %v601 = vpop.f32.mrb[0].mxu0
        %602 = vmatprep.mubr.bf16.mxu0 0
        %603 = vmatmul.mubr.bf16.gmra.mrb[0].mxu0 %v468
        %v604 = vpop.f32.mrb[0].mxu0
        %v605 = vadd.f32 0.0, %v604
        %v606 = vpop.f32.mrb[0].mxu0
        %v607 = vpop.f32.mrb[0].mxu0
        %v608 = vadd.f32 0.0, %v607
        %v609 = vpop.f32.mrb[0].mxu0
        %610 = vmatprep.mubr.bf16.mxu0 0
        %611 = vmatmul.mubr.bf16.gmra.mrb[0].mxu0 %v471
        %v612 = vpop.f32.mrb[0].mxu0
        %v613 = vadd.f32 0.0, %v612
        %v614 = vpop.f32.mrb[0].mxu0
        %v615 = vpop.f32.mrb[0].mxu0
        %v616 = vadd.f32 0.0, %v615
        %v617 = vpop.f32.mrb[0].mxu0
        %618 = vmatprep.mubr.bf16.mxu0 0
        %619 = vmatmul.mubr.bf16.gmra.mrb[0].mxu0 %v474
        %v620 = vpop.f32.mrb[0].mxu0
        %v621 = vadd.f32 0.0, %v620
        %v622 = vpop.f32.mrb[0].mxu0
        %v623 = vpop.f32.mrb[0].mxu0
        %v624 = vadd.f32 0.0, %v623
        %v625 = vpop.f32.mrb[0].mxu0
        %626 = vmatprep.mubr.bf16.mxu0 0
        %627 = vmatmul.mubr.bf16.gmra.mrb[0].mxu0 %v477
        %v628 = vpop.f32.mrb[0].mxu0
        %v629 = vadd.f32 0.0, %v628
        %v630 = vpop.f32.mrb[0].mxu0
        %v631 = vpop.f32.mrb[0].mxu0
        %v632 = vadd.f32 0.0, %v631
        %v633 = vpop.f32.mrb[0].mxu0
        %634 = vmatprep.mubr.bf16.mxu0 0
        %635 = vmatmul.mubr.bf16.gmra.mrb[0].mxu0 %v480
        %v636 = vpop.f32.mrb[0].mxu0
        %v637 = vadd.f32 0.0, %v636
        %v638 = vpop.f32.mrb[0].mxu0
        %v639 = vpop.f32.mrb[0].mxu0
        %v640 = vadd.f32 0.0, %v639
        %v641 = vpop.f32.mrb[0].mxu0
        %642 = vdwg.mxu0
        %v643 = vld [vmem:[#allocation5] sm:$0xff]
        %v644 = vld [vmem:[%s2] sm:$0x1]
        %v645 = vld [vmem:[%s3] sm:$0x1]
        %vm646 = vcmask 64512
        %v647 = vsel %vm646, %v517, 0.0
        %v648 = vsel %vm646, %v520, 0.0
        %v649 = vadd.f32 %v647, %v648
        %v650 = vsel %vm646, %v525, 0.0
        %v651 = vadd.f32 %v649, %v650
        %v652 = vsel %vm646, %v528, 0.0
        %v653 = vadd.f32 %v651, %v652
        %v654 = vsel %vm646, %v533, 0.0
        %v655 = vadd.f32 %v653, %v654
        %v656 = vsel %vm646, %v536, 0.0
        %v657 = vadd.f32 %v655, %v656
        %v658 = vsel %vm646, %v541, 0.0
        %v659 = vadd.f32 %v657, %v658
        %v660 = vsel %vm646, %v544, 0.0
        %v661 = vadd.f32 %v659, %v660
        %v662 = vsel %vm646, %v549, 0.0
        %v663 = vadd.f32 %v661, %v662
        %v664 = vsel %vm646, %v552, 0.0
        %v665 = vadd.f32 %v663, %v664
        %v666 = vsel %vm646, %v557, 0.0
        %v667 = vadd.f32 %v665, %v666
        %v668 = vsel %vm646, %v560, 0.0
        %v669 = vadd.f32 %v667, %v668
        %v670 = vsel %vm646, %v565, 0.0
        %v671 = vadd.f32 %v669, %v670
        %v672 = vsel %vm646, %v568, 0.0
        %v673 = vadd.f32 %v671, %v672
        %v674 = vsel %vm646, %v573, 0.0
        %v675 = vadd.f32 %v673, %v674
        %v676 = vsel %vm646, %v576, 0.0
        %v677 = vadd.f32 %v675, %v676
        %v678 = vsel %vm646, %v581, 0.0
        %v679 = vadd.f32 %v677, %v678
        %v680 = vsel %vm646, %v584, 0.0
        %v681 = vadd.f32 %v679, %v680
        %v682 = vsel %vm646, %v589, 0.0
        %v683 = vadd.f32 %v681, %v682
        %v684 = vsel %vm646, %v592, 0.0
        %v685 = vadd.f32 %v683, %v684
        %v686 = vsel %vm646, %v597, 0.0
        %v687 = vadd.f32 %v685, %v686
        %v688 = vsel %vm646, %v600, 0.0
        %v689 = vadd.f32 %v687, %v688
        %v690 = vsel %vm646, %v605, 0.0
        %v691 = vadd.f32 %v689, %v690
        %v692 = vsel %vm646, %v608, 0.0
        %v693 = vadd.f32 %v691, %v692
        %v694 = vsel %vm646, %v613, 0.0
        %v695 = vadd.f32 %v693, %v694
        %v696 = vsel %vm646, %v616, 0.0
        %v697 = vadd.f32 %v695, %v696
        %v698 = vsel %vm646, %v621, 0.0
        %v699 = vadd.f32 %v697, %v698
        %v700 = vsel %vm646, %v624, 0.0
        %v701 = vadd.f32 %v699, %v700
        %v702 = vsel %vm646, %v629, 0.0
        %v703 = vadd.f32 %v701, %v702
        %v704 = vsel %vm646, %v632, 0.0
        %v705 = vadd.f32 %v703, %v704
        %v706 = vsel %vm646, %v637, 0.0
        %v707 = vadd.f32 %v705, %v706
        %v708 = vsel %vm646, %v640, 0.0
        %v709 = vadd.f32 %v707, %v708
        %v710 = vrot.slane %v709, 4
        %v711 = vadd.f32 %v709, %v710
        %v712 = vrot.slane %v711, 2
        %v713 = vadd.f32 %v711, %v712
        %v714 = vrot.slane %v713, 1
        %v715 = vadd.f32 %v713, %v714
        %v716 = vmul.f32 %v517, %v517
        %v717 = vmul.f32 %v520, %v520
        %v718 = vmul.f32 %v525, %v525
        %v719 = vmul.f32 %v528, %v528
        %v720 = vmul.f32 %v533, %v533
        %v721 = vmul.f32 %v536, %v536
        %v722 = vmul.f32 %v541, %v541
        %v723 = vmul.f32 %v544, %v544
        %v724 = vmul.f32 %v549, %v549
        %v725 = vmul.f32 %v552, %v552
        %v726 = vmul.f32 %v557, %v557
        %v727 = vmul.f32 %v560, %v560
        %v728 = vmul.f32 %v565, %v565
        %v729 = vmul.f32 %v568, %v568
        %v730 = vmul.f32 %v573, %v573
        %v731 = vmul.f32 %v576, %v576
        %v732 = vmul.f32 %v581, %v581
        %v733 = vmul.f32 %v584, %v584
        %v734 = vmul.f32 %v589, %v589
        %v735 = vmul.f32 %v592, %v592
        %v736 = vmul.f32 %v597, %v597
        %v737 = vmul.f32 %v600, %v600
        %v738 = vmul.f32 %v605, %v605
        %v739 = vmul.f32 %v608, %v608
        %v740 = vmul.f32 %v613, %v613
        %v741 = vmul.f32 %v616, %v616
        %v742 = vmul.f32 %v621, %v621
        %v743 = vmul.f32 %v624, %v624
        %v744 = vmul.f32 %v629, %v629
        %v745 = vmul.f32 %v632, %v632
        %v746 = vmul.f32 %v637, %v637
        %v747 = vmul.f32 %v640, %v640
        %v748 = vsel %vm646, %v716, 0.0
        %v749 = vsel %vm646, %v717, 0.0
        %v750 = vadd.f32 %v748, %v749
        %v751 = vsel %vm646, %v718, 0.0
        %v752 = vadd.f32 %v750, %v751
        %v753 = vsel %vm646, %v719, 0.0
        %v754 = vadd.f32 %v752, %v753
        %v755 = vsel %vm646, %v720, 0.0
        %v756 = vadd.f32 %v754, %v755
        %v757 = vsel %vm646, %v721, 0.0
        %v758 = vadd.f32 %v756, %v757
        %v759 = vsel %vm646, %v722, 0.0
        %v760 = vadd.f32 %v758, %v759
        %v761 = vsel %vm646, %v723, 0.0
        %v762 = vadd.f32 %v760, %v761
        %v763 = vsel %vm646, %v724, 0.0
        %v764 = vadd.f32 %v762, %v763
        %v765 = vsel %vm646, %v725, 0.0
        %v766 = vadd.f32 %v764, %v765
        %v767 = vsel %vm646, %v726, 0.0
        %v768 = vadd.f32 %v766, %v767
        %v769 = vsel %vm646, %v727, 0.0
        %v770 = vadd.f32 %v768, %v769
        %v771 = vsel %vm646, %v728, 0.0
        %v772 = vadd.f32 %v770, %v771
        %v773 = vsel %vm646, %v729, 0.0
        %v774 = vadd.f32 %v772, %v773
        %v775 = vsel %vm646, %v730, 0.0
        %v776 = vadd.f32 %v774, %v775
        %v777 = vsel %vm646, %v731, 0.0
        %v778 = vadd.f32 %v776, %v777
        %v779 = vsel %vm646, %v732, 0.0
        %v780 = vadd.f32 %v778, %v779
        %v781 = vsel %vm646, %v733, 0.0
        %v782 = vadd.f32 %v780, %v781
        %v783 = vsel %vm646, %v734, 0.0
        %v784 = vadd.f32 %v782, %v783
        %v785 = vsel %vm646, %v735, 0.0
        %v786 = vadd.f32 %v784, %v785
        %v787 = vsel %vm646, %v736, 0.0
        %v788 = vadd.f32 %v786, %v787
        %v789 = vsel %vm646, %v737, 0.0
        %v790 = vadd.f32 %v788, %v789
        %v791 = vsel %vm646, %v738, 0.0
        %v792 = vadd.f32 %v790, %v791
        %v793 = vsel %vm646, %v739, 0.0
        %v794 = vadd.f32 %v792, %v793
        %v795 = vsel %vm646, %v740, 0.0
        %v796 = vadd.f32 %v794, %v795
        %v797 = vsel %vm646, %v741, 0.0
        %v798 = vadd.f32 %v796, %v797
        %v799 = vsel %vm646, %v742, 0.0
        %v800 = vadd.f32 %v798, %v799
        %v801 = vsel %vm646, %v743, 0.0
        %v802 = vadd.f32 %v800, %v801
        %v803 = vsel %vm646, %v744, 0.0
        %v804 = vadd.f32 %v802, %v803
        %v805 = vsel %vm646, %v745, 0.0
        %v806 = vadd.f32 %v804, %v805
        %v807 = vsel %vm646, %v746, 0.0
        %v808 = vadd.f32 %v806, %v807
        %v809 = vsel %vm646, %v747, 0.0
        %v810 = vadd.f32 %v808, %v809
        %v811 = vrot.slane %v810, 4
        %v812 = vadd.f32 %v810, %v811
        %v813 = vrot.slane %v812, 2
        %v814 = vadd.f32 %v812, %v813
        %v815 = vrot.slane %v814, 1
        %v816 = vadd.f32 %v814, %v815
        %v818 = vsel %vm646, %v715, 0
        %820 = vmatprep.subr.mxu0 0.0
        %821 = vmatpush1.msra.mxu0 %v643
        %822 = vmatprep.subr.mxu0 0.0
        %823 = vmatpush1.msra.mxu0 0.0
        %824 = vmatprep.subr.mxu0 0.0
        %825 = vmatpush1.msra.mxu0 0.0
        %826 = vmatprep.subr.mxu0 0.0
        %827 = vmatpush1.msra.mxu0 0.0
        %828 = vmatprep.subr.mxu0 0.0
        %829 = vmatpush1.msra.mxu0 0.0
        %830 = vmatprep.subr.mxu0 0.0
        %831 = vmatpush1.msra.mxu0 0.0
        %832 = vmatprep.subr.mxu0 0.0
        %833 = vmatpush1.msra.mxu0 0.0
        %834 = vmatprep.subr.mxu0 0.0
        %835 = vmatpush1.msra.mxu0 0.0
        %836 = vmatprep.subr.mxu0 0.0
        %837 = vmatpush1.msra.mxu0 0.0
        %838 = vmatprep.subr.mxu0 0.0
        %839 = vmatpush1.msra.mxu0 0.0
        %840 = vmatprep.subr.mxu0 0.0
        %841 = vmatpush1.msra.mxu0 0.0
        %842 = vmatprep.subr.mxu0 0.0
        %843 = vmatpush1.msra.mxu0 0.0
        %844 = vmatprep.subr.mxu0 0.0
        %845 = vmatpush1.msra.mxu0 0.0
        %846 = vmatprep.subr.mxu0 0.0
        %847 = vmatpush1.msra.mxu0 0.0
        %848 = vmatprep.subr.mxu0 0.0
        %849 = vmatpush1.msra.mxu0 0.0
        %850 = vmatprep.subr.mxu0 0.0
        %851 = vmatpush1.msra.mxu0 0.0
        %852 = vmatprep.subr.mxu0 0.0
        %853 = vmatpush1.msra.mxu0 0.0
        %854 = vmatprep.subr.mxu0 0.0
        %855 = vmatpush1.msra.mxu0 0.0
        %856 = vmatprep.subr.mxu0 0.0
        %857 = vmatpush1.msra.mxu0 0.0
        %858 = vmatprep.subr.mxu0 0.0
        %859 = vmatpush1.msra.mxu0 0.0
        %860 = vmatprep.subr.mxu0 0.0
        %861 = vmatpush1.msra.mxu0 0.0
        %862 = vmatprep.subr.mxu0 0.0
        %863 = vmatpush1.msra.mxu0 0.0
        %864 = vmatprep.subr.mxu0 0.0
        %865 = vmatpush1.msra.mxu0 0.0
        %866 = vmatprep.subr.mxu0 0.0
        %867 = vmatpush1.msra.mxu0 0.0
        %868 = vmatprep.subr.mxu0 0.0
        %869 = vmatpush1.msra.mxu0 0.0
        %870 = vmatprep.subr.mxu0 0.0
        %871 = vmatpush1.msra.mxu0 0.0
        %872 = vmatprep.subr.mxu0 0.0
        %873 = vmatpush1.msra.mxu0 0.0
        %874 = vmatprep.subr.mxu0 0.0
        %875 = vmatpush1.msra.mxu0 0.0
        %876 = vmatprep.subr.mxu0 0.0
        %877 = vmatpush1.msra.mxu0 0.0
        %878 = vmatprep.subr.mxu0 0.0
        %879 = vmatpush1.msra.mxu0 0.0
        %880 = vmatprep.subr.mxu0 0.0
        %881 = vmatpush1.msra.mxu0 0.0
        %882 = vmatprep.subr.mxu0 0.0
        %883 = vmatpush1.msra.mxu0 0.0
        %884 = vmatprep.mubr.f32.mxu0 0.0
        %885 = vmatmul.mubr.f32.gmra.mrb[0].mxu0 %v818
        %v886 = vpop.f32.mrb[0].mxu0
        %v887 = vadd.f32 0.0, %v886
        %v888 = vpop.f32.mrb[0].mxu0
        %889 = vdwg.mxu0
        %v891 = vsel %vm646, %v816, 0
        %893 = vmatprep.subr.mxu0 0.0
        %894 = vmatpush1.msra.mxu0 %v643
        %895 = vmatprep.subr.mxu0 0.0
        %896 = vmatpush1.msra.mxu0 0.0
        %897 = vmatprep.subr.mxu0 0.0
        %898 = vmatpush1.msra.mxu0 0.0
        %899 = vmatprep.subr.mxu0 0.0
        %900 = vmatpush1.msra.mxu0 0.0
        %901 = vmatprep.subr.mxu0 0.0
        %902 = vmatpush1.msra.mxu0 0.0
        %903 = vmatprep.subr.mxu0 0.0
        %904 = vmatpush1.msra.mxu0 0.0
        %905 = vmatprep.subr.mxu0 0.0
        %906 = vmatpush1.msra.mxu0 0.0
        %907 = vmatprep.subr.mxu0 0.0
        %908 = vmatpush1.msra.mxu0 0.0
        %909 = vmatprep.subr.mxu0 0.0
        %910 = vmatpush1.msra.mxu0 0.0
        %911 = vmatprep.subr.mxu0 0.0
        %912 = vmatpush1.msra.mxu0 0.0
        %913 = vmatprep.subr.mxu0 0.0
        %914 = vmatpush1.msra.mxu0 0.0
        %915 = vmatprep.subr.mxu0 0.0
        %916 = vmatpush1.msra.mxu0 0.0
        %917 = vmatprep.subr.mxu0 0.0
        %918 = vmatpush1.msra.mxu0 0.0
        %919 = vmatprep.subr.mxu0 0.0
        %920 = vmatpush1.msra.mxu0 0.0
        %921 = vmatprep.subr.mxu0 0.0
        %922 = vmatpush1.msra.mxu0 0.0
        %923 = vmatprep.subr.mxu0 0.0
        %924 = vmatpush1.msra.mxu0 0.0
        %925 = vmatprep.subr.mxu0 0.0
        %926 = vmatpush1.msra.mxu0 0.0
        %927 = vmatprep.subr.mxu0 0.0
        %928 = vmatpush1.msra.mxu0 0.0
        %929 = vmatprep.subr.mxu0 0.0
        %930 = vmatpush1.msra.mxu0 0.0
        %931 = vmatprep.subr.mxu0 0.0
        %932 = vmatpush1.msra.mxu0 0.0
        %933 = vmatprep.subr.mxu0 0.0
        %934 = vmatpush1.msra.mxu0 0.0
        %935 = vmatprep.subr.mxu0 0.0
        %936 = vmatpush1.msra.mxu0 0.0
        %937 = vmatprep.subr.mxu0 0.0
        %938 = vmatpush1.msra.mxu0 0.0
        %939 = vmatprep.subr.mxu0 0.0
        %940 = vmatpush1.msra.mxu0 0.0
        %941 = vmatprep.subr.mxu0 0.0
        %942 = vmatpush1.msra.mxu0 0.0
        %943 = vmatprep.subr.mxu0 0.0
        %944 = vmatpush1.msra.mxu0 0.0
        %945 = vmatprep.subr.mxu0 0.0
        %946 = vmatpush1.msra.mxu0 0.0
        %947 = vmatprep.subr.mxu0 0.0
        %948 = vmatpush1.msra.mxu0 0.0
        %949 = vmatprep.subr.mxu0 0.0
        %950 = vmatpush1.msra.mxu0 0.0
        %951 = vmatprep.subr.mxu0 0.0
        %952 = vmatpush1.msra.mxu0 0.0
        %953 = vmatprep.subr.mxu0 0.0
        %954 = vmatpush1.msra.mxu0 0.0
        %955 = vmatprep.subr.mxu0 0.0
        %956 = vmatpush1.msra.mxu0 0.0
        %957 = vmatprep.mubr.f32.mxu0 0.0
        %958 = vmatmul.mubr.f32.gmra.mrb[0].mxu0 %v891
        %v959 = vpop.f32.mrb[0].mxu0
        %v960 = vadd.f32 0.0, %v959
        %v961 = vpop.f32.mrb[0].mxu0
        %962 = vdwg.mxu0
        %v963 = vmul.f32 %v887, %v887
        %v964 = vsub.f32 %v960, %v963
        %v965 = vmax.f32 %v964, 0.0
        %v966 = vadd.f32 %v965, 1e-05
        %v967 = vrsqrt.pop %v966
        %v968 = vmul.f32 %v967, %v644
        %v969 = vmul.f32 %v887, %v968
        %v970 = vsub.f32 %v645, %v969
        %v971 = vlaneseq
        %v972 = vshrl.u32 %v971, 7
        %v973 = vsub.s32 0, %v972
        %v974 = vrot.slane %v968, %v973
        %v975 = vmul.f32 %v517, %v974
        %v976 = vmul.f32 %v520, %v974
        %v977 = vmul.f32 %v525, %v974
        %v978 = vmul.f32 %v528, %v974
        %v979 = vmul.f32 %v533, %v974
        %v980 = vmul.f32 %v536, %v974
        %v981 = vmul.f32 %v541, %v974
        %v982 = vmul.f32 %v544, %v974
        %v983 = vmul.f32 %v549, %v974
        %v984 = vmul.f32 %v552, %v974
        %v985 = vmul.f32 %v557, %v974
        %v986 = vmul.f32 %v560, %v974
        %v987 = vmul.f32 %v565, %v974
        %v988 = vmul.f32 %v568, %v974
        %v989 = vmul.f32 %v573, %v974
        %v990 = vmul.f32 %v576, %v974
        %v991 = vmul.f32 %v581, %v974
        %v992 = vmul.f32 %v584, %v974
        %v993 = vmul.f32 %v589, %v974
        %v994 = vmul.f32 %v592, %v974
        %v995 = vmul.f32 %v597, %v974
        %v996 = vmul.f32 %v600, %v974
        %v997 = vmul.f32 %v605, %v974
        %v998 = vmul.f32 %v608, %v974
        %v999 = vmul.f32 %v613, %v974
        %v1000 = vmul.f32 %v616, %v974
        %v1001 = vmul.f32 %v621, %v974
        %v1002 = vmul.f32 %v624, %v974
        %v1003 = vmul.f32 %v629, %v974
        %v1004 = vmul.f32 %v632, %v974
        %v1005 = vmul.f32 %v637, %v974
        %v1006 = vmul.f32 %v640, %v974
        %v1008 = vlaneseq
        %v1009 = vshrl.u32 %v1008, 7
        %v1010 = vsub.s32 0, %v1009
        %v1011 = vrot.slane %v970, %v1010
        %v1013 = vadd.f32 %v975, %v1011
        %v1014 = vadd.f32 %v976, %v1011
        %v1015 = vadd.f32 %v977, %v1011
        %v1016 = vadd.f32 %v978, %v1011
        %v1017 = vadd.f32 %v979, %v1011
        %v1018 = vadd.f32 %v980, %v1011
        %v1019 = vadd.f32 %v981, %v1011
        %v1020 = vadd.f32 %v982, %v1011
        %v1021 = vadd.f32 %v983, %v1011
        %v1022 = vadd.f32 %v984, %v1011
        %v1023 = vadd.f32 %v985, %v1011
        %v1024 = vadd.f32 %v986, %v1011
        %v1025 = vadd.f32 %v987, %v1011
        %v1026 = vadd.f32 %v988, %v1011
        %v1027 = vadd.f32 %v989, %v1011
        %v1028 = vadd.f32 %v990, %v1011
        %v1029 = vadd.f32 %v991, %v1011
        %v1030 = vadd.f32 %v992, %v1011
        %v1031 = vadd.f32 %v993, %v1011
        %v1032 = vadd.f32 %v994, %v1011
        %v1033 = vadd.f32 %v995, %v1011
        %v1034 = vadd.f32 %v996, %v1011
        %v1035 = vadd.f32 %v997, %v1011
        %v1036 = vadd.f32 %v998, %v1011
        %v1037 = vadd.f32 %v999, %v1011
        %v1038 = vadd.f32 %v1000, %v1011
        %v1039 = vadd.f32 %v1001, %v1011
        %v1040 = vadd.f32 %v1002, %v1011
        %v1041 = vadd.f32 %v1003, %v1011
        %v1042 = vadd.f32 %v1004, %v1011
        %v1043 = vadd.f32 %v1005, %v1011
        %v1044 = vadd.f32 %v1006, %v1011
        %v1045 = vsub.f32 0.0, %v1013
        %v1046 = vsub.f32 0.0, %v1014
        %v1047 = vsub.f32 0.0, %v1015
        %v1048 = vsub.f32 0.0, %v1016
        %v1049 = vsub.f32 0.0, %v1017
        %v1050 = vsub.f32 0.0, %v1018
        %v1051 = vsub.f32 0.0, %v1019
        %v1052 = vsub.f32 0.0, %v1020
        %v1053 = vsub.f32 0.0, %v1021
        %v1054 = vsub.f32 0.0, %v1022
        %v1055 = vsub.f32 0.0, %v1023
        %v1056 = vsub.f32 0.0, %v1024
        %v1057 = vsub.f32 0.0, %v1025
        %v1058 = vsub.f32 0.0, %v1026
        %v1059 = vsub.f32 0.0, %v1027
        %v1060 = vsub.f32 0.0, %v1028
        %v1061 = vsub.f32 0.0, %v1029
        %v1062 = vsub.f32 0.0, %v1030
        %v1063 = vsub.f32 0.0, %v1031
        %v1064 = vsub.f32 0.0, %v1032
        %v1065 = vsub.f32 0.0, %v1033
        %v1066 = vsub.f32 0.0, %v1034
        %v1067 = vsub.f32 0.0, %v1035
        %v1068 = vsub.f32 0.0, %v1036
        %v1069 = vsub.f32 0.0, %v1037
        %v1070 = vsub.f32 0.0, %v1038
        %v1071 = vsub.f32 0.0, %v1039
        %v1072 = vsub.f32 0.0, %v1040
        %v1073 = vsub.f32 0.0, %v1041
        %v1074 = vsub.f32 0.0, %v1042
        %v1075 = vsub.f32 0.0, %v1043
        %v1076 = vsub.f32 0.0, %v1044
        %v1077 = vmul.f32 %v1045, 1.442695
        %v1078 = vpow.pop %v1077
        %v1079 = vmul.f32 %v1046, 1.442695
        %v1080 = vpow.pop %v1079
        %v1081 = vmul.f32 %v1047, 1.442695
        %v1082 = vpow.pop %v1081
        %v1083 = vmul.f32 %v1048, 1.442695
        %v1084 = vpow.pop %v1083
        %v1085 = vmul.f32 %v1049, 1.442695
        %v1086 = vpow.pop %v1085
        %v1087 = vmul.f32 %v1050, 1.442695
        %v1088 = vpow.pop %v1087
        %v1089 = vmul.f32 %v1051, 1.442695
        %v1090 = vpow.pop %v1089
        %v1091 = vmul.f32 %v1052, 1.442695
        %v1092 = vpow.pop %v1091
        %v1093 = vmul.f32 %v1053, 1.442695
        %v1094 = vpow.pop %v1093
        %v1095 = vmul.f32 %v1054, 1.442695
        %v1096 = vpow.pop %v1095
        %v1097 = vmul.f32 %v1055, 1.442695
        %v1098 = vpow.pop %v1097
        %v1099 = vmul.f32 %v1056, 1.442695
        %v1100 = vpow.pop %v1099
        %v1101 = vmul.f32 %v1057, 1.442695
        %v1102 = vpow.pop %v1101
        %v1103 = vmul.f32 %v1058, 1.442695
        %v1104 = vpow.pop %v1103
        %v1105 = vmul.f32 %v1059, 1.442695
        %v1106 = vpow.pop %v1105
        %v1107 = vmul.f32 %v1060, 1.442695
        %v1108 = vpow.pop %v1107
        %v1109 = vmul.f32 %v1061, 1.442695
        %v1110 = vpow.pop %v1109
        %v1111 = vmul.f32 %v1062, 1.442695
        %v1112 = vpow.pop %v1111
        %v1113 = vmul.f32 %v1063, 1.442695
        %v1114 = vpow.pop %v1113
        %v1115 = vmul.f32 %v1064, 1.442695
        %v1116 = vpow.pop %v1115
        %v1117 = vmul.f32 %v1065, 1.442695
        %v1118 = vpow.pop %v1117
        %v1119 = vmul.f32 %v1066, 1.442695
        %v1120 = vpow.pop %v1119
        %v1121 = vmul.f32 %v1067, 1.442695
        %v1122 = vpow.pop %v1121
        %v1123 = vmul.f32 %v1068, 1.442695
        %v1124 = vpow.pop %v1123
        %v1125 = vmul.f32 %v1069, 1.442695
        %v1126 = vpow.pop %v1125
        %v1127 = vmul.f32 %v1070, 1.442695
        %v1128 = vpow.pop %v1127
        %v1129 = vmul.f32 %v1071, 1.442695
        %v1130 = vpow.pop %v1129
        %v1131 = vmul.f32 %v1072, 1.442695
        %v1132 = vpow.pop %v1131
        %v1133 = vmul.f32 %v1073, 1.442695
        %v1134 = vpow.pop %v1133
        %v1135 = vmul.f32 %v1074, 1.442695
        %v1136 = vpow.pop %v1135
        %v1137 = vmul.f32 %v1075, 1.442695
        %v1138 = vpow.pop %v1137
        %v1139 = vmul.f32 %v1076, 1.442695
        %v1140 = vpow.pop %v1139
        %v1141 = vadd.f32 %v1078, 1.0
        %v1142 = vadd.f32 %v1080, 1.0
        %v1143 = vadd.f32 %v1082, 1.0
        %v1144 = vadd.f32 %v1084, 1.0
        %v1145 = vadd.f32 %v1086, 1.0
        %v1146 = vadd.f32 %v1088, 1.0
        %v1147 = vadd.f32 %v1090, 1.0
        %v1148 = vadd.f32 %v1092, 1.0
        %v1149 = vadd.f32 %v1094, 1.0
        %v1150 = vadd.f32 %v1096, 1.0
        %v1151 = vadd.f32 %v1098, 1.0
        %v1152 = vadd.f32 %v1100, 1.0
        %v1153 = vadd.f32 %v1102, 1.0
        %v1154 = vadd.f32 %v1104, 1.0
        %v1155 = vadd.f32 %v1106, 1.0
        %v1156 = vadd.f32 %v1108, 1.0
        %v1157 = vadd.f32 %v1110, 1.0
        %v1158 = vadd.f32 %v1112, 1.0
        %v1159 = vadd.f32 %v1114, 1.0
        %v1160 = vadd.f32 %v1116, 1.0
        %v1161 = vadd.f32 %v1118, 1.0
        %v1162 = vadd.f32 %v1120, 1.0
        %v1163 = vadd.f32 %v1122, 1.0
        %v1164 = vadd.f32 %v1124, 1.0
        %v1165 = vadd.f32 %v1126, 1.0
        %v1166 = vadd.f32 %v1128, 1.0
        %v1167 = vadd.f32 %v1130, 1.0
        %v1168 = vadd.f32 %v1132, 1.0
        %v1169 = vadd.f32 %v1134, 1.0
        %v1170 = vadd.f32 %v1136, 1.0
        %v1171 = vadd.f32 %v1138, 1.0
        %v1172 = vadd.f32 %v1140, 1.0
        %v1173 = vrcp.pop %v1141
        %v1174 = vrcp.pop %v1142
        %v1175 = vrcp.pop %v1143
        %v1176 = vrcp.pop %v1144
        %v1177 = vrcp.pop %v1145
        %v1178 = vrcp.pop %v1146
        %v1179 = vrcp.pop %v1147
        %v1180 = vrcp.pop %v1148
        %v1181 = vrcp.pop %v1149
        %v1182 = vrcp.pop %v1150
        %v1183 = vrcp.pop %v1151
        %v1184 = vrcp.pop %v1152
        %v1185 = vrcp.pop %v1153
        %v1186 = vrcp.pop %v1154
        %v1187 = vrcp.pop %v1155
        %v1188 = vrcp.pop %v1156
        %v1189 = vrcp.pop %v1157
        %v1190 = vrcp.pop %v1158
        %v1191 = vrcp.pop %v1159
        %v1192 = vrcp.pop %v1160
        %v1193 = vrcp.pop %v1161
        %v1194 = vrcp.pop %v1162
        %v1195 = vrcp.pop %v1163
        %v1196 = vrcp.pop %v1164
        %v1197 = vrcp.pop %v1165
        %v1198 = vrcp.pop %v1166
        %v1199 = vrcp.pop %v1167
        %v1200 = vrcp.pop %v1168
        %v1201 = vrcp.pop %v1169
        %v1202 = vrcp.pop %v1170
        %v1203 = vrcp.pop %v1171
        %v1204 = vrcp.pop %v1172
        %v1205 = vmul.f32 %v1013, %v1173
        %v1206 = vmul.f32 %v1014, %v1174
        %v1207 = vmul.f32 %v1015, %v1175
        %v1208 = vmul.f32 %v1016, %v1176
        %v1209 = vmul.f32 %v1017, %v1177
        %v1210 = vmul.f32 %v1018, %v1178
        %v1211 = vmul.f32 %v1019, %v1179
        %v1212 = vmul.f32 %v1020, %v1180
        %v1213 = vmul.f32 %v1021, %v1181
        %v1214 = vmul.f32 %v1022, %v1182
        %v1215 = vmul.f32 %v1023, %v1183
        %v1216 = vmul.f32 %v1024, %v1184
        %v1217 = vmul.f32 %v1025, %v1185
        %v1218 = vmul.f32 %v1026, %v1186
        %v1219 = vmul.f32 %v1027, %v1187
        %v1220 = vmul.f32 %v1028, %v1188
        %v1221 = vmul.f32 %v1029, %v1189
        %v1222 = vmul.f32 %v1030, %v1190
        %v1223 = vmul.f32 %v1031, %v1191
        %v1224 = vmul.f32 %v1032, %v1192
        %v1225 = vmul.f32 %v1033, %v1193
        %v1226 = vmul.f32 %v1034, %v1194
        %v1227 = vmul.f32 %v1035, %v1195
        %v1228 = vmul.f32 %v1036, %v1196
        %v1229 = vmul.f32 %v1037, %v1197
        %v1230 = vmul.f32 %v1038, %v1198
        %v1231 = vmul.f32 %v1039, %v1199
        %v1232 = vmul.f32 %v1040, %v1200
        %v1233 = vmul.f32 %v1041, %v1201
        %v1234 = vmul.f32 %v1042, %v1202
        %v1235 = vmul.f32 %v1043, %v1203
        %v1236 = vmul.f32 %v1044, %v1204
        %v1237 = vpack.c.bf16 %v1206, %v1205
        %v1238 = vpack.c.bf16 %v1208, %v1207
        %v1239 = vpack.c.bf16 %v1210, %v1209
        %v1240 = vpack.c.bf16 %v1212, %v1211
        %v1241 = vpack.c.bf16 %v1214, %v1213
        %v1242 = vpack.c.bf16 %v1216, %v1215
        %v1243 = vpack.c.bf16 %v1218, %v1217
        %v1244 = vpack.c.bf16 %v1220, %v1219
        %v1245 = vpack.c.bf16 %v1222, %v1221
        %v1246 = vpack.c.bf16 %v1224, %v1223
        %v1247 = vpack.c.bf16 %v1226, %v1225
        %v1248 = vpack.c.bf16 %v1228, %v1227
        %v1249 = vpack.c.bf16 %v1230, %v1229
        %v1250 = vpack.c.bf16 %v1232, %v1231
        %v1251 = vpack.c.bf16 %v1234, %v1233
        %v1252 = vpack.c.bf16 %v1236, %v1235
        %v1253 = vld [vmem:[%s5] sm:$0xf]
        %v1254 = vmax.f32 %v1207, %v1205
        %v1255 = vmax.f32 %v1208, %v1206
        %v1256 = vmax.f32 %v1209, %v1205
        %v1257 = vmax.f32 %v1210, %v1206
        %v1258 = vmax.f32 %v1211, %v1207
        %v1259 = vmax.f32 %v1212, %v1208
        %v1260 = vmax.f32 %v1213, %v1209
        %v1261 = vmax.f32 %v1214, %v1210
        %v1262 = vmax.f32 %v1215, %v1211
        %v1263 = vmax.f32 %v1216, %v1212
        %v1264 = vmax.f32 %v1217, %v1213
        %v1265 = vmax.f32 %v1218, %v1214
        %v1266 = vmax.f32 %v1219, %v1215
        %v1267 = vmax.f32 %v1220, %v1216
        %v1268 = vmax.f32 %v1221, %v1217
        %v1269 = vmax.f32 %v1222, %v1218
        %v1270 = vmax.f32 %v1223, %v1219
        %v1271 = vmax.f32 %v1224, %v1220
        %v1272 = vmax.f32 %v1225, %v1221
        %v1273 = vmax.f32 %v1226, %v1222
        %v1274 = vmax.f32 %v1227, %v1223
        %v1275 = vmax.f32 %v1228, %v1224
        %v1276 = vmax.f32 %v1229, %v1225
        %v1277 = vmax.f32 %v1230, %v1226
        %v1278 = vmax.f32 %v1231, %v1227
        %v1279 = vmax.f32 %v1232, %v1228
        %v1280 = vmax.f32 %v1233, %v1229
        %v1281 = vmax.f32 %v1234, %v1230
        %v1282 = vmax.f32 %v1235, %v1231
        %v1283 = vmax.f32 %v1236, %v1232
        %v1284 = vmax.f32 %v1254, %v1205
        %v1285 = vmax.f32 %v1255, %v1206
        %v1286 = vmax.f32 %v1256, %v1207
        %v1287 = vmax.f32 %v1257, %v1208
        %v1288 = vmax.f32 %v1258, %v1209
        %v1289 = vmax.f32 %v1259, %v1210
        %v1290 = vmax.f32 %v1260, %v1211
        %v1291 = vmax.f32 %v1261, %v1212
        %v1292 = vmax.f32 %v1262, %v1213
        %v1293 = vmax.f32 %v1263, %v1214
        %v1294 = vmax.f32 %v1264, %v1215
        %v1295 = vmax.f32 %v1265, %v1216
        %v1296 = vmax.f32 %v1266, %v1217
        %v1297 = vmax.f32 %v1267, %v1218
        %v1298 = vmax.f32 %v1268, %v1219
        %v1299 = vmax.f32 %v1269, %v1220
        %v1300 = vmax.f32 %v1270, %v1221
        %v1301 = vmax.f32 %v1271, %v1222
        %v1302 = vmax.f32 %v1272, %v1223
        %v1303 = vmax.f32 %v1273, %v1224
        %v1304 = vmax.f32 %v1274, %v1225
        %v1305 = vmax.f32 %v1275, %v1226
        %v1306 = vmax.f32 %v1276, %v1227
        %v1307 = vmax.f32 %v1277, %v1228
        %v1308 = vmax.f32 %v1278, %v1229
        %v1309 = vmax.f32 %v1279, %v1230
        %v1310 = vmax.f32 %v1280, %v1231
        %v1311 = vmax.f32 %v1281, %v1232
        %v1312 = vmax.f32 %v1282, %v1233
        %v1313 = vmax.f32 %v1283, %v1234
        %v1314 = vmax.f32 %v1284, %v1209
        %v1315 = vmax.f32 %v1285, %v1210
        %v1316 = vmax.f32 %v1286, %v1211
        %v1317 = vmax.f32 %v1287, %v1212
        %v1318 = vmax.f32 %v1288, %v1213
        %v1319 = vmax.f32 %v1289, %v1214
        %v1320 = vmax.f32 %v1290, %v1215
        %v1321 = vmax.f32 %v1291, %v1216
        %v1322 = vmax.f32 %v1292, %v1217
        %v1323 = vmax.f32 %v1293, %v1218
        %v1324 = vmax.f32 %v1294, %v1219
        %v1325 = vmax.f32 %v1295, %v1220
        %v1326 = vmax.f32 %v1296, %v1221
        %v1327 = vmax.f32 %v1297, %v1222
        %v1328 = vmax.f32 %v1298, %v1223
        %v1329 = vmax.f32 %v1299, %v1224
        %v1330 = vmax.f32 %v1300, %v1225
        %v1331 = vmax.f32 %v1301, %v1226
        %v1332 = vmax.f32 %v1302, %v1227
        %v1333 = vmax.f32 %v1303, %v1228
        %v1334 = vmax.f32 %v1304, %v1229
        %v1335 = vmax.f32 %v1305, %v1230
        %v1336 = vmax.f32 %v1306, %v1231
        %v1337 = vmax.f32 %v1307, %v1232
        %v1338 = vmax.f32 %v1308, %v1233
        %v1339 = vmax.f32 %v1309, %v1234
        %v1340 = vmax.f32 %v1310, %v1235
        %v1341 = vmax.f32 %v1311, %v1236
        %v1342 = vmax.f32 %v1312, %v1235
        %v1343 = vmax.f32 %v1313, %v1236
        %v1344 = vmax.f32 %v1254, %v1209
        %v1345 = vmax.f32 %v1255, %v1210
        %v1346 = vmax.f32 %v1314, %v1211
        %v1347 = vmax.f32 %v1315, %v1212
        %v1348 = vmax.f32 %v1316, %v1213
        %v1349 = vmax.f32 %v1317, %v1214
        %v1350 = vmax.f32 %v1318, %v1215
        %v1351 = vmax.f32 %v1319, %v1216
        %v1352 = vmax.f32 %v1320, %v1217
        %v1353 = vmax.f32 %v1321, %v1218
        %v1354 = vmax.f32 %v1322, %v1219
        %v1355 = vmax.f32 %v1323, %v1220
        %v1356 = vmax.f32 %v1324, %v1221
        %v1357 = vmax.f32 %v1325, %v1222
        %v1358 = vmax.f32 %v1326, %v1223
        %v1359 = vmax.f32 %v1327, %v1224
        %v1360 = vmax.f32 %v1328, %v1225
        %v1361 = vmax.f32 %v1329, %v1226
        %v1362 = vmax.f32 %v1330, %v1227
        %v1363 = vmax.f32 %v1331, %v1228
        %v1364 = vmax.f32 %v1332, %v1229
        %v1365 = vmax.f32 %v1333, %v1230
        %v1366 = vmax.f32 %v1334, %v1231
        %v1367 = vmax.f32 %v1335, %v1232
        %v1368 = vmax.f32 %v1336, %v1233
        %v1369 = vmax.f32 %v1337, %v1234
        %v1370 = vmax.f32 %v1338, %v1235
        %v1371 = vmax.f32 %v1339, %v1236
        %v1372 = vmax.f32 %v1340, %v1235
        %v1373 = vmax.f32 %v1341, %v1236
        %v1374 = vmax.f32 %v1342, %v1235
        %v1375 = vmax.f32 %v1343, %v1236
        %v1392 = vrot.slane %v1344, 7
        %v1393 = vrot.slane %v1346, 7
        %v1394 = vrot.slane %v1348, 7
        %v1395 = vrot.slane %v1350, 7
        %v1396 = vrot.slane %v1352, 7
        %v1397 = vrot.slane %v1354, 7
        %v1398 = vrot.slane %v1356, 7
        %v1399 = vrot.slane %v1358, 7
        %v1400 = vrot.slane %v1360, 7
        %v1401 = vrot.slane %v1362, 7
        %v1402 = vrot.slane %v1364, 7
        %v1403 = vrot.slane %v1366, 7
        %v1404 = vrot.slane %v1368, 7
        %v1405 = vrot.slane %v1370, 7
        %v1406 = vrot.slane %v1372, 7
        %v1407 = vrot.slane %v1374, 7
        %vm1440 = vcmask 1041408
        %v1441 = vrot.slane %v1344, 6
        %v1442 = vrot.slane %v1345, 6
        %v1443 = vsel %vm1440, %v1441, %v1442
        %v1444 = vrot.slane %v1346, 6
        %v1445 = vrot.slane %v1347, 6
        %v1446 = vsel %vm1440, %v1444, %v1445
        %v1447 = vrot.slane %v1348, 6
        %v1448 = vrot.slane %v1349, 6
        %v1449 = vsel %vm1440, %v1447, %v1448
        %v1450 = vrot.slane %v1350, 6
        %v1451 = vrot.slane %v1351, 6
        %v1452 = vsel %vm1440, %v1450, %v1451
        %v1453 = vrot.slane %v1352, 6
        %v1454 = vrot.slane %v1353, 6
        %v1455 = vsel %vm1440, %v1453, %v1454
        %v1456 = vrot.slane %v1354, 6
        %v1457 = vrot.slane %v1355, 6
        %v1458 = vsel %vm1440, %v1456, %v1457
        %v1459 = vrot.slane %v1356, 6
        %v1460 = vrot.slane %v1357, 6
        %v1461 = vsel %vm1440, %v1459, %v1460
        %v1462 = vrot.slane %v1358, 6
        %v1463 = vrot.slane %v1359, 6
        %v1464 = vsel %vm1440, %v1462, %v1463
        %v1465 = vrot.slane %v1360, 6
        %v1466 = vrot.slane %v1361, 6
        %v1467 = vsel %vm1440, %v1465, %v1466
        %v1468 = vrot.slane %v1362, 6
        %v1469 = vrot.slane %v1363, 6
        %v1470 = vsel %vm1440, %v1468, %v1469
        %v1471 = vrot.slane %v1364, 6
        %v1472 = vrot.slane %v1365, 6
        %v1473 = vsel %vm1440, %v1471, %v1472
        %v1474 = vrot.slane %v1366, 6
        %v1475 = vrot.slane %v1367, 6
        %v1476 = vsel %vm1440, %v1474, %v1475
        %v1477 = vrot.slane %v1368, 6
        %v1478 = vrot.slane %v1369, 6
        %v1479 = vsel %vm1440, %v1477, %v1478
        %v1480 = vrot.slane %v1370, 6
        %v1481 = vrot.slane %v1371, 6
        %v1482 = vsel %vm1440, %v1480, %v1481
        %v1483 = vrot.slane %v1372, 6
        %v1484 = vrot.slane %v1373, 6
        %v1485 = vsel %vm1440, %v1483, %v1484
        %v1486 = vrot.slane %v1374, 6
        %v1487 = vrot.slane %v1375, 6
        %v1488 = vsel %vm1440, %v1486, %v1487
        %v1537 = vrot.slane %v1345, 5
        %v1538 = vrot.slane %v1347, 5
        %v1539 = vrot.slane %v1349, 5
        %v1540 = vrot.slane %v1351, 5
        %v1541 = vrot.slane %v1353, 5
        %v1542 = vrot.slane %v1355, 5
        %v1543 = vrot.slane %v1357, 5
        %v1544 = vrot.slane %v1359, 5
        %v1545 = vrot.slane %v1361, 5
        %v1546 = vrot.slane %v1363, 5
        %v1547 = vrot.slane %v1365, 5
        %v1548 = vrot.slane %v1367, 5
        %v1549 = vrot.slane %v1369, 5
        %v1550 = vrot.slane %v1371, 5
        %v1551 = vrot.slane %v1373, 5
        %v1552 = vrot.slane %v1375, 5
        %v1569 = vrot.slane %v1345, 4
        %v1570 = vrot.slane %v1347, 4
        %v1571 = vrot.slane %v1349, 4
        %v1572 = vrot.slane %v1351, 4
        %v1573 = vrot.slane %v1353, 4
        %v1574 = vrot.slane %v1355, 4
        %v1575 = vrot.slane %v1357, 4
        %v1576 = vrot.slane %v1359, 4
        %v1577 = vrot.slane %v1361, 4
        %v1578 = vrot.slane %v1363, 4
        %v1579 = vrot.slane %v1365, 4
        %v1580 = vrot.slane %v1367, 4
        %v1581 = vrot.slane %v1369, 4
        %v1582 = vrot.slane %v1371, 4
        %v1583 = vrot.slane %v1373, 4
        %v1584 = vrot.slane %v1375, 4
        %vm1601 = vcmask 1040384
        %v1602 = vsel %vm1601, %v1344, %v1392
        %v1603 = vsel %vm1601, %v1346, %v1393
        %v1604 = vsel %vm1601, %v1348, %v1394
        %v1605 = vsel %vm1601, %v1350, %v1395
        %v1606 = vsel %vm1601, %v1352, %v1396
        %v1607 = vsel %vm1601, %v1354, %v1397
        %v1608 = vsel %vm1601, %v1356, %v1398
        %v1609 = vsel %vm1601, %v1358, %v1399
        %v1610 = vsel %vm1601, %v1360, %v1400
        %v1611 = vsel %vm1601, %v1362, %v1401
        %v1612 = vsel %vm1601, %v1364, %v1402
        %v1613 = vsel %vm1601, %v1366, %v1403
        %v1614 = vsel %vm1601, %v1368, %v1404
        %v1615 = vsel %vm1601, %v1370, %v1405
        %v1616 = vsel %vm1601, %v1372, %v1406
        %v1617 = vsel %vm1601, %v1374, %v1407
        %v1618 = vsel %vm1440, %v1602, %v1441
        %v1619 = vsel %vm1440, %v1603, %v1444
        %v1620 = vsel %vm1440, %v1604, %v1447
        %v1621 = vsel %vm1440, %v1605, %v1450
        %v1622 = vsel %vm1440, %v1606, %v1453
        %v1623 = vsel %vm1440, %v1607, %v1456
        %v1624 = vsel %vm1440, %v1608, %v1459
        %v1625 = vsel %vm1440, %v1609, %v1462
        %v1626 = vsel %vm1440, %v1610, %v1465
        %v1627 = vsel %vm1440, %v1611, %v1468
        %v1628 = vsel %vm1440, %v1612, %v1471
        %v1629 = vsel %vm1440, %v1613, %v1474
        %v1630 = vsel %vm1440, %v1614, %v1477
        %v1631 = vsel %vm1440, %v1615, %v1480
        %v1632 = vsel %vm1440, %v1616, %v1483
        %v1633 = vsel %vm1440, %v1617, %v1486
        %v1634 = vsel %vm1440, %v1442, %v1537
        %v1635 = vsel %vm1440, %v1445, %v1538
        %v1636 = vsel %vm1440, %v1448, %v1539
        %v1637 = vsel %vm1440, %v1451, %v1540
        %v1638 = vsel %vm1440, %v1454, %v1541
        %v1639 = vsel %vm1440, %v1457, %v1542
        %v1640 = vsel %vm1440, %v1460, %v1543
        %v1641 = vsel %vm1440, %v1463, %v1544
        %v1642 = vsel %vm1440, %v1466, %v1545
        %v1643 = vsel %vm1440, %v1469, %v1546
        %v1644 = vsel %vm1440, %v1472, %v1547
        %v1645 = vsel %vm1440, %v1475, %v1548
        %v1646 = vsel %vm1440, %v1478, %v1549
        %v1647 = vsel %vm1440, %v1481, %v1550
        %v1648 = vsel %vm1440, %v1484, %v1551
        %v1649 = vsel %vm1440, %v1487, %v1552
        %vm1650 = vcmask 1042432
        %v1651 = vsel %vm1650, %v1634, %v1569
        %v1652 = vsel %vm1650, %v1635, %v1570
        %v1653 = vsel %vm1650, %v1636, %v1571
        %v1654 = vsel %vm1650, %v1637, %v1572
        %v1655 = vsel %vm1650, %v1638, %v1573
        %v1656 = vsel %vm1650, %v1639, %v1574
        %v1657 = vsel %vm1650, %v1640, %v1575
        %v1658 = vsel %vm1650, %v1641, %v1576
        %v1659 = vsel %vm1650, %v1642, %v1577
        %v1660 = vsel %vm1650, %v1643, %v1578
        %v1661 = vsel %vm1650, %v1644, %v1579
        %v1662 = vsel %vm1650, %v1645, %v1580
        %v1663 = vsel %vm1650, %v1646, %v1581
        %v1664 = vsel %vm1650, %v1647, %v1582
        %v1665 = vsel %vm1650, %v1648, %v1583
        %v1666 = vsel %vm1650, %v1649, %v1584
        %v1667 = vmax.f32 %v1344, %v1618
        %v1668 = vmax.f32 %v1345, %v1443
        %v1669 = vmax.f32 %v1346, %v1619
        %v1670 = vmax.f32 %v1347, %v1446
        %v1671 = vmax.f32 %v1348, %v1620
        %v1672 = vmax.f32 %v1349, %v1449
        %v1673 = vmax.f32 %v1350, %v1621
        %v1674 = vmax.f32 %v1351, %v1452
        %v1675 = vmax.f32 %v1352, %v1622
        %v1676 = vmax.f32 %v1353, %v1455
        %v1677 = vmax.f32 %v1354, %v1623
        %v1678 = vmax.f32 %v1355, %v1458
        %v1679 = vmax.f32 %v1356, %v1624
        %v1680 = vmax.f32 %v1357, %v1461
        %v1681 = vmax.f32 %v1358, %v1625
        %v1682 = vmax.f32 %v1359, %v1464
        %v1683 = vmax.f32 %v1360, %v1626
        %v1684 = vmax.f32 %v1361, %v1467
        %v1685 = vmax.f32 %v1362, %v1627
        %v1686 = vmax.f32 %v1363, %v1470
        %v1687 = vmax.f32 %v1364, %v1628
        %v1688 = vmax.f32 %v1365, %v1473
        %v1689 = vmax.f32 %v1366, %v1629
        %v1690 = vmax.f32 %v1367, %v1476
        %v1691 = vmax.f32 %v1368, %v1630
        %v1692 = vmax.f32 %v1369, %v1479
        %v1693 = vmax.f32 %v1370, %v1631
        %v1694 = vmax.f32 %v1371, %v1482
        %v1695 = vmax.f32 %v1372, %v1632
        %v1696 = vmax.f32 %v1373, %v1485
        %v1697 = vmax.f32 %v1374, %v1633
        %v1698 = vmax.f32 %v1375, %v1488
        %vm1731 = vcmask 1046528
        %v1732 = vrot.slane %v1618, 1
        %v1733 = vrot.slane %v1443, 1
        %v1734 = vsel %vm1731, %v1732, %v1733
        %v1735 = vrot.slane %v1651, 1
        %v1736 = vsel %vm1731, %v1733, %v1735
        %v1737 = vrot.slane %v1619, 1
        %v1738 = vrot.slane %v1446, 1
        %v1739 = vsel %vm1731, %v1737, %v1738
        %v1740 = vrot.slane %v1652, 1
        %v1741 = vsel %vm1731, %v1738, %v1740
        %v1742 = vrot.slane %v1620, 1
        %v1743 = vrot.slane %v1449, 1
        %v1744 = vsel %vm1731, %v1742, %v1743
        %v1745 = vrot.slane %v1653, 1
        %v1746 = vsel %vm1731, %v1743, %v1745
        %v1747 = vrot.slane %v1621, 1
        %v1748 = vrot.slane %v1452, 1
        %v1749 = vsel %vm1731, %v1747, %v1748
        %v1750 = vrot.slane %v1654, 1
        %v1751 = vsel %vm1731, %v1748, %v1750
        %v1752 = vrot.slane %v1622, 1
        %v1753 = vrot.slane %v1455, 1
        %v1754 = vsel %vm1731, %v1752, %v1753
        %v1755 = vrot.slane %v1655, 1
        %v1756 = vsel %vm1731, %v1753, %v1755
        %v1757 = vrot.slane %v1623, 1
        %v1758 = vrot.slane %v1458, 1
        %v1759 = vsel %vm1731, %v1757, %v1758
        %v1760 = vrot.slane %v1656, 1
        %v1761 = vsel %vm1731, %v1758, %v1760
        %v1762 = vrot.slane %v1624, 1
        %v1763 = vrot.slane %v1461, 1
        %v1764 = vsel %vm1731, %v1762, %v1763
        %v1765 = vrot.slane %v1657, 1
        %v1766 = vsel %vm1731, %v1763, %v1765
        %v1767 = vrot.slane %v1625, 1
        %v1768 = vrot.slane %v1464, 1
        %v1769 = vsel %vm1731, %v1767, %v1768
        %v1770 = vrot.slane %v1658, 1
        %v1771 = vsel %vm1731, %v1768, %v1770
        %v1772 = vrot.slane %v1626, 1
        %v1773 = vrot.slane %v1467, 1
        %v1774 = vsel %vm1731, %v1772, %v1773
        %v1775 = vrot.slane %v1659, 1
        %v1776 = vsel %vm1731, %v1773, %v1775
        %v1777 = vrot.slane %v1627, 1
        %v1778 = vrot.slane %v1470, 1
        %v1779 = vsel %vm1731, %v1777, %v1778
        %v1780 = vrot.slane %v1660, 1
        %v1781 = vsel %vm1731, %v1778, %v1780
        %v1782 = vrot.slane %v1628, 1
        %v1783 = vrot.slane %v1473, 1
        %v1784 = vsel %vm1731, %v1782, %v1783
        %v1785 = vrot.slane %v1661, 1
        %v1786 = vsel %vm1731, %v1783, %v1785
        %v1787 = vrot.slane %v1629, 1
        %v1788 = vrot.slane %v1476, 1
        %v1789 = vsel %vm1731, %v1787, %v1788
        %v1790 = vrot.slane %v1662, 1
        %v1791 = vsel %vm1731, %v1788, %v1790
        %v1792 = vrot.slane %v1630, 1
        %v1793 = vrot.slane %v1479, 1
        %v1794 = vsel %vm1731, %v1792, %v1793
        %v1795 = vrot.slane %v1663, 1
        %v1796 = vsel %vm1731, %v1793, %v1795
        %v1797 = vrot.slane %v1631, 1
        %v1798 = vrot.slane %v1482, 1
        %v1799 = vsel %vm1731, %v1797, %v1798
        %v1800 = vrot.slane %v1664, 1
        %v1801 = vsel %vm1731, %v1798, %v1800
        %v1802 = vrot.slane %v1632, 1
        %v1803 = vrot.slane %v1485, 1
        %v1804 = vsel %vm1731, %v1802, %v1803
        %v1805 = vrot.slane %v1665, 1
        %v1806 = vsel %vm1731, %v1803, %v1805
        %v1807 = vrot.slane %v1633, 1
        %v1808 = vrot.slane %v1488, 1
        %v1809 = vsel %vm1731, %v1807, %v1808
        %v1810 = vrot.slane %v1666, 1
        %v1811 = vsel %vm1731, %v1808, %v1810
        %v1844 = vmax.f32 %v1667, %v1734
        %v1845 = vmax.f32 %v1668, %v1736
        %v1846 = vmax.f32 %v1669, %v1739
        %v1847 = vmax.f32 %v1670, %v1741
        %v1848 = vmax.f32 %v1671, %v1744
        %v1849 = vmax.f32 %v1672, %v1746
        %v1850 = vmax.f32 %v1673, %v1749
        %v1851 = vmax.f32 %v1674, %v1751
        %v1852 = vmax.f32 %v1675, %v1754
        %v1853 = vmax.f32 %v1676, %v1756
        %v1854 = vmax.f32 %v1677, %v1759
        %v1855 = vmax.f32 %v1678, %v1761
        %v1856 = vmax.f32 %v1679, %v1764
        %v1857 = vmax.f32 %v1680, %v1766
        %v1858 = vmax.f32 %v1681, %v1769
        %v1859 = vmax.f32 %v1682, %v1771
        %v1860 = vmax.f32 %v1683, %v1774
        %v1861 = vmax.f32 %v1684, %v1776
        %v1862 = vmax.f32 %v1685, %v1779
        %v1863 = vmax.f32 %v1686, %v1781
        %v1864 = vmax.f32 %v1687, %v1784
        %v1865 = vmax.f32 %v1688, %v1786
        %v1866 = vmax.f32 %v1689, %v1789
        %v1867 = vmax.f32 %v1690, %v1791
        %v1868 = vmax.f32 %v1691, %v1794
        %v1869 = vmax.f32 %v1692, %v1796
        %v1870 = vmax.f32 %v1693, %v1799
        %v1871 = vmax.f32 %v1694, %v1801
        %v1872 = vmax.f32 %v1695, %v1804
        %v1873 = vmax.f32 %v1696, %v1806
        %v1874 = vmax.f32 %v1697, %v1809
        %v1875 = vmax.f32 %v1698, %v1811
        %vm1876 = vcmask 1044480
        %v1877 = vrot.slane %v1618, 3
        %v1878 = vrot.slane %v1443, 3
        %v1879 = vsel %vm1876, %v1877, %v1878
        %v1880 = vrot.slane %v1651, 3
        %v1881 = vsel %vm1876, %v1878, %v1880
        %v1882 = vrot.slane %v1619, 3
        %v1883 = vrot.slane %v1446, 3
        %v1884 = vsel %vm1876, %v1882, %v1883
        %v1885 = vrot.slane %v1652, 3
        %v1886 = vsel %vm1876, %v1883, %v1885
        %v1887 = vrot.slane %v1620, 3
        %v1888 = vrot.slane %v1449, 3
        %v1889 = vsel %vm1876, %v1887, %v1888
        %v1890 = vrot.slane %v1653, 3
        %v1891 = vsel %vm1876, %v1888, %v1890
        %v1892 = vrot.slane %v1621, 3
        %v1893 = vrot.slane %v1452, 3
        %v1894 = vsel %vm1876, %v1892, %v1893
        %v1895 = vrot.slane %v1654, 3
        %v1896 = vsel %vm1876, %v1893, %v1895
        %v1897 = vrot.slane %v1622, 3
        %v1898 = vrot.slane %v1455, 3
        %v1899 = vsel %vm1876, %v1897, %v1898
        %v1900 = vrot.slane %v1655, 3
        %v1901 = vsel %vm1876, %v1898, %v1900
        %v1902 = vrot.slane %v1623, 3
        %v1903 = vrot.slane %v1458, 3
        %v1904 = vsel %vm1876, %v1902, %v1903
        %v1905 = vrot.slane %v1656, 3
        %v1906 = vsel %vm1876, %v1903, %v1905
        %v1907 = vrot.slane %v1624, 3
        %v1908 = vrot.slane %v1461, 3
        %v1909 = vsel %vm1876, %v1907, %v1908
        %v1910 = vrot.slane %v1657, 3
        %v1911 = vsel %vm1876, %v1908, %v1910
        %v1912 = vrot.slane %v1625, 3
        %v1913 = vrot.slane %v1464, 3
        %v1914 = vsel %vm1876, %v1912, %v1913
        %v1915 = vrot.slane %v1658, 3
        %v1916 = vsel %vm1876, %v1913, %v1915
        %v1917 = vrot.slane %v1626, 3
        %v1918 = vrot.slane %v1467, 3
        %v1919 = vsel %vm1876, %v1917, %v1918
        %v1920 = vrot.slane %v1659, 3
        %v1921 = vsel %vm1876, %v1918, %v1920
        %v1922 = vrot.slane %v1627, 3
        %v1923 = vrot.slane %v1470, 3
        %v1924 = vsel %vm1876, %v1922, %v1923
        %v1925 = vrot.slane %v1660, 3
        %v1926 = vsel %vm1876, %v1923, %v1925
        %v1927 = vrot.slane %v1628, 3
        %v1928 = vrot.slane %v1473, 3
        %v1929 = vsel %vm1876, %v1927, %v1928
        %v1930 = vrot.slane %v1661, 3
        %v1931 = vsel %vm1876, %v1928, %v1930
        %v1932 = vrot.slane %v1629, 3
        %v1933 = vrot.slane %v1476, 3
        %v1934 = vsel %vm1876, %v1932, %v1933
        %v1935 = vrot.slane %v1662, 3
        %v1936 = vsel %vm1876, %v1933, %v1935
        %v1937 = vrot.slane %v1630, 3
        %v1938 = vrot.slane %v1479, 3
        %v1939 = vsel %vm1876, %v1937, %v1938
        %v1940 = vrot.slane %v1663, 3
        %v1941 = vsel %vm1876, %v1938, %v1940
        %v1942 = vrot.slane %v1631, 3
        %v1943 = vrot.slane %v1482, 3
        %v1944 = vsel %vm1876, %v1942, %v1943
        %v1945 = vrot.slane %v1664, 3
        %v1946 = vsel %vm1876, %v1943, %v1945
        %v1947 = vrot.slane %v1632, 3
        %v1948 = vrot.slane %v1485, 3
        %v1949 = vsel %vm1876, %v1947, %v1948
        %v1950 = vrot.slane %v1665, 3
        %v1951 = vsel %vm1876, %v1948, %v1950
        %v1952 = vrot.slane %v1633, 3
        %v1953 = vrot.slane %v1488, 3
        %v1954 = vsel %vm1876, %v1952, %v1953
        %v1955 = vrot.slane %v1666, 3
        %v1956 = vsel %vm1876, %v1953, %v1955
        %v1989 = vmax.f32 %v1844, %v1879
        %v1990 = vmax.f32 %v1845, %v1881
        %v1991 = vmax.f32 %v1846, %v1884
        %v1992 = vmax.f32 %v1847, %v1886
        %v1993 = vmax.f32 %v1848, %v1889
        %v1994 = vmax.f32 %v1849, %v1891
        %v1995 = vmax.f32 %v1850, %v1894
        %v1996 = vmax.f32 %v1851, %v1896
        %v1997 = vmax.f32 %v1852, %v1899
        %v1998 = vmax.f32 %v1853, %v1901
        %v1999 = vmax.f32 %v1854, %v1904
        %v2000 = vmax.f32 %v1855, %v1906
        %v2001 = vmax.f32 %v1856, %v1909
        %v2002 = vmax.f32 %v1857, %v1911
        %v2003 = vmax.f32 %v1858, %v1914
        %v2004 = vmax.f32 %v1859, %v1916
        %v2005 = vmax.f32 %v1860, %v1919
        %v2006 = vmax.f32 %v1861, %v1921
        %v2007 = vmax.f32 %v1862, %v1924
        %v2008 = vmax.f32 %v1863, %v1926
        %v2009 = vmax.f32 %v1864, %v1929
        %v2010 = vmax.f32 %v1865, %v1931
        %v2011 = vmax.f32 %v1866, %v1934
        %v2012 = vmax.f32 %v1867, %v1936
        %v2013 = vmax.f32 %v1868, %v1939
        %v2014 = vmax.f32 %v1869, %v1941
        %v2015 = vmax.f32 %v1870, %v1944
        %v2016 = vmax.f32 %v1871, %v1946
        %v2017 = vmax.f32 %v1872, %v1949
        %v2018 = vmax.f32 %v1873, %v1951
        %v2019 = vmax.f32 %v1874, %v1954
        %v2020 = vmax.f32 %v1875, %v1956
        %vm2021 = vcmask 1043456
        %v2022 = vrot.slane %v1618, 4
        %v2023 = vrot.slane %v1443, 4
        %v2024 = vsel %vm2021, %v2022, %v2023
        %v2025 = vrot.slane %v1651, 4
        %v2026 = vsel %vm2021, %v2023, %v2025
        %v2027 = vrot.slane %v1619, 4
        %v2028 = vrot.slane %v1446, 4
        %v2029 = vsel %vm2021, %v2027, %v2028
        %v2030 = vrot.slane %v1652, 4
        %v2031 = vsel %vm2021, %v2028, %v2030
        %v2032 = vrot.slane %v1620, 4
        %v2033 = vrot.slane %v1449, 4
        %v2034 = vsel %vm2021, %v2032, %v2033
        %v2035 = vrot.slane %v1653, 4
        %v2036 = vsel %vm2021, %v2033, %v2035
        %v2037 = vrot.slane %v1621, 4
        %v2038 = vrot.slane %v1452, 4
        %v2039 = vsel %vm2021, %v2037, %v2038
        %v2040 = vrot.slane %v1654, 4
        %v2041 = vsel %vm2021, %v2038, %v2040
        %v2042 = vrot.slane %v1622, 4
        %v2043 = vrot.slane %v1455, 4
        %v2044 = vsel %vm2021, %v2042, %v2043
        %v2045 = vrot.slane %v1655, 4
        %v2046 = vsel %vm2021, %v2043, %v2045
        %v2047 = vrot.slane %v1623, 4
        %v2048 = vrot.slane %v1458, 4
        %v2049 = vsel %vm2021, %v2047, %v2048
        %v2050 = vrot.slane %v1656, 4
        %v2051 = vsel %vm2021, %v2048, %v2050
        %v2052 = vrot.slane %v1624, 4
        %v2053 = vrot.slane %v1461, 4
        %v2054 = vsel %vm2021, %v2052, %v2053
        %v2055 = vrot.slane %v1657, 4
        %v2056 = vsel %vm2021, %v2053, %v2055
        %v2057 = vrot.slane %v1625, 4
        %v2058 = vrot.slane %v1464, 4
        %v2059 = vsel %vm2021, %v2057, %v2058
        %v2060 = vrot.slane %v1658, 4
        %v2061 = vsel %vm2021, %v2058, %v2060
        %v2062 = vrot.slane %v1626, 4
        %v2063 = vrot.slane %v1467, 4
        %v2064 = vsel %vm2021, %v2062, %v2063
        %v2065 = vrot.slane %v1659, 4
        %v2066 = vsel %vm2021, %v2063, %v2065
        %v2067 = vrot.slane %v1627, 4
        %v2068 = vrot.slane %v1470, 4
        %v2069 = vsel %vm2021, %v2067, %v2068
        %v2070 = vrot.slane %v1660, 4
        %v2071 = vsel %vm2021, %v2068, %v2070
        %v2072 = vrot.slane %v1628, 4
        %v2073 = vrot.slane %v1473, 4
        %v2074 = vsel %vm2021, %v2072, %v2073
        %v2075 = vrot.slane %v1661, 4
        %v2076 = vsel %vm2021, %v2073, %v2075
        %v2077 = vrot.slane %v1629, 4
        %v2078 = vrot.slane %v1476, 4
        %v2079 = vsel %vm2021, %v2077, %v2078
        %v2080 = vrot.slane %v1662, 4
        %v2081 = vsel %vm2021, %v2078, %v2080
        %v2082 = vrot.slane %v1630, 4
        %v2083 = vrot.slane %v1479, 4
        %v2084 = vsel %vm2021, %v2082, %v2083
        %v2085 = vrot.slane %v1663, 4
        %v2086 = vsel %vm2021, %v2083, %v2085
        %v2087 = vrot.slane %v1631, 4
        %v2088 = vrot.slane %v1482, 4
        %v2089 = vsel %vm2021, %v2087, %v2088
        %v2090 = vrot.slane %v1664, 4
        %v2091 = vsel %vm2021, %v2088, %v2090
        %v2092 = vrot.slane %v1632, 4
        %v2093 = vrot.slane %v1485, 4
        %v2094 = vsel %vm2021, %v2092, %v2093
        %v2095 = vrot.slane %v1665, 4
        %v2096 = vsel %vm2021, %v2093, %v2095
        %v2097 = vrot.slane %v1633, 4
        %v2098 = vrot.slane %v1488, 4
        %v2099 = vsel %vm2021, %v2097, %v2098
        %v2100 = vrot.slane %v1666, 4
        %v2101 = vsel %vm2021, %v2098, %v2100
        %v2134 = vmax.f32 %v1989, %v2024
        %v2135 = vmax.f32 %v1990, %v2026
        %v2136 = vmax.f32 %v1991, %v2029
        %v2137 = vmax.f32 %v1992, %v2031
        %v2138 = vmax.f32 %v1993, %v2034
        %v2139 = vmax.f32 %v1994, %v2036
        %v2140 = vmax.f32 %v1995, %v2039
        %v2141 = vmax.f32 %v1996, %v2041
        %v2142 = vmax.f32 %v1997, %v2044
        %v2143 = vmax.f32 %v1998, %v2046
        %v2144 = vmax.f32 %v1999, %v2049
        %v2145 = vmax.f32 %v2000, %v2051
        %v2146 = vmax.f32 %v2001, %v2054
        %v2147 = vmax.f32 %v2002, %v2056
        %v2148 = vmax.f32 %v2003, %v2059
        %v2149 = vmax.f32 %v2004, %v2061
        %v2150 = vmax.f32 %v2005, %v2064
        %v2151 = vmax.f32 %v2006, %v2066
        %v2152 = vmax.f32 %v2007, %v2069
        %v2153 = vmax.f32 %v2008, %v2071
        %v2154 = vmax.f32 %v2009, %v2074
        %v2155 = vmax.f32 %v2010, %v2076
        %v2156 = vmax.f32 %v2011, %v2079
        %v2157 = vmax.f32 %v2012, %v2081
        %v2158 = vmax.f32 %v2013, %v2084
        %v2159 = vmax.f32 %v2014, %v2086
        %v2160 = vmax.f32 %v2015, %v2089
        %v2161 = vmax.f32 %v2016, %v2091
        %v2162 = vmax.f32 %v2017, %v2094
        %v2163 = vmax.f32 %v2018, %v2096
        %v2164 = vmax.f32 %v2019, %v2099
        %v2165 = vmax.f32 %v2020, %v2101
        %v2166 = vpack.c.bf16 %v2135, %v2134
        %v2167 = vpack.c.bf16 %v2137, %v2136
        %v2168 = vpack.c.bf16 %v2139, %v2138
        %v2169 = vpack.c.bf16 %v2141, %v2140
        %v2170 = vpack.c.bf16 %v2143, %v2142
        %v2171 = vpack.c.bf16 %v2145, %v2144
        %v2172 = vpack.c.bf16 %v2147, %v2146
        %v2173 = vpack.c.bf16 %v2149, %v2148
        %v2174 = vpack.c.bf16 %v2151, %v2150
        %v2175 = vpack.c.bf16 %v2153, %v2152
        %v2176 = vpack.c.bf16 %v2155, %v2154
        %v2177 = vpack.c.bf16 %v2157, %v2156
        %v2178 = vpack.c.bf16 %v2159, %v2158
        %v2179 = vpack.c.bf16 %v2161, %v2160
        %v2180 = vpack.c.bf16 %v2163, %v2162
        %v2181 = vpack.c.bf16 %v2165, %v2164
        %s2182 = scalar_lea.vmem %s5, 4
        %v2183 = vld [vmem:[%s2182] sm:$0xf]
        %v2185 = vsel %vm646, %v2166, 0
        %v2188 = vsel %vm646, %v2167, 0
        %v2191 = vsel %vm646, %v2168, 0
        %v2194 = vsel %vm646, %v2169, 0
        %v2197 = vsel %vm646, %v2170, 0
        %v2200 = vsel %vm646, %v2171, 0
        %v2203 = vsel %vm646, %v2172, 0
        %v2206 = vsel %vm646, %v2173, 0
        %v2209 = vsel %vm646, %v2174, 0
        %v2212 = vsel %vm646, %v2175, 0
        %v2215 = vsel %vm646, %v2176, 0
        %v2218 = vsel %vm646, %v2177, 0
        %v2221 = vsel %vm646, %v2178, 0
        %v2224 = vsel %vm646, %v2179, 0
        %v2227 = vsel %vm646, %v2180, 0
        %v2230 = vsel %vm646, %v2181, 0
        %v2233 = vsel %vm2021, %v2183, 0
        %2235 = vmatprep.subr.bf16.mxu0 0
        %2236 = vmatpush1.bf16.msra.mxu0 %v2233
        %2237 = vmatprep.subr.bf16.mxu0 0
        %2238 = vmatpush1.bf16.msra.mxu0 0
        %2239 = vmatprep.subr.bf16.mxu0 0
        %2240 = vmatpush1.bf16.msra.mxu0 0
        %2241 = vmatprep.subr.bf16.mxu0 0
        %2242 = vmatpush1.bf16.msra.mxu0 0
        %2243 = vmatprep.subr.bf16.mxu0 0
        %2244 = vmatpush1.bf16.msra.mxu0 0
        %2245 = vmatprep.subr.bf16.mxu0 0
        %2246 = vmatpush1.bf16.msra.mxu0 0
        %2247 = vmatprep.subr.bf16.mxu0 0
        %2248 = vmatpush1.bf16.msra.mxu0 0
        %2249 = vmatprep.subr.bf16.mxu0 0
        %2250 = vmatpush1.bf16.msra.mxu0 0
        %2251 = vmatprep.subr.bf16.mxu0 0
        %2252 = vmatpush1.bf16.msra.mxu0 0
        %2253 = vmatprep.subr.bf16.mxu0 0
        %2254 = vmatpush1.bf16.msra.mxu0 0
        %2255 = vmatprep.subr.bf16.mxu0 0
        %2256 = vmatpush1.bf16.msra.mxu0 0
        %2257 = vmatprep.subr.bf16.mxu0 0
        %2258 = vmatpush1.bf16.msra.mxu0 0
        %2259 = vmatprep.subr.bf16.mxu0 0
        %2260 = vmatpush1.bf16.msra.mxu0 0
        %2261 = vmatprep.subr.bf16.mxu0 0
        %2262 = vmatpush1.bf16.msra.mxu0 0
        %2263 = vmatprep.subr.bf16.mxu0 0
        %2264 = vmatpush1.bf16.msra.mxu0 0
        %2265 = vmatprep.subr.bf16.mxu0 0
        %2266 = vmatpush1.bf16.msra.mxu0 0
        %2267 = vmatprep.mubr.bf16.mxu0 0
        %2268 = vmatmul.mubr.bf16.gmra.mrb[0].mxu0 %v2185
        %v2269 = vpop.f32.mrb[0].mxu0
        %v2270 = vadd.f32 0.0, %v2269
        %v2271 = vpop.f32.mrb[0].mxu0
        %v2272 = vpop.f32.mrb[0].mxu0
        %v2273 = vadd.f32 0.0, %v2272
        %v2274 = vpop.f32.mrb[0].mxu0
        %2275 = vmatprep.mubr.bf16.mxu0 0
        %2276 = vmatmul.mubr.bf16.gmra.mrb[0].mxu0 %v2188
        %v2277 = vpop.f32.mrb[0].mxu0
        %v2278 = vadd.f32 0.0, %v2277
        %v2279 = vpop.f32.mrb[0].mxu0
        %v2280 = vpop.f32.mrb[0].mxu0
        %v2281 = vadd.f32 0.0, %v2280
        %v2282 = vpop.f32.mrb[0].mxu0
        %2283 = vmatprep.mubr.bf16.mxu0 0
        %2284 = vmatmul.mubr.bf16.gmra.mrb[0].mxu0 %v2191
        %v2285 = vpop.f32.mrb[0].mxu0
        %v2286 = vadd.f32 0.0, %v2285
        %v2287 = vpop.f32.mrb[0].mxu0
        %v2288 = vpop.f32.mrb[0].mxu0
        %v2289 = vadd.f32 0.0, %v2288
        %v2290 = vpop.f32.mrb[0].mxu0
        %2291 = vmatprep.mubr.bf16.mxu0 0
        %2292 = vmatmul.mubr.bf16.gmra.mrb[0].mxu0 %v2194
        %v2293 = vpop.f32.mrb[0].mxu0
        %v2294 = vadd.f32 0.0, %v2293
        %v2295 = vpop.f32.mrb[0].mxu0
        %v2296 = vpop.f32.mrb[0].mxu0
        %v2297 = vadd.f32 0.0, %v2296
        %v2298 = vpop.f32.mrb[0].mxu0
        %2299 = vmatprep.mubr.bf16.mxu0 0
        %2300 = vmatmul.mubr.bf16.gmra.mrb[0].mxu0 %v2197
        %v2301 = vpop.f32.mrb[0].mxu0
        %v2302 = vadd.f32 0.0, %v2301
        %v2303 = vpop.f32.mrb[0].mxu0
        %v2304 = vpop.f32.mrb[0].mxu0
        %v2305 = vadd.f32 0.0, %v2304
        %v2306 = vpop.f32.mrb[0].mxu0
        %2307 = vmatprep.mubr.bf16.mxu0 0
        %2308 = vmatmul.mubr.bf16.gmra.mrb[0].mxu0 %v2200
        %v2309 = vpop.f32.mrb[0].mxu0
        %v2310 = vadd.f32 0.0, %v2309
        %v2311 = vpop.f32.mrb[0].mxu0
        %v2312 = vpop.f32.mrb[0].mxu0
        %v2313 = vadd.f32 0.0, %v2312
        %v2314 = vpop.f32.mrb[0].mxu0
        %2315 = vmatprep.mubr.bf16.mxu0 0
        %2316 = vmatmul.mubr.bf16.gmra.mrb[0].mxu0 %v2203
        %v2317 = vpop.f32.mrb[0].mxu0
        %v2318 = vadd.f32 0.0, %v2317
        %v2319 = vpop.f32.mrb[0].mxu0
        %v2320 = vpop.f32.mrb[0].mxu0
        %v2321 = vadd.f32 0.0, %v2320
        %v2322 = vpop.f32.mrb[0].mxu0
        %2323 = vmatprep.mubr.bf16.mxu0 0
        %2324 = vmatmul.mubr.bf16.gmra.mrb[0].mxu0 %v2206
        %v2325 = vpop.f32.mrb[0].mxu0
        %v2326 = vadd.f32 0.0, %v2325
        %v2327 = vpop.f32.mrb[0].mxu0
        %v2328 = vpop.f32.mrb[0].mxu0
        %v2329 = vadd.f32 0.0, %v2328
        %v2330 = vpop.f32.mrb[0].mxu0
        %2331 = vmatprep.mubr.bf16.mxu0 0
        %2332 = vmatmul.mubr.bf16.gmra.mrb[0].mxu0 %v2209
        %v2333 = vpop.f32.mrb[0].mxu0
        %v2334 = vadd.f32 0.0, %v2333
        %v2335 = vpop.f32.mrb[0].mxu0
        %v2336 = vpop.f32.mrb[0].mxu0
        %v2337 = vadd.f32 0.0, %v2336
        %v2338 = vpop.f32.mrb[0].mxu0
        %2339 = vmatprep.mubr.bf16.mxu0 0
        %2340 = vmatmul.mubr.bf16.gmra.mrb[0].mxu0 %v2212
        %v2341 = vpop.f32.mrb[0].mxu0
        %v2342 = vadd.f32 0.0, %v2341
        %v2343 = vpop.f32.mrb[0].mxu0
        %v2344 = vpop.f32.mrb[0].mxu0
        %v2345 = vadd.f32 0.0, %v2344
        %v2346 = vpop.f32.mrb[0].mxu0
        %2347 = vmatprep.mubr.bf16.mxu0 0
        %2348 = vmatmul.mubr.bf16.gmra.mrb[0].mxu0 %v2215
        %v2349 = vpop.f32.mrb[0].mxu0
        %v2350 = vadd.f32 0.0, %v2349
        %v2351 = vpop.f32.mrb[0].mxu0
        %v2352 = vpop.f32.mrb[0].mxu0
        %v2353 = vadd.f32 0.0, %v2352
        %v2354 = vpop.f32.mrb[0].mxu0
        %2355 = vmatprep.mubr.bf16.mxu0 0
        %2356 = vmatmul.mubr.bf16.gmra.mrb[0].mxu0 %v2218
        %v2357 = vpop.f32.mrb[0].mxu0
        %v2358 = vadd.f32 0.0, %v2357
        %v2359 = vpop.f32.mrb[0].mxu0
        %v2360 = vpop.f32.mrb[0].mxu0
        %v2361 = vadd.f32 0.0, %v2360
        %v2362 = vpop.f32.mrb[0].mxu0
        %2363 = vmatprep.mubr.bf16.mxu0 0
        %2364 = vmatmul.mubr.bf16.gmra.mrb[0].mxu0 %v2221
        %v2365 = vpop.f32.mrb[0].mxu0
        %v2366 = vadd.f32 0.0, %v2365
        %v2367 = vpop.f32.mrb[0].mxu0
        %v2368 = vpop.f32.mrb[0].mxu0
        %v2369 = vadd.f32 0.0, %v2368
        %v2370 = vpop.f32.mrb[0].mxu0
        %2371 = vmatprep.mubr.bf16.mxu0 0
        %2372 = vmatmul.mubr.bf16.gmra.mrb[0].mxu0 %v2224
        %v2373 = vpop.f32.mrb[0].mxu0
        %v2374 = vadd.f32 0.0, %v2373
        %v2375 = vpop.f32.mrb[0].mxu0
        %v2376 = vpop.f32.mrb[0].mxu0
        %v2377 = vadd.f32 0.0, %v2376
        %v2378 = vpop.f32.mrb[0].mxu0
        %2379 = vmatprep.mubr.bf16.mxu0 0
        %2380 = vmatmul.mubr.bf16.gmra.mrb[0].mxu0 %v2227
        %v2381 = vpop.f32.mrb[0].mxu0
        %v2382 = vadd.f32 0.0, %v2381
        %v2383 = vpop.f32.mrb[0].mxu0
        %v2384 = vpop.f32.mrb[0].mxu0
        %v2385 = vadd.f32 0.0, %v2384
        %v2386 = vpop.f32.mrb[0].mxu0
        %2387 = vmatprep.mubr.bf16.mxu0 0
        %2388 = vmatmul.mubr.bf16.gmra.mrb[0].mxu0 %v2230
        %v2389 = vpop.f32.mrb[0].mxu0
        %v2390 = vadd.f32 0.0, %v2389
        %v2391 = vpop.f32.mrb[0].mxu0
        %v2392 = vpop.f32.mrb[0].mxu0
        %v2393 = vadd.f32 0.0, %v2392
        %v2394 = vpop.f32.mrb[0].mxu0
        %2395 = vdwg.mxu0
        %v2397 = vsel %vm646, %v1237, 0
        %v2400 = vsel %vm646, %v1238, 0
        %v2403 = vsel %vm646, %v1239, 0
        %v2406 = vsel %vm646, %v1240, 0
        %v2409 = vsel %vm646, %v1241, 0
        %v2412 = vsel %vm646, %v1242, 0
        %v2415 = vsel %vm646, %v1243, 0
        %v2418 = vsel %vm646, %v1244, 0
        %v2421 = vsel %vm646, %v1245, 0
        %v2424 = vsel %vm646, %v1246, 0
        %v2427 = vsel %vm646, %v1247, 0
        %v2430 = vsel %vm646, %v1248, 0
        %v2433 = vsel %vm646, %v1249, 0
        %v2436 = vsel %vm646, %v1250, 0
        %v2439 = vsel %vm646, %v1251, 0
        %v2442 = vsel %vm646, %v1252, 0
        %v2445 = vsel %vm2021, %v1253, 0
        %2447 = vmatprep.subr.bf16.mxu0 0
        %2448 = vmatpush1.bf16.msra.mxu0 %v2445
        %2449 = vmatprep.subr.bf16.mxu0 0
        %2450 = vmatpush1.bf16.msra.mxu0 0
        %2451 = vmatprep.subr.bf16.mxu0 0
        %2452 = vmatpush1.bf16.msra.mxu0 0
        %2453 = vmatprep.subr.bf16.mxu0 0
        %2454 = vmatpush1.bf16.msra.mxu0 0
        %2455 = vmatprep.subr.bf16.mxu0 0
        %2456 = vmatpush1.bf16.msra.mxu0 0
        %2457 = vmatprep.subr.bf16.mxu0 0
        %2458 = vmatpush1.bf16.msra.mxu0 0
        %2459 = vmatprep.subr.bf16.mxu0 0
        %2460 = vmatpush1.bf16.msra.mxu0 0
        %2461 = vmatprep.subr.bf16.mxu0 0
        %2462 = vmatpush1.bf16.msra.mxu0 0
        %2463 = vmatprep.subr.bf16.mxu0 0
        %2464 = vmatpush1.bf16.msra.mxu0 0
        %2465 = vmatprep.subr.bf16.mxu0 0
        %2466 = vmatpush1.bf16.msra.mxu0 0
        %2467 = vmatprep.subr.bf16.mxu0 0
        %2468 = vmatpush1.bf16.msra.mxu0 0
        %2469 = vmatprep.subr.bf16.mxu0 0
        %2470 = vmatpush1.bf16.msra.mxu0 0
        %2471 = vmatprep.subr.bf16.mxu0 0
        %2472 = vmatpush1.bf16.msra.mxu0 0
        %2473 = vmatprep.subr.bf16.mxu0 0
        %2474 = vmatpush1.bf16.msra.mxu0 0
        %2475 = vmatprep.subr.bf16.mxu0 0
        %2476 = vmatpush1.bf16.msra.mxu0 0
        %2477 = vmatprep.subr.bf16.mxu0 0
        %2478 = vmatpush1.bf16.msra.mxu0 0
        %2479 = vmatprep.mubr.bf16.mxu0 0
        %2480 = vmatmul.mubr.bf16.gmra.mrb[0].mxu0 %v2397
        %v2481 = vpop.f32.mrb[0].mxu0
        %v2482 = vadd.f32 %v2270, %v2481
        %v2483 = vpop.f32.mrb[0].mxu0
        %v2484 = vpop.f32.mrb[0].mxu0
        %v2485 = vadd.f32 %v2273, %v2484
        %v2486 = vpop.f32.mrb[0].mxu0
        %2487 = vmatprep.mubr.bf16.mxu0 0
        %2488 = vmatmul.mubr.bf16.gmra.mrb[0].mxu0 %v2400
        %v2489 = vpop.f32.mrb[0].mxu0
        %v2490 = vadd.f32 %v2278, %v2489
        %v2491 = vpop.f32.mrb[0].mxu0
        %v2492 = vpop.f32.mrb[0].mxu0
        %v2493 = vadd.f32 %v2281, %v2492
        %v2494 = vpop.f32.mrb[0].mxu0
        %2495 = vmatprep.mubr.bf16.mxu0 0
        %2496 = vmatmul.mubr.bf16.gmra.mrb[0].mxu0 %v2403
        %v2497 = vpop.f32.mrb[0].mxu0
        %v2498 = vadd.f32 %v2286, %v2497
        %v2499 = vpop.f32.mrb[0].mxu0
        %v2500 = vpop.f32.mrb[0].mxu0
        %v2501 = vadd.f32 %v2289, %v2500
        %v2502 = vpop.f32.mrb[0].mxu0
        %2503 = vmatprep.mubr.bf16.mxu0 0
        %2504 = vmatmul.mubr.bf16.gmra.mrb[0].mxu0 %v2406
        %v2505 = vpop.f32.mrb[0].mxu0
        %v2506 = vadd.f32 %v2294, %v2505
        %v2507 = vpop.f32.mrb[0].mxu0
        %v2508 = vpop.f32.mrb[0].mxu0
        %v2509 = vadd.f32 %v2297, %v2508
        %v2510 = vpop.f32.mrb[0].mxu0
        %2511 = vmatprep.mubr.bf16.mxu0 0
        %2512 = vmatmul.mubr.bf16.gmra.mrb[0].mxu0 %v2409
        %v2513 = vpop.f32.mrb[0].mxu0
        %v2514 = vadd.f32 %v2302, %v2513
        %v2515 = vpop.f32.mrb[0].mxu0
        %v2516 = vpop.f32.mrb[0].mxu0
        %v2517 = vadd.f32 %v2305, %v2516
        %v2518 = vpop.f32.mrb[0].mxu0
        %2519 = vmatprep.mubr.bf16.mxu0 0
        %2520 = vmatmul.mubr.bf16.gmra.mrb[0].mxu0 %v2412
        %v2521 = vpop.f32.mrb[0].mxu0
        %v2522 = vadd.f32 %v2310, %v2521
        %v2523 = vpop.f32.mrb[0].mxu0
        %v2524 = vpop.f32.mrb[0].mxu0
        %v2525 = vadd.f32 %v2313, %v2524
        %v2526 = vpop.f32.mrb[0].mxu0
        %2527 = vmatprep.mubr.bf16.mxu0 0
        %2528 = vmatmul.mubr.bf16.gmra.mrb[0].mxu0 %v2415
        %v2529 = vpop.f32.mrb[0].mxu0
        %v2530 = vadd.f32 %v2318, %v2529
        %v2531 = vpop.f32.mrb[0].mxu0
        %v2532 = vpop.f32.mrb[0].mxu0
        %v2533 = vadd.f32 %v2321, %v2532
        %v2534 = vpop.f32.mrb[0].mxu0
        %2535 = vmatprep.mubr.bf16.mxu0 0
        %2536 = vmatmul.mubr.bf16.gmra.mrb[0].mxu0 %v2418
        %v2537 = vpop.f32.mrb[0].mxu0
        %v2538 = vadd.f32 %v2326, %v2537
        %v2539 = vpop.f32.mrb[0].mxu0
        %v2540 = vpop.f32.mrb[0].mxu0
        %v2541 = vadd.f32 %v2329, %v2540
        %v2542 = vpop.f32.mrb[0].mxu0
        %2543 = vmatprep.mubr.bf16.mxu0 0
        %2544 = vmatmul.mubr.bf16.gmra.mrb[0].mxu0 %v2421
        %v2545 = vpop.f32.mrb[0].mxu0
        %v2546 = vadd.f32 %v2334, %v2545
        %v2547 = vpop.f32.mrb[0].mxu0
        %v2548 = vpop.f32.mrb[0].mxu0
        %v2549 = vadd.f32 %v2337, %v2548
        %v2550 = vpop.f32.mrb[0].mxu0
        %2551 = vmatprep.mubr.bf16.mxu0 0
        %2552 = vmatmul.mubr.bf16.gmra.mrb[0].mxu0 %v2424
        %v2553 = vpop.f32.mrb[0].mxu0
        %v2554 = vadd.f32 %v2342, %v2553
        %v2555 = vpop.f32.mrb[0].mxu0
        %v2556 = vpop.f32.mrb[0].mxu0
        %v2557 = vadd.f32 %v2345, %v2556
        %v2558 = vpop.f32.mrb[0].mxu0
        %2559 = vmatprep.mubr.bf16.mxu0 0
        %2560 = vmatmul.mubr.bf16.gmra.mrb[0].mxu0 %v2427
        %v2561 = vpop.f32.mrb[0].mxu0
        %v2562 = vadd.f32 %v2350, %v2561
        %v2563 = vpop.f32.mrb[0].mxu0
        %v2564 = vpop.f32.mrb[0].mxu0
        %v2565 = vadd.f32 %v2353, %v2564
        %v2566 = vpop.f32.mrb[0].mxu0
        %2567 = vmatprep.mubr.bf16.mxu0 0
        %2568 = vmatmul.mubr.bf16.gmra.mrb[0].mxu0 %v2430
        %v2569 = vpop.f32.mrb[0].mxu0
        %v2570 = vadd.f32 %v2358, %v2569
        %v2571 = vpop.f32.mrb[0].mxu0
        %v2572 = vpop.f32.mrb[0].mxu0
        %v2573 = vadd.f32 %v2361, %v2572
        %v2574 = vpop.f32.mrb[0].mxu0
        %2575 = vmatprep.mubr.bf16.mxu0 0
        %2576 = vmatmul.mubr.bf16.gmra.mrb[0].mxu0 %v2433
        %v2577 = vpop.f32.mrb[0].mxu0
        %v2578 = vadd.f32 %v2366, %v2577
        %v2579 = vpop.f32.mrb[0].mxu0
        %v2580 = vpop.f32.mrb[0].mxu0
        %v2581 = vadd.f32 %v2369, %v2580
        %v2582 = vpop.f32.mrb[0].mxu0
        %2583 = vmatprep.mubr.bf16.mxu0 0
        %2584 = vmatmul.mubr.bf16.gmra.mrb[0].mxu0 %v2436
        %v2585 = vpop.f32.mrb[0].mxu0
        %v2586 = vadd.f32 %v2374, %v2585
        %v2587 = vpop.f32.mrb[0].mxu0
        %v2588 = vpop.f32.mrb[0].mxu0
        %v2589 = vadd.f32 %v2377, %v2588
        %v2590 = vpop.f32.mrb[0].mxu0
        %2591 = vmatprep.mubr.bf16.mxu0 0
        %2592 = vmatmul.mubr.bf16.gmra.mrb[0].mxu0 %v2439
        %v2593 = vpop.f32.mrb[0].mxu0
        %v2594 = vadd.f32 %v2382, %v2593
        %v2595 = vpop.f32.mrb[0].mxu0
        %v2596 = vpop.f32.mrb[0].mxu0
        %v2597 = vadd.f32 %v2385, %v2596
        %v2598 = vpop.f32.mrb[0].mxu0
        %2599 = vmatprep.mubr.bf16.mxu0 0
        %2600 = vmatmul.mubr.bf16.gmra.mrb[0].mxu0 %v2442
        %v2601 = vpop.f32.mrb[0].mxu0
        %v2602 = vadd.f32 %v2390, %v2601
        %v2603 = vpop.f32.mrb[0].mxu0
        %v2604 = vpop.f32.mrb[0].mxu0
        %v2605 = vadd.f32 %v2393, %v2604
        %v2606 = vpop.f32.mrb[0].mxu0
        %2607 = vdwg.mxu0
        %v2608 = vmax.f32 %v2136, %v2134
        %v2609 = vmax.f32 %v2137, %v2135
        %v2610 = vmax.f32 %v2138, %v2134
        %v2611 = vmax.f32 %v2139, %v2135
        %v2612 = vmax.f32 %v2140, %v2136
        %v2613 = vmax.f32 %v2141, %v2137
        %v2614 = vmax.f32 %v2142, %v2138
        %v2615 = vmax.f32 %v2143, %v2139
        %v2616 = vmax.f32 %v2144, %v2140
        %v2617 = vmax.f32 %v2145, %v2141
        %v2618 = vmax.f32 %v2146, %v2142
        %v2619 = vmax.f32 %v2147, %v2143
        %v2620 = vmax.f32 %v2148, %v2144
        %v2621 = vmax.f32 %v2149, %v2145
        %v2622 = vmax.f32 %v2150, %v2146
        %v2623 = vmax.f32 %v2151, %v2147
        %v2624 = vmax.f32 %v2152, %v2148
        %v2625 = vmax.f32 %v2153, %v2149
        %v2626 = vmax.f32 %v2154, %v2150
        %v2627 = vmax.f32 %v2155, %v2151
        %v2628 = vmax.f32 %v2156, %v2152
        %v2629 = vmax.f32 %v2157, %v2153
        %v2630 = vmax.f32 %v2158, %v2154
        %v2631 = vmax.f32 %v2159, %v2155
        %v2632 = vmax.f32 %v2160, %v2156
        %v2633 = vmax.f32 %v2161, %v2157
        %v2634 = vmax.f32 %v2162, %v2158
        %v2635 = vmax.f32 %v2163, %v2159
        %v2636 = vmax.f32 %v2164, %v2160
        %v2637 = vmax.f32 %v2165, %v2161
        %v2638 = vmax.f32 %v2608, %v2134
        %v2639 = vmax.f32 %v2609, %v2135
        %v2640 = vmax.f32 %v2610, %v2136
        %v2641 = vmax.f32 %v2611, %v2137
        %v2642 = vmax.f32 %v2612, %v2138
        %v2643 = vmax.f32 %v2613, %v2139
        %v2644 = vmax.f32 %v2614, %v2140
        %v2645 = vmax.f32 %v2615, %v2141
        %v2646 = vmax.f32 %v2616, %v2142
        %v2647 = vmax.f32 %v2617, %v2143
        %v2648 = vmax.f32 %v2618, %v2144
        %v2649 = vmax.f32 %v2619, %v2145
        %v2650 = vmax.f32 %v2620, %v2146
        %v2651 = vmax.f32 %v2621, %v2147
        %v2652 = vmax.f32 %v2622, %v2148
        %v2653 = vmax.f32 %v2623, %v2149
        %v2654 = vmax.f32 %v2624, %v2150
        %v2655 = vmax.f32 %v2625, %v2151
        %v2656 = vmax.f32 %v2626, %v2152
        %v2657 = vmax.f32 %v2627, %v2153
        %v2658 = vmax.f32 %v2628, %v2154
        %v2659 = vmax.f32 %v2629, %v2155
        %v2660 = vmax.f32 %v2630, %v2156
        %v2661 = vmax.f32 %v2631, %v2157
        %v2662 = vmax.f32 %v2632, %v2158
        %v2663 = vmax.f32 %v2633, %v2159
        %v2664 = vmax.f32 %v2634, %v2160
        %v2665 = vmax.f32 %v2635, %v2161
        %v2666 = vmax.f32 %v2636, %v2162
        %v2667 = vmax.f32 %v2637, %v2163
        %v2668 = vmax.f32 %v2638, %v2138
        %v2669 = vmax.f32 %v2639, %v2139
        %v2670 = vmax.f32 %v2640, %v2140
        %v2671 = vmax.f32 %v2641, %v2141
        %v2672 = vmax.f32 %v2642, %v2142
        %v2673 = vmax.f32 %v2643, %v2143
        %v2674 = vmax.f32 %v2644, %v2144
        %v2675 = vmax.f32 %v2645, %v2145
        %v2676 = vmax.f32 %v2646, %v2146
        %v2677 = vmax.f32 %v2647, %v2147
        %v2678 = vmax.f32 %v2648, %v2148
        %v2679 = vmax.f32 %v2649, %v2149
        %v2680 = vmax.f32 %v2650, %v2150
        %v2681 = vmax.f32 %v2651, %v2151
        %v2682 = vmax.f32 %v2652, %v2152
        %v2683 = vmax.f32 %v2653, %v2153
        %v2684 = vmax.f32 %v2654, %v2154
        %v2685 = vmax.f32 %v2655, %v2155
        %v2686 = vmax.f32 %v2656, %v2156
        %v2687 = vmax.f32 %v2657, %v2157
        %v2688 = vmax.f32 %v2658, %v2158
        %v2689 = vmax.f32 %v2659, %v2159
        %v2690 = vmax.f32 %v2660, %v2160
        %v2691 = vmax.f32 %v2661, %v2161
        %v2692 = vmax.f32 %v2662, %v2162
        %v2693 = vmax.f32 %v2663, %v2163
        %v2694 = vmax.f32 %v2664, %v2164
        %v2695 = vmax.f32 %v2665, %v2165
        %v2696 = vmax.f32 %v2666, %v2164
        %v2697 = vmax.f32 %v2667, %v2165
        %v2698 = vmax.f32 %v2608, %v2138
        %v2699 = vmax.f32 %v2609, %v2139
        %v2700 = vmax.f32 %v2668, %v2140
        %v2701 = vmax.f32 %v2669, %v2141
        %v2702 = vmax.f32 %v2670, %v2142
        %v2703 = vmax.f32 %v2671, %v2143
        %v2704 = vmax.f32 %v2672, %v2144
        %v2705 = vmax.f32 %v2673, %v2145
        %v2706 = vmax.f32 %v2674, %v2146
        %v2707 = vmax.f32 %v2675, %v2147
        %v2708 = vmax.f32 %v2676, %v2148
        %v2709 = vmax.f32 %v2677, %v2149
        %v2710 = vmax.f32 %v2678, %v2150
        %v2711 = vmax.f32 %v2679, %v2151
        %v2712 = vmax.f32 %v2680, %v2152
        %v2713 = vmax.f32 %v2681, %v2153
        %v2714 = vmax.f32 %v2682, %v2154
        %v2715 = vmax.f32 %v2683, %v2155
        %v2716 = vmax.f32 %v2684, %v2156
        %v2717 = vmax.f32 %v2685, %v2157
        %v2718 = vmax.f32 %v2686, %v2158
        %v2719 = vmax.f32 %v2687, %v2159
        %v2720 = vmax.f32 %v2688, %v2160
        %v2721 = vmax.f32 %v2689, %v2161
        %v2722 = vmax.f32 %v2690, %v2162
        %v2723 = vmax.f32 %v2691, %v2163
        %v2724 = vmax.f32 %v2692, %v2164
        %v2725 = vmax.f32 %v2693, %v2165
        %v2726 = vmax.f32 %v2694, %v2164
        %v2727 = vmax.f32 %v2695, %v2165
        %v2728 = vmax.f32 %v2696, %v2164
        %v2729 = vmax.f32 %v2697, %v2165
        %v2746 = vrot.slane %v2698, 7
        %v2747 = vrot.slane %v2700, 7
        %v2748 = vrot.slane %v2702, 7
        %v2749 = vrot.slane %v2704, 7
        %v2750 = vrot.slane %v2706, 7
        %v2751 = vrot.slane %v2708, 7
        %v2752 = vrot.slane %v2710, 7
        %v2753 = vrot.slane %v2712, 7
        %v2754 = vrot.slane %v2714, 7
        %v2755 = vrot.slane %v2716, 7
        %v2756 = vrot.slane %v2718, 7
        %v2757 = vrot.slane %v2720, 7
        %v2758 = vrot.slane %v2722, 7
        %v2759 = vrot.slane %v2724, 7
        %v2760 = vrot.slane %v2726, 7
        %v2761 = vrot.slane %v2728, 7
        %v2794 = vrot.slane %v2698, 6
        %v2795 = vrot.slane %v2699, 6
        %v2796 = vsel %vm1440, %v2794, %v2795
        %v2797 = vrot.slane %v2700, 6
        %v2798 = vrot.slane %v2701, 6
        %v2799 = vsel %vm1440, %v2797, %v2798
        %v2800 = vrot.slane %v2702, 6
        %v2801 = vrot.slane %v2703, 6
        %v2802 = vsel %vm1440, %v2800, %v2801
        %v2803 = vrot.slane %v2704, 6
        %v2804 = vrot.slane %v2705, 6
        %v2805 = vsel %vm1440, %v2803, %v2804
        %v2806 = vrot.slane %v2706, 6
        %v2807 = vrot.slane %v2707, 6
        %v2808 = vsel %vm1440, %v2806, %v2807
        %v2809 = vrot.slane %v2708, 6
        %v2810 = vrot.slane %v2709, 6
        %v2811 = vsel %vm1440, %v2809, %v2810
        %v2812 = vrot.slane %v2710, 6
        %v2813 = vrot.slane %v2711, 6
        %v2814 = vsel %vm1440, %v2812, %v2813
        %v2815 = vrot.slane %v2712, 6
        %v2816 = vrot.slane %v2713, 6
        %v2817 = vsel %vm1440, %v2815, %v2816
        %v2818 = vrot.slane %v2714, 6
        %v2819 = vrot.slane %v2715, 6
        %v2820 = vsel %vm1440, %v2818, %v2819
        %v2821 = vrot.slane %v2716, 6
        %v2822 = vrot.slane %v2717, 6
        %v2823 = vsel %vm1440, %v2821, %v2822
        %v2824 = vrot.slane %v2718, 6
        %v2825 = vrot.slane %v2719, 6
        %v2826 = vsel %vm1440, %v2824, %v2825
        %v2827 = vrot.slane %v2720, 6
        %v2828 = vrot.slane %v2721, 6
        %v2829 = vsel %vm1440, %v2827, %v2828
        %v2830 = vrot.slane %v2722, 6
        %v2831 = vrot.slane %v2723, 6
        %v2832 = vsel %vm1440, %v2830, %v2831
        %v2833 = vrot.slane %v2724, 6
        %v2834 = vrot.slane %v2725, 6
        %v2835 = vsel %vm1440, %v2833, %v2834
        %v2836 = vrot.slane %v2726, 6
        %v2837 = vrot.slane %v2727, 6
        %v2838 = vsel %vm1440, %v2836, %v2837
        %v2839 = vrot.slane %v2728, 6
        %v2840 = vrot.slane %v2729, 6
        %v2841 = vsel %vm1440, %v2839, %v2840
        %v2890 = vrot.slane %v2699, 5
        %v2891 = vrot.slane %v2701, 5
        %v2892 = vrot.slane %v2703, 5
        %v2893 = vrot.slane %v2705, 5
        %v2894 = vrot.slane %v2707, 5
        %v2895 = vrot.slane %v2709, 5
        %v2896 = vrot.slane %v2711, 5
        %v2897 = vrot.slane %v2713, 5
        %v2898 = vrot.slane %v2715, 5
        %v2899 = vrot.slane %v2717, 5
        %v2900 = vrot.slane %v2719, 5
        %v2901 = vrot.slane %v2721, 5
        %v2902 = vrot.slane %v2723, 5
        %v2903 = vrot.slane %v2725, 5
        %v2904 = vrot.slane %v2727, 5
        %v2905 = vrot.slane %v2729, 5
        %v2922 = vrot.slane %v2699, 4
        %v2923 = vrot.slane %v2701, 4
        %v2924 = vrot.slane %v2703, 4
        %v2925 = vrot.slane %v2705, 4
        %v2926 = vrot.slane %v2707, 4
        %v2927 = vrot.slane %v2709, 4
        %v2928 = vrot.slane %v2711, 4
        %v2929 = vrot.slane %v2713, 4
        %v2930 = vrot.slane %v2715, 4
        %v2931 = vrot.slane %v2717, 4
        %v2932 = vrot.slane %v2719, 4
        %v2933 = vrot.slane %v2721, 4
        %v2934 = vrot.slane %v2723, 4
        %v2935 = vrot.slane %v2725, 4
        %v2936 = vrot.slane %v2727, 4
        %v2937 = vrot.slane %v2729, 4
        %v2954 = vsel %vm1601, %v2698, %v2746
        %v2955 = vsel %vm1601, %v2700, %v2747
        %v2956 = vsel %vm1601, %v2702, %v2748
        %v2957 = vsel %vm1601, %v2704, %v2749
        %v2958 = vsel %vm1601, %v2706, %v2750
        %v2959 = vsel %vm1601, %v2708, %v2751
        %v2960 = vsel %vm1601, %v2710, %v2752
        %v2961 = vsel %vm1601, %v2712, %v2753
        %v2962 = vsel %vm1601, %v2714, %v2754
        %v2963 = vsel %vm1601, %v2716, %v2755
        %v2964 = vsel %vm1601, %v2718, %v2756
        %v2965 = vsel %vm1601, %v2720, %v2757
        %v2966 = vsel %vm1601, %v2722, %v2758
        %v2967 = vsel %vm1601, %v2724, %v2759
        %v2968 = vsel %vm1601, %v2726, %v2760
        %v2969 = vsel %vm1601, %v2728, %v2761
        %v2970 = vsel %vm1440, %v2954, %v2794
        %v2971 = vsel %vm1440, %v2955, %v2797
        %v2972 = vsel %vm1440, %v2956, %v2800
        %v2973 = vsel %vm1440, %v2957, %v2803
        %v2974 = vsel %vm1440, %v2958, %v2806
        %v2975 = vsel %vm1440, %v2959, %v2809
        %v2976 = vsel %vm1440, %v2960, %v2812
        %v2977 = vsel %vm1440, %v2961, %v2815
        %v2978 = vsel %vm1440, %v2962, %v2818
        %v2979 = vsel %vm1440, %v2963, %v2821
        %v2980 = vsel %vm1440, %v2964, %v2824
        %v2981 = vsel %vm1440, %v2965, %v2827
        %v2982 = vsel %vm1440, %v2966, %v2830
        %v2983 = vsel %vm1440, %v2967, %v2833
        %v2984 = vsel %vm1440, %v2968, %v2836
        %v2985 = vsel %vm1440, %v2969, %v2839
        %v2986 = vsel %vm1440, %v2795, %v2890
        %v2987 = vsel %vm1440, %v2798, %v2891
        %v2988 = vsel %vm1440, %v2801, %v2892
        %v2989 = vsel %vm1440, %v2804, %v2893
        %v2990 = vsel %vm1440, %v2807, %v2894
        %v2991 = vsel %vm1440, %v2810, %v2895
        %v2992 = vsel %vm1440, %v2813, %v2896
        %v2993 = vsel %vm1440, %v2816, %v2897
        %v2994 = vsel %vm1440, %v2819, %v2898
        %v2995 = vsel %vm1440, %v2822, %v2899
        %v2996 = vsel %vm1440, %v2825, %v2900
        %v2997 = vsel %vm1440, %v2828, %v2901
        %v2998 = vsel %vm1440, %v2831, %v2902
        %v2999 = vsel %vm1440, %v2834, %v2903
        %v3000 = vsel %vm1440, %v2837, %v2904
        %v3001 = vsel %vm1440, %v2840, %v2905
        %v3002 = vsel %vm1650, %v2986, %v2922
        %v3003 = vsel %vm1650, %v2987, %v2923
        %v3004 = vsel %vm1650, %v2988, %v2924
        %v3005 = vsel %vm1650, %v2989, %v2925
        %v3006 = vsel %vm1650, %v2990, %v2926
        %v3007 = vsel %vm1650, %v2991, %v2927
        %v3008 = vsel %vm1650, %v2992, %v2928
        %v3009 = vsel %vm1650, %v2993, %v2929
        %v3010 = vsel %vm1650, %v2994, %v2930
        %v3011 = vsel %vm1650, %v2995, %v2931
        %v3012 = vsel %vm1650, %v2996, %v2932
        %v3013 = vsel %vm1650, %v2997, %v2933
        %v3014 = vsel %vm1650, %v2998, %v2934
        %v3015 = vsel %vm1650, %v2999, %v2935
        %v3016 = vsel %vm1650, %v3000, %v2936
        %v3017 = vsel %vm1650, %v3001, %v2937
        %v3018 = vmax.f32 %v2698, %v2970
        %v3019 = vmax.f32 %v2699, %v2796
        %v3020 = vmax.f32 %v2700, %v2971
        %v3021 = vmax.f32 %v2701, %v2799
        %v3022 = vmax.f32 %v2702, %v2972
        %v3023 = vmax.f32 %v2703, %v2802
        %v3024 = vmax.f32 %v2704, %v2973
        %v3025 = vmax.f32 %v2705, %v2805
        %v3026 = vmax.f32 %v2706, %v2974
        %v3027 = vmax.f32 %v2707, %v2808
        %v3028 = vmax.f32 %v2708, %v2975
        %v3029 = vmax.f32 %v2709, %v2811
        %v3030 = vmax.f32 %v2710, %v2976
        %v3031 = vmax.f32 %v2711, %v2814
        %v3032 = vmax.f32 %v2712, %v2977
        %v3033 = vmax.f32 %v2713, %v2817
        %v3034 = vmax.f32 %v2714, %v2978
        %v3035 = vmax.f32 %v2715, %v2820
        %v3036 = vmax.f32 %v2716, %v2979
        %v3037 = vmax.f32 %v2717, %v2823
        %v3038 = vmax.f32 %v2718, %v2980
        %v3039 = vmax.f32 %v2719, %v2826
        %v3040 = vmax.f32 %v2720, %v2981
        %v3041 = vmax.f32 %v2721, %v2829
        %v3042 = vmax.f32 %v2722, %v2982
        %v3043 = vmax.f32 %v2723, %v2832
        %v3044 = vmax.f32 %v2724, %v2983
        %v3045 = vmax.f32 %v2725, %v2835
        %v3046 = vmax.f32 %v2726, %v2984
        %v3047 = vmax.f32 %v2727, %v2838
        %v3048 = vmax.f32 %v2728, %v2985
        %v3049 = vmax.f32 %v2729, %v2841
        %v3082 = vrot.slane %v2970, 1
        %v3083 = vrot.slane %v2796, 1
        %v3084 = vsel %vm1731, %v3082, %v3083
        %v3085 = vrot.slane %v3002, 1
        %v3086 = vsel %vm1731, %v3083, %v3085
        %v3087 = vrot.slane %v2971, 1
        %v3088 = vrot.slane %v2799, 1
        %v3089 = vsel %vm1731, %v3087, %v3088
        %v3090 = vrot.slane %v3003, 1
        %v3091 = vsel %vm1731, %v3088, %v3090
        %v3092 = vrot.slane %v2972, 1
        %v3093 = vrot.slane %v2802, 1
        %v3094 = vsel %vm1731, %v3092, %v3093
        %v3095 = vrot.slane %v3004, 1
        %v3096 = vsel %vm1731, %v3093, %v3095
        %v3097 = vrot.slane %v2973, 1
        %v3098 = vrot.slane %v2805, 1
        %v3099 = vsel %vm1731, %v3097, %v3098
        %v3100 = vrot.slane %v3005, 1
        %v3101 = vsel %vm1731, %v3098, %v3100
        %v3102 = vrot.slane %v2974, 1
        %v3103 = vrot.slane %v2808, 1
        %v3104 = vsel %vm1731, %v3102, %v3103
        %v3105 = vrot.slane %v3006, 1
        %v3106 = vsel %vm1731, %v3103, %v3105
        %v3107 = vrot.slane %v2975, 1
        %v3108 = vrot.slane %v2811, 1
        %v3109 = vsel %vm1731, %v3107, %v3108
        %v3110 = vrot.slane %v3007, 1
        %v3111 = vsel %vm1731, %v3108, %v3110
        %v3112 = vrot.slane %v2976, 1
        %v3113 = vrot.slane %v2814, 1
        %v3114 = vsel %vm1731, %v3112, %v3113
        %v3115 = vrot.slane %v3008, 1
        %v3116 = vsel %vm1731, %v3113, %v3115
        %v3117 = vrot.slane %v2977, 1
        %v3118 = vrot.slane %v2817, 1
        %v3119 = vsel %vm1731, %v3117, %v3118
        %v3120 = vrot.slane %v3009, 1
        %v3121 = vsel %vm1731, %v3118, %v3120
        %v3122 = vrot.slane %v2978, 1
        %v3123 = vrot.slane %v2820, 1
        %v3124 = vsel %vm1731, %v3122, %v3123
        %v3125 = vrot.slane %v3010, 1
        %v3126 = vsel %vm1731, %v3123, %v3125
        %v3127 = vrot.slane %v2979, 1
        %v3128 = vrot.slane %v2823, 1
        %v3129 = vsel %vm1731, %v3127, %v3128
        %v3130 = vrot.slane %v3011, 1
        %v3131 = vsel %vm1731, %v3128, %v3130
        %v3132 = vrot.slane %v2980, 1
        %v3133 = vrot.slane %v2826, 1
        %v3134 = vsel %vm1731, %v3132, %v3133
        %v3135 = vrot.slane %v3012, 1
        %v3136 = vsel %vm1731, %v3133, %v3135
        %v3137 = vrot.slane %v2981, 1
        %v3138 = vrot.slane %v2829, 1
        %v3139 = vsel %vm1731, %v3137, %v3138
        %v3140 = vrot.slane %v3013, 1
        %v3141 = vsel %vm1731, %v3138, %v3140
        %v3142 = vrot.slane %v2982, 1
        %v3143 = vrot.slane %v2832, 1
        %v3144 = vsel %vm1731, %v3142, %v3143
        %v3145 = vrot.slane %v3014, 1
        %v3146 = vsel %vm1731, %v3143, %v3145
        %v3147 = vrot.slane %v2983, 1
        %v3148 = vrot.slane %v2835, 1
        %v3149 = vsel %vm1731, %v3147, %v3148
        %v3150 = vrot.slane %v3015, 1
        %v3151 = vsel %vm1731, %v3148, %v3150
        %v3152 = vrot.slane %v2984, 1
        %v3153 = vrot.slane %v2838, 1
        %v3154 = vsel %vm1731, %v3152, %v3153
        %v3155 = vrot.slane %v3016, 1
        %v3156 = vsel %vm1731, %v3153, %v3155
        %v3157 = vrot.slane %v2985, 1
        %v3158 = vrot.slane %v2841, 1
        %v3159 = vsel %vm1731, %v3157, %v3158
        %v3160 = vrot.slane %v3017, 1
        %v3161 = vsel %vm1731, %v3158, %v3160
        %v3194 = vmax.f32 %v3018, %v3084
        %v3195 = vmax.f32 %v3019, %v3086
        %v3196 = vmax.f32 %v3020, %v3089
        %v3197 = vmax.f32 %v3021, %v3091
        %v3198 = vmax.f32 %v3022, %v3094
        %v3199 = vmax.f32 %v3023, %v3096
        %v3200 = vmax.f32 %v3024, %v3099
        %v3201 = vmax.f32 %v3025, %v3101
        %v3202 = vmax.f32 %v3026, %v3104
        %v3203 = vmax.f32 %v3027, %v3106
        %v3204 = vmax.f32 %v3028, %v3109
        %v3205 = vmax.f32 %v3029, %v3111
        %v3206 = vmax.f32 %v3030, %v3114
        %v3207 = vmax.f32 %v3031, %v3116
        %v3208 = vmax.f32 %v3032, %v3119
        %v3209 = vmax.f32 %v3033, %v3121
        %v3210 = vmax.f32 %v3034, %v3124
        %v3211 = vmax.f32 %v3035, %v3126
        %v3212 = vmax.f32 %v3036, %v3129
        %v3213 = vmax.f32 %v3037, %v3131
        %v3214 = vmax.f32 %v3038, %v3134
        %v3215 = vmax.f32 %v3039, %v3136
        %v3216 = vmax.f32 %v3040, %v3139
        %v3217 = vmax.f32 %v3041, %v3141
        %v3218 = vmax.f32 %v3042, %v3144
        %v3219 = vmax.f32 %v3043, %v3146
        %v3220 = vmax.f32 %v3044, %v3149
        %v3221 = vmax.f32 %v3045, %v3151
        %v3222 = vmax.f32 %v3046, %v3154
        %v3223 = vmax.f32 %v3047, %v3156
        %v3224 = vmax.f32 %v3048, %v3159
        %v3225 = vmax.f32 %v3049, %v3161
        %v3226 = vrot.slane %v2970, 3
        %v3227 = vrot.slane %v2796, 3
        %v3228 = vsel %vm1876, %v3226, %v3227
        %v3229 = vrot.slane %v3002, 3
        %v3230 = vsel %vm1876, %v3227, %v3229
        %v3231 = vrot.slane %v2971, 3
        %v3232 = vrot.slane %v2799, 3
        %v3233 = vsel %vm1876, %v3231, %v3232
        %v3234 = vrot.slane %v3003, 3
        %v3235 = vsel %vm1876, %v3232, %v3234
        %v3236 = vrot.slane %v2972, 3
        %v3237 = vrot.slane %v2802, 3
        %v3238 = vsel %vm1876, %v3236, %v3237
        %v3239 = vrot.slane %v3004, 3
        %v3240 = vsel %vm1876, %v3237, %v3239
        %v3241 = vrot.slane %v2973, 3
        %v3242 = vrot.slane %v2805, 3
        %v3243 = vsel %vm1876, %v3241, %v3242
        %v3244 = vrot.slane %v3005, 3
        %v3245 = vsel %vm1876, %v3242, %v3244
        %v3246 = vrot.slane %v2974, 3
        %v3247 = vrot.slane %v2808, 3
        %v3248 = vsel %vm1876, %v3246, %v3247
        %v3249 = vrot.slane %v3006, 3
        %v3250 = vsel %vm1876, %v3247, %v3249
        %v3251 = vrot.slane %v2975, 3
        %v3252 = vrot.slane %v2811, 3
        %v3253 = vsel %vm1876, %v3251, %v3252
        %v3254 = vrot.slane %v3007, 3
        %v3255 = vsel %vm1876, %v3252, %v3254
        %v3256 = vrot.slane %v2976, 3
        %v3257 = vrot.slane %v2814, 3
        %v3258 = vsel %vm1876, %v3256, %v3257
        %v3259 = vrot.slane %v3008, 3
        %v3260 = vsel %vm1876, %v3257, %v3259
        %v3261 = vrot.slane %v2977, 3
        %v3262 = vrot.slane %v2817, 3
        %v3263 = vsel %vm1876, %v3261, %v3262
        %v3264 = vrot.slane %v3009, 3
        %v3265 = vsel %vm1876, %v3262, %v3264
        %v3266 = vrot.slane %v2978, 3
        %v3267 = vrot.slane %v2820, 3
        %v3268 = vsel %vm1876, %v3266, %v3267
        %v3269 = vrot.slane %v3010, 3
        %v3270 = vsel %vm1876, %v3267, %v3269
        %v3271 = vrot.slane %v2979, 3
        %v3272 = vrot.slane %v2823, 3
        %v3273 = vsel %vm1876, %v3271, %v3272
        %v3274 = vrot.slane %v3011, 3
        %v3275 = vsel %vm1876, %v3272, %v3274
        %v3276 = vrot.slane %v2980, 3
        %v3277 = vrot.slane %v2826, 3
        %v3278 = vsel %vm1876, %v3276, %v3277
        %v3279 = vrot.slane %v3012, 3
        %v3280 = vsel %vm1876, %v3277, %v3279
        %v3281 = vrot.slane %v2981, 3
        %v3282 = vrot.slane %v2829, 3
        %v3283 = vsel %vm1876, %v3281, %v3282
        %v3284 = vrot.slane %v3013, 3
        %v3285 = vsel %vm1876, %v3282, %v3284
        %v3286 = vrot.slane %v2982, 3
        %v3287 = vrot.slane %v2832, 3
        %v3288 = vsel %vm1876, %v3286, %v3287
        %v3289 = vrot.slane %v3014, 3
        %v3290 = vsel %vm1876, %v3287, %v3289
        %v3291 = vrot.slane %v2983, 3
        %v3292 = vrot.slane %v2835, 3
        %v3293 = vsel %vm1876, %v3291, %v3292
        %v3294 = vrot.slane %v3015, 3
        %v3295 = vsel %vm1876, %v3292, %v3294
        %v3296 = vrot.slane %v2984, 3
        %v3297 = vrot.slane %v2838, 3
        %v3298 = vsel %vm1876, %v3296, %v3297
        %v3299 = vrot.slane %v3016, 3
        %v3300 = vsel %vm1876, %v3297, %v3299
        %v3301 = vrot.slane %v2985, 3
        %v3302 = vrot.slane %v2841, 3
        %v3303 = vsel %vm1876, %v3301, %v3302
        %v3304 = vrot.slane %v3017, 3
        %v3305 = vsel %vm1876, %v3302, %v3304
        %v3338 = vmax.f32 %v3194, %v3228
        %v3339 = vmax.f32 %v3195, %v3230
        %v3340 = vmax.f32 %v3196, %v3233
        %v3341 = vmax.f32 %v3197, %v3235
        %v3342 = vmax.f32 %v3198, %v3238
        %v3343 = vmax.f32 %v3199, %v3240
        %v3344 = vmax.f32 %v3200, %v3243
        %v3345 = vmax.f32 %v3201, %v3245
        %v3346 = vmax.f32 %v3202, %v3248
        %v3347 = vmax.f32 %v3203, %v3250
        %v3348 = vmax.f32 %v3204, %v3253
        %v3349 = vmax.f32 %v3205, %v3255
        %v3350 = vmax.f32 %v3206, %v3258
        %v3351 = vmax.f32 %v3207, %v3260
        %v3352 = vmax.f32 %v3208, %v3263
        %v3353 = vmax.f32 %v3209, %v3265
        %v3354 = vmax.f32 %v3210, %v3268
        %v3355 = vmax.f32 %v3211, %v3270
        %v3356 = vmax.f32 %v3212, %v3273
        %v3357 = vmax.f32 %v3213, %v3275
        %v3358 = vmax.f32 %v3214, %v3278
        %v3359 = vmax.f32 %v3215, %v3280
        %v3360 = vmax.f32 %v3216, %v3283
        %v3361 = vmax.f32 %v3217, %v3285
        %v3362 = vmax.f32 %v3218, %v3288
        %v3363 = vmax.f32 %v3219, %v3290
        %v3364 = vmax.f32 %v3220, %v3293
        %v3365 = vmax.f32 %v3221, %v3295
        %v3366 = vmax.f32 %v3222, %v3298
        %v3367 = vmax.f32 %v3223, %v3300
        %v3368 = vmax.f32 %v3224, %v3303
        %v3369 = vmax.f32 %v3225, %v3305
        %v3370 = vrot.slane %v2970, 4
        %v3371 = vrot.slane %v2796, 4
        %v3372 = vsel %vm2021, %v3370, %v3371
        %v3373 = vrot.slane %v3002, 4
        %v3374 = vsel %vm2021, %v3371, %v3373
        %v3375 = vrot.slane %v2971, 4
        %v3376 = vrot.slane %v2799, 4
        %v3377 = vsel %vm2021, %v3375, %v3376
        %v3378 = vrot.slane %v3003, 4
        %v3379 = vsel %vm2021, %v3376, %v3378
        %v3380 = vrot.slane %v2972, 4
        %v3381 = vrot.slane %v2802, 4
        %v3382 = vsel %vm2021, %v3380, %v3381
        %v3383 = vrot.slane %v3004, 4
        %v3384 = vsel %vm2021, %v3381, %v3383
        %v3385 = vrot.slane %v2973, 4
        %v3386 = vrot.slane %v2805, 4
        %v3387 = vsel %vm2021, %v3385, %v3386
        %v3388 = vrot.slane %v3005, 4
        %v3389 = vsel %vm2021, %v3386, %v3388
        %v3390 = vrot.slane %v2974, 4
        %v3391 = vrot.slane %v2808, 4
        %v3392 = vsel %vm2021, %v3390, %v3391
        %v3393 = vrot.slane %v3006, 4
        %v3394 = vsel %vm2021, %v3391, %v3393
        %v3395 = vrot.slane %v2975, 4
        %v3396 = vrot.slane %v2811, 4
        %v3397 = vsel %vm2021, %v3395, %v3396
        %v3398 = vrot.slane %v3007, 4
        %v3399 = vsel %vm2021, %v3396, %v3398
        %v3400 = vrot.slane %v2976, 4
        %v3401 = vrot.slane %v2814, 4
        %v3402 = vsel %vm2021, %v3400, %v3401
        %v3403 = vrot.slane %v3008, 4
        %v3404 = vsel %vm2021, %v3401, %v3403
        %v3405 = vrot.slane %v2977, 4
        %v3406 = vrot.slane %v2817, 4
        %v3407 = vsel %vm2021, %v3405, %v3406
        %v3408 = vrot.slane %v3009, 4
        %v3409 = vsel %vm2021, %v3406, %v3408
        %v3410 = vrot.slane %v2978, 4
        %v3411 = vrot.slane %v2820, 4
        %v3412 = vsel %vm2021, %v3410, %v3411
        %v3413 = vrot.slane %v3010, 4
        %v3414 = vsel %vm2021, %v3411, %v3413
        %v3415 = vrot.slane %v2979, 4
        %v3416 = vrot.slane %v2823, 4
        %v3417 = vsel %vm2021, %v3415, %v3416
        %v3418 = vrot.slane %v3011, 4
        %v3419 = vsel %vm2021, %v3416, %v3418
        %v3420 = vrot.slane %v2980, 4
        %v3421 = vrot.slane %v2826, 4
        %v3422 = vsel %vm2021, %v3420, %v3421
        %v3423 = vrot.slane %v3012, 4
        %v3424 = vsel %vm2021, %v3421, %v3423
        %v3425 = vrot.slane %v2981, 4
        %v3426 = vrot.slane %v2829, 4
        %v3427 = vsel %vm2021, %v3425, %v3426
        %v3428 = vrot.slane %v3013, 4
        %v3429 = vsel %vm2021, %v3426, %v3428
        %v3430 = vrot.slane %v2982, 4
        %v3431 = vrot.slane %v2832, 4
        %v3432 = vsel %vm2021, %v3430, %v3431
        %v3433 = vrot.slane %v3014, 4
        %v3434 = vsel %vm2021, %v3431, %v3433
        %v3435 = vrot.slane %v2983, 4
        %v3436 = vrot.slane %v2835, 4
        %v3437 = vsel %vm2021, %v3435, %v3436
        %v3438 = vrot.slane %v3015, 4
        %v3439 = vsel %vm2021, %v3436, %v3438
        %v3440 = vrot.slane %v2984, 4
        %v3441 = vrot.slane %v2838, 4
        %v3442 = vsel %vm2021, %v3440, %v3441
        %v3443 = vrot.slane %v3016, 4
        %v3444 = vsel %vm2021, %v3441, %v3443
        %v3445 = vrot.slane %v2985, 4
        %v3446 = vrot.slane %v2841, 4
        %v3447 = vsel %vm2021, %v3445, %v3446
        %v3448 = vrot.slane %v3017, 4
        %v3449 = vsel %vm2021, %v3446, %v3448
        %v3482 = vmax.f32 %v3338, %v3372
        %v3483 = vmax.f32 %v3339, %v3374
        %v3484 = vmax.f32 %v3340, %v3377
        %v3485 = vmax.f32 %v3341, %v3379
        %v3486 = vmax.f32 %v3342, %v3382
        %v3487 = vmax.f32 %v3343, %v3384
        %v3488 = vmax.f32 %v3344, %v3387
        %v3489 = vmax.f32 %v3345, %v3389
        %v3490 = vmax.f32 %v3346, %v3392
        %v3491 = vmax.f32 %v3347, %v3394
        %v3492 = vmax.f32 %v3348, %v3397
        %v3493 = vmax.f32 %v3349, %v3399
        %v3494 = vmax.f32 %v3350, %v3402
        %v3495 = vmax.f32 %v3351, %v3404
        %v3496 = vmax.f32 %v3352, %v3407
        %v3497 = vmax.f32 %v3353, %v3409
        %v3498 = vmax.f32 %v3354, %v3412
        %v3499 = vmax.f32 %v3355, %v3414
        %v3500 = vmax.f32 %v3356, %v3417
        %v3501 = vmax.f32 %v3357, %v3419
        %v3502 = vmax.f32 %v3358, %v3422
        %v3503 = vmax.f32 %v3359, %v3424
        %v3504 = vmax.f32 %v3360, %v3427
        %v3505 = vmax.f32 %v3361, %v3429
        %v3506 = vmax.f32 %v3362, %v3432
        %v3507 = vmax.f32 %v3363, %v3434
        %v3508 = vmax.f32 %v3364, %v3437
        %v3509 = vmax.f32 %v3365, %v3439
        %v3510 = vmax.f32 %v3366, %v3442
        %v3511 = vmax.f32 %v3367, %v3444
        %v3512 = vmax.f32 %v3368, %v3447
        %v3513 = vmax.f32 %v3369, %v3449
        %v3514 = vpack.c.bf16 %v3483, %v3482
        %v3515 = vpack.c.bf16 %v3485, %v3484
        %v3516 = vpack.c.bf16 %v3487, %v3486
        %v3517 = vpack.c.bf16 %v3489, %v3488
        %v3518 = vpack.c.bf16 %v3491, %v3490
        %v3519 = vpack.c.bf16 %v3493, %v3492
        %v3520 = vpack.c.bf16 %v3495, %v3494
        %v3521 = vpack.c.bf16 %v3497, %v3496
        %v3522 = vpack.c.bf16 %v3499, %v3498
        %v3523 = vpack.c.bf16 %v3501, %v3500
        %v3524 = vpack.c.bf16 %v3503, %v3502
        %v3525 = vpack.c.bf16 %v3505, %v3504
        %v3526 = vpack.c.bf16 %v3507, %v3506
        %v3527 = vpack.c.bf16 %v3509, %v3508
        %v3528 = vpack.c.bf16 %v3511, %v3510
        %v3529 = vpack.c.bf16 %v3513, %v3512
        %s3530 = scalar_lea.vmem %s5, 8
        %v3531 = vld [vmem:[%s3530] sm:$0xf]
        %v3533 = vsel %vm646, %v3514, 0
        %v3536 = vsel %vm646, %v3515, 0
        %v3539 = vsel %vm646, %v3516, 0
        %v3542 = vsel %vm646, %v3517, 0
        %v3545 = vsel %vm646, %v3518, 0
        %v3548 = vsel %vm646, %v3519, 0
        %v3551 = vsel %vm646, %v3520, 0
        %v3554 = vsel %vm646, %v3521, 0
        %v3557 = vsel %vm646, %v3522, 0
        %v3560 = vsel %vm646, %v3523, 0
        %v3563 = vsel %vm646, %v3524, 0
        %v3566 = vsel %vm646, %v3525, 0
        %v3569 = vsel %vm646, %v3526, 0
        %v3572 = vsel %vm646, %v3527, 0
        %v3575 = vsel %vm646, %v3528, 0
        %v3578 = vsel %vm646, %v3529, 0
        %v3581 = vsel %vm2021, %v3531, 0
        %3583 = vmatprep.subr.bf16.mxu0 0
        %3584 = vmatpush1.bf16.msra.mxu0 %v3581
        %3585 = vmatprep.subr.bf16.mxu0 0
        %3586 = vmatpush1.bf16.msra.mxu0 0
        %3587 = vmatprep.subr.bf16.mxu0 0
        %3588 = vmatpush1.bf16.msra.mxu0 0
        %3589 = vmatprep.subr.bf16.mxu0 0
        %3590 = vmatpush1.bf16.msra.mxu0 0
        %3591 = vmatprep.subr.bf16.mxu0 0
        %3592 = vmatpush1.bf16.msra.mxu0 0
        %3593 = vmatprep.subr.bf16.mxu0 0
        %3594 = vmatpush1.bf16.msra.mxu0 0
        %3595 = vmatprep.subr.bf16.mxu0 0
        %3596 = vmatpush1.bf16.msra.mxu0 0
        %3597 = vmatprep.subr.bf16.mxu0 0
        %3598 = vmatpush1.bf16.msra.mxu0 0
        %3599 = vmatprep.subr.bf16.mxu0 0
        %3600 = vmatpush1.bf16.msra.mxu0 0
        %3601 = vmatprep.subr.bf16.mxu0 0
        %3602 = vmatpush1.bf16.msra.mxu0 0
        %3603 = vmatprep.subr.bf16.mxu0 0
        %3604 = vmatpush1.bf16.msra.mxu0 0
        %3605 = vmatprep.subr.bf16.mxu0 0
        %3606 = vmatpush1.bf16.msra.mxu0 0
        %3607 = vmatprep.subr.bf16.mxu0 0
        %3608 = vmatpush1.bf16.msra.mxu0 0
        %3609 = vmatprep.subr.bf16.mxu0 0
        %3610 = vmatpush1.bf16.msra.mxu0 0
        %3611 = vmatprep.subr.bf16.mxu0 0
        %3612 = vmatpush1.bf16.msra.mxu0 0
        %3613 = vmatprep.subr.bf16.mxu0 0
        %3614 = vmatpush1.bf16.msra.mxu0 0
        %3615 = vmatprep.mubr.bf16.mxu0 0
        %3616 = vmatmul.mubr.bf16.gmra.mrb[0].mxu0 %v3533
        %v3617 = vpop.f32.mrb[0].mxu0
        %v3618 = vadd.f32 0.0, %v3617
        %v3619 = vpop.f32.mrb[0].mxu0
        %v3620 = vpop.f32.mrb[0].mxu0
        %v3621 = vadd.f32 0.0, %v3620
        %v3622 = vpop.f32.mrb[0].mxu0
        %3623 = vmatprep.mubr.bf16.mxu0 0
        %3624 = vmatmul.mubr.bf16.gmra.mrb[0].mxu0 %v3536
        %v3625 = vpop.f32.mrb[0].mxu0
        %v3626 = vadd.f32 0.0, %v3625
        %v3627 = vpop.f32.mrb[0].mxu0
        %v3628 = vpop.f32.mrb[0].mxu0
        %v3629 = vadd.f32 0.0, %v3628
        %v3630 = vpop.f32.mrb[0].mxu0
        %3631 = vmatprep.mubr.bf16.mxu0 0
        %3632 = vmatmul.mubr.bf16.gmra.mrb[0].mxu0 %v3539
        %v3633 = vpop.f32.mrb[0].mxu0
        %v3634 = vadd.f32 0.0, %v3633
        %v3635 = vpop.f32.mrb[0].mxu0
        %v3636 = vpop.f32.mrb[0].mxu0
        %v3637 = vadd.f32 0.0, %v3636
        %v3638 = vpop.f32.mrb[0].mxu0
        %3639 = vmatprep.mubr.bf16.mxu0 0
        %3640 = vmatmul.mubr.bf16.gmra.mrb[0].mxu0 %v3542
        %v3641 = vpop.f32.mrb[0].mxu0
        %v3642 = vadd.f32 0.0, %v3641
        %v3643 = vpop.f32.mrb[0].mxu0
        %v3644 = vpop.f32.mrb[0].mxu0
        %v3645 = vadd.f32 0.0, %v3644
        %v3646 = vpop.f32.mrb[0].mxu0
        %3647 = vmatprep.mubr.bf16.mxu0 0
        %3648 = vmatmul.mubr.bf16.gmra.mrb[0].mxu0 %v3545
        %v3649 = vpop.f32.mrb[0].mxu0
        %v3650 = vadd.f32 0.0, %v3649
        %v3651 = vpop.f32.mrb[0].mxu0
        %v3652 = vpop.f32.mrb[0].mxu0
        %v3653 = vadd.f32 0.0, %v3652
        %v3654 = vpop.f32.mrb[0].mxu0
        %3655 = vmatprep.mubr.bf16.mxu0 0
        %3656 = vmatmul.mubr.bf16.gmra.mrb[0].mxu0 %v3548
        %v3657 = vpop.f32.mrb[0].mxu0
        %v3658 = vadd.f32 0.0, %v3657
        %v3659 = vpop.f32.mrb[0].mxu0
        %v3660 = vpop.f32.mrb[0].mxu0
        %v3661 = vadd.f32 0.0, %v3660
        %v3662 = vpop.f32.mrb[0].mxu0
        %3663 = vmatprep.mubr.bf16.mxu0 0
        %3664 = vmatmul.mubr.bf16.gmra.mrb[0].mxu0 %v3551
        %v3665 = vpop.f32.mrb[0].mxu0
        %v3666 = vadd.f32 0.0, %v3665
        %v3667 = vpop.f32.mrb[0].mxu0
        %v3668 = vpop.f32.mrb[0].mxu0
        %v3669 = vadd.f32 0.0, %v3668
        %v3670 = vpop.f32.mrb[0].mxu0
        %3671 = vmatprep.mubr.bf16.mxu0 0
        %3672 = vmatmul.mubr.bf16.gmra.mrb[0].mxu0 %v3554
        %v3673 = vpop.f32.mrb[0].mxu0
        %v3674 = vadd.f32 0.0, %v3673
        %v3675 = vpop.f32.mrb[0].mxu0
        %v3676 = vpop.f32.mrb[0].mxu0
        %v3677 = vadd.f32 0.0, %v3676
        %v3678 = vpop.f32.mrb[0].mxu0
        %3679 = vmatprep.mubr.bf16.mxu0 0
        %3680 = vmatmul.mubr.bf16.gmra.mrb[0].mxu0 %v3557
        %v3681 = vpop.f32.mrb[0].mxu0
        %v3682 = vadd.f32 0.0, %v3681
        %v3683 = vpop.f32.mrb[0].mxu0
        %v3684 = vpop.f32.mrb[0].mxu0
        %v3685 = vadd.f32 0.0, %v3684
        %v3686 = vpop.f32.mrb[0].mxu0
        %3687 = vmatprep.mubr.bf16.mxu0 0
        %3688 = vmatmul.mubr.bf16.gmra.mrb[0].mxu0 %v3560
        %v3689 = vpop.f32.mrb[0].mxu0
        %v3690 = vadd.f32 0.0, %v3689
        %v3691 = vpop.f32.mrb[0].mxu0
        %v3692 = vpop.f32.mrb[0].mxu0
        %v3693 = vadd.f32 0.0, %v3692
        %v3694 = vpop.f32.mrb[0].mxu0
        %3695 = vmatprep.mubr.bf16.mxu0 0
        %3696 = vmatmul.mubr.bf16.gmra.mrb[0].mxu0 %v3563
        %v3697 = vpop.f32.mrb[0].mxu0
        %v3698 = vadd.f32 0.0, %v3697
        %v3699 = vpop.f32.mrb[0].mxu0
        %v3700 = vpop.f32.mrb[0].mxu0
        %v3701 = vadd.f32 0.0, %v3700
        %v3702 = vpop.f32.mrb[0].mxu0
        %3703 = vmatprep.mubr.bf16.mxu0 0
        %3704 = vmatmul.mubr.bf16.gmra.mrb[0].mxu0 %v3566
        %v3705 = vpop.f32.mrb[0].mxu0
        %v3706 = vadd.f32 0.0, %v3705
        %v3707 = vpop.f32.mrb[0].mxu0
        %v3708 = vpop.f32.mrb[0].mxu0
        %v3709 = vadd.f32 0.0, %v3708
        %v3710 = vpop.f32.mrb[0].mxu0
        %3711 = vmatprep.mubr.bf16.mxu0 0
        %3712 = vmatmul.mubr.bf16.gmra.mrb[0].mxu0 %v3569
        %v3713 = vpop.f32.mrb[0].mxu0
        %v3714 = vadd.f32 0.0, %v3713
        %v3715 = vpop.f32.mrb[0].mxu0
        %v3716 = vpop.f32.mrb[0].mxu0
        %v3717 = vadd.f32 0.0, %v3716
        %v3718 = vpop.f32.mrb[0].mxu0
        %3719 = vmatprep.mubr.bf16.mxu0 0
        %3720 = vmatmul.mubr.bf16.gmra.mrb[0].mxu0 %v3572
        %v3721 = vpop.f32.mrb[0].mxu0
        %v3722 = vadd.f32 0.0, %v3721
        %v3723 = vpop.f32.mrb[0].mxu0
        %v3724 = vpop.f32.mrb[0].mxu0
        %v3725 = vadd.f32 0.0, %v3724
        %v3726 = vpop.f32.mrb[0].mxu0
        %3727 = vmatprep.mubr.bf16.mxu0 0
        %3728 = vmatmul.mubr.bf16.gmra.mrb[0].mxu0 %v3575
        %v3729 = vpop.f32.mrb[0].mxu0
        %v3730 = vadd.f32 0.0, %v3729
        %v3731 = vpop.f32.mrb[0].mxu0
        %v3732 = vpop.f32.mrb[0].mxu0
        %v3733 = vadd.f32 0.0, %v3732
        %v3734 = vpop.f32.mrb[0].mxu0
        %3735 = vmatprep.mubr.bf16.mxu0 0
        %3736 = vmatmul.mubr.bf16.gmra.mrb[0].mxu0 %v3578
        %v3737 = vpop.f32.mrb[0].mxu0
        %v3738 = vadd.f32 0.0, %v3737
        %v3739 = vpop.f32.mrb[0].mxu0
        %v3740 = vpop.f32.mrb[0].mxu0
        %v3741 = vadd.f32 0.0, %v3740
        %v3742 = vpop.f32.mrb[0].mxu0
        %3743 = vdwg.mxu0
        %v3744 = vadd.f32 %v2482, %v3618
        %v3745 = vadd.f32 %v2485, %v3621
        %v3746 = vadd.f32 %v2490, %v3626
        %v3747 = vadd.f32 %v2493, %v3629
        %v3748 = vadd.f32 %v2498, %v3634
        %v3749 = vadd.f32 %v2501, %v3637
        %v3750 = vadd.f32 %v2506, %v3642
        %v3751 = vadd.f32 %v2509, %v3645
        %v3752 = vadd.f32 %v2514, %v3650
        %v3753 = vadd.f32 %v2517, %v3653
        %v3754 = vadd.f32 %v2522, %v3658
        %v3755 = vadd.f32 %v2525, %v3661
        %v3756 = vadd.f32 %v2530, %v3666
        %v3757 = vadd.f32 %v2533, %v3669
        %v3758 = vadd.f32 %v2538, %v3674
        %v3759 = vadd.f32 %v2541, %v3677
        %v3760 = vadd.f32 %v2546, %v3682
        %v3761 = vadd.f32 %v2549, %v3685
        %v3762 = vadd.f32 %v2554, %v3690
        %v3763 = vadd.f32 %v2557, %v3693
        %v3764 = vadd.f32 %v2562, %v3698
        %v3765 = vadd.f32 %v2565, %v3701
        %v3766 = vadd.f32 %v2570, %v3706
        %v3767 = vadd.f32 %v2573, %v3709
        %v3768 = vadd.f32 %v2578, %v3714
        %v3769 = vadd.f32 %v2581, %v3717
        %v3770 = vadd.f32 %v2586, %v3722
        %v3771 = vadd.f32 %v2589, %v3725
        %v3772 = vadd.f32 %v2594, %v3730
        %v3773 = vadd.f32 %v2597, %v3733
        %v3774 = vadd.f32 %v2602, %v3738
        %v3775 = vadd.f32 %v2605, %v3741
        %v3776 = vmax.f32 %v3484, %v3482
        %v3777 = vmax.f32 %v3485, %v3483
        %v3778 = vmax.f32 %v3486, %v3482
        %v3779 = vmax.f32 %v3487, %v3483
        %v3780 = vmax.f32 %v3488, %v3484
        %v3781 = vmax.f32 %v3489, %v3485
        %v3782 = vmax.f32 %v3490, %v3486
        %v3783 = vmax.f32 %v3491, %v3487
        %v3784 = vmax.f32 %v3492, %v3488
        %v3785 = vmax.f32 %v3493, %v3489
        %v3786 = vmax.f32 %v3494, %v3490
        %v3787 = vmax.f32 %v3495, %v3491
        %v3788 = vmax.f32 %v3496, %v3492
        %v3789 = vmax.f32 %v3497, %v3493
        %v3790 = vmax.f32 %v3498, %v3494
        %v3791 = vmax.f32 %v3499, %v3495
        %v3792 = vmax.f32 %v3500, %v3496
        %v3793 = vmax.f32 %v3501, %v3497
        %v3794 = vmax.f32 %v3502, %v3498
        %v3795 = vmax.f32 %v3503, %v3499
        %v3796 = vmax.f32 %v3504, %v3500
        %v3797 = vmax.f32 %v3505, %v3501
        %v3798 = vmax.f32 %v3506, %v3502
        %v3799 = vmax.f32 %v3507, %v3503
        %v3800 = vmax.f32 %v3508, %v3504
        %v3801 = vmax.f32 %v3509, %v3505
        %v3802 = vmax.f32 %v3510, %v3506
        %v3803 = vmax.f32 %v3511, %v3507
        %v3804 = vmax.f32 %v3512, %v3508
        %v3805 = vmax.f32 %v3513, %v3509
        %v3806 = vmax.f32 %v3776, %v3482
        %v3807 = vmax.f32 %v3777, %v3483
        %v3808 = vmax.f32 %v3778, %v3484
        %v3809 = vmax.f32 %v3779, %v3485
        %v3810 = vmax.f32 %v3780, %v3486
        %v3811 = vmax.f32 %v3781, %v3487
        %v3812 = vmax.f32 %v3782, %v3488
        %v3813 = vmax.f32 %v3783, %v3489
        %v3814 = vmax.f32 %v3784, %v3490
        %v3815 = vmax.f32 %v3785, %v3491
        %v3816 = vmax.f32 %v3786, %v3492
        %v3817 = vmax.f32 %v3787, %v3493
        %v3818 = vmax.f32 %v3788, %v3494
        %v3819 = vmax.f32 %v3789, %v3495
        %v3820 = vmax.f32 %v3790, %v3496
        %v3821 = vmax.f32 %v3791, %v3497
        %v3822 = vmax.f32 %v3792, %v3498
        %v3823 = vmax.f32 %v3793, %v3499
        %v3824 = vmax.f32 %v3794, %v3500
        %v3825 = vmax.f32 %v3795, %v3501
        %v3826 = vmax.f32 %v3796, %v3502
        %v3827 = vmax.f32 %v3797, %v3503
        %v3828 = vmax.f32 %v3798, %v3504
        %v3829 = vmax.f32 %v3799, %v3505
        %v3830 = vmax.f32 %v3800, %v3506
        %v3831 = vmax.f32 %v3801, %v3507
        %v3832 = vmax.f32 %v3802, %v3508
        %v3833 = vmax.f32 %v3803, %v3509
        %v3834 = vmax.f32 %v3804, %v3510
        %v3835 = vmax.f32 %v3805, %v3511
        %v3836 = vmax.f32 %v3806, %v3486
        %v3837 = vmax.f32 %v3807, %v3487
        %v3838 = vmax.f32 %v3808, %v3488
        %v3839 = vmax.f32 %v3809, %v3489
        %v3840 = vmax.f32 %v3810, %v3490
        %v3841 = vmax.f32 %v3811, %v3491
        %v3842 = vmax.f32 %v3812, %v3492
        %v3843 = vmax.f32 %v3813, %v3493
        %v3844 = vmax.f32 %v3814, %v3494
        %v3845 = vmax.f32 %v3815, %v3495
        %v3846 = vmax.f32 %v3816, %v3496
        %v3847 = vmax.f32 %v3817, %v3497
        %v3848 = vmax.f32 %v3818, %v3498
        %v3849 = vmax.f32 %v3819, %v3499
        %v3850 = vmax.f32 %v3820, %v3500
        %v3851 = vmax.f32 %v3821, %v3501
        %v3852 = vmax.f32 %v3822, %v3502
        %v3853 = vmax.f32 %v3823, %v3503
        %v3854 = vmax.f32 %v3824, %v3504
        %v3855 = vmax.f32 %v3825, %v3505
        %v3856 = vmax.f32 %v3826, %v3506
        %v3857 = vmax.f32 %v3827, %v3507
        %v3858 = vmax.f32 %v3828, %v3508
        %v3859 = vmax.f32 %v3829, %v3509
        %v3860 = vmax.f32 %v3830, %v3510
        %v3861 = vmax.f32 %v3831, %v3511
        %v3862 = vmax.f32 %v3832, %v3512
        %v3863 = vmax.f32 %v3833, %v3513
        %v3864 = vmax.f32 %v3834, %v3512
        %v3865 = vmax.f32 %v3835, %v3513
        %v3866 = vmax.f32 %v3776, %v3486
        %v3867 = vmax.f32 %v3777, %v3487
        %v3868 = vmax.f32 %v3836, %v3488
        %v3869 = vmax.f32 %v3837, %v3489
        %v3870 = vmax.f32 %v3838, %v3490
        %v3871 = vmax.f32 %v3839, %v3491
        %v3872 = vmax.f32 %v3840, %v3492
        %v3873 = vmax.f32 %v3841, %v3493
        %v3874 = vmax.f32 %v3842, %v3494
        %v3875 = vmax.f32 %v3843, %v3495
        %v3876 = vmax.f32 %v3844, %v3496
        %v3877 = vmax.f32 %v3845, %v3497
        %v3878 = vmax.f32 %v3846, %v3498
        %v3879 = vmax.f32 %v3847, %v3499
        %v3880 = vmax.f32 %v3848, %v3500
        %v3881 = vmax.f32 %v3849, %v3501
        %v3882 = vmax.f32 %v3850, %v3502
        %v3883 = vmax.f32 %v3851, %v3503
        %v3884 = vmax.f32 %v3852, %v3504
        %v3885 = vmax.f32 %v3853, %v3505
        %v3886 = vmax.f32 %v3854, %v3506
        %v3887 = vmax.f32 %v3855, %v3507
        %v3888 = vmax.f32 %v3856, %v3508
        %v3889 = vmax.f32 %v3857, %v3509
        %v3890 = vmax.f32 %v3858, %v3510
        %v3891 = vmax.f32 %v3859, %v3511
        %v3892 = vmax.f32 %v3860, %v3512
        %v3893 = vmax.f32 %v3861, %v3513
        %v3894 = vmax.f32 %v3862, %v3512
        %v3895 = vmax.f32 %v3863, %v3513
        %v3896 = vmax.f32 %v3864, %v3512
        %v3897 = vmax.f32 %v3865, %v3513
        %v3914 = vrot.slane %v3866, 7
        %v3915 = vrot.slane %v3868, 7
        %v3916 = vrot.slane %v3870, 7
        %v3917 = vrot.slane %v3872, 7
        %v3918 = vrot.slane %v3874, 7
        %v3919 = vrot.slane %v3876, 7
        %v3920 = vrot.slane %v3878, 7
        %v3921 = vrot.slane %v3880, 7
        %v3922 = vrot.slane %v3882, 7
        %v3923 = vrot.slane %v3884, 7
        %v3924 = vrot.slane %v3886, 7
        %v3925 = vrot.slane %v3888, 7
        %v3926 = vrot.slane %v3890, 7
        %v3927 = vrot.slane %v3892, 7
        %v3928 = vrot.slane %v3894, 7
        %v3929 = vrot.slane %v3896, 7
        %v3962 = vrot.slane %v3866, 6
        %v3963 = vrot.slane %v3867, 6
        %v3964 = vsel %vm1440, %v3962, %v3963
        %v3965 = vrot.slane %v3868, 6
        %v3966 = vrot.slane %v3869, 6
        %v3967 = vsel %vm1440, %v3965, %v3966
        %v3968 = vrot.slane %v3870, 6
        %v3969 = vrot.slane %v3871, 6
        %v3970 = vsel %vm1440, %v3968, %v3969
        %v3971 = vrot.slane %v3872, 6
        %v3972 = vrot.slane %v3873, 6
        %v3973 = vsel %vm1440, %v3971, %v3972
        %v3974 = vrot.slane %v3874, 6
        %v3975 = vrot.slane %v3875, 6
        %v3976 = vsel %vm1440, %v3974, %v3975
        %v3977 = vrot.slane %v3876, 6
        %v3978 = vrot.slane %v3877, 6
        %v3979 = vsel %vm1440, %v3977, %v3978
        %v3980 = vrot.slane %v3878, 6
        %v3981 = vrot.slane %v3879, 6
        %v3982 = vsel %vm1440, %v3980, %v3981
        %v3983 = vrot.slane %v3880, 6
        %v3984 = vrot.slane %v3881, 6
        %v3985 = vsel %vm1440, %v3983, %v3984
        %v3986 = vrot.slane %v3882, 6
        %v3987 = vrot.slane %v3883, 6
        %v3988 = vsel %vm1440, %v3986, %v3987
        %v3989 = vrot.slane %v3884, 6
        %v3990 = vrot.slane %v3885, 6
        %v3991 = vsel %vm1440, %v3989, %v3990
        %v3992 = vrot.slane %v3886, 6
        %v3993 = vrot.slane %v3887, 6
        %v3994 = vsel %vm1440, %v3992, %v3993
        %v3995 = vrot.slane %v3888, 6
        %v3996 = vrot.slane %v3889, 6
        %v3997 = vsel %vm1440, %v3995, %v3996
        %v3998 = vrot.slane %v3890, 6
        %v3999 = vrot.slane %v3891, 6
        %v4000 = vsel %vm1440, %v3998, %v3999
        %v4001 = vrot.slane %v3892, 6
        %v4002 = vrot.slane %v3893, 6
        %v4003 = vsel %vm1440, %v4001, %v4002
        %v4004 = vrot.slane %v3894, 6
        %v4005 = vrot.slane %v3895, 6
        %v4006 = vsel %vm1440, %v4004, %v4005
        %v4007 = vrot.slane %v3896, 6
        %v4008 = vrot.slane %v3897, 6
        %v4009 = vsel %vm1440, %v4007, %v4008
        %v4058 = vrot.slane %v3867, 5
        %v4059 = vrot.slane %v3869, 5
        %v4060 = vrot.slane %v3871, 5
        %v4061 = vrot.slane %v3873, 5
        %v4062 = vrot.slane %v3875, 5
        %v4063 = vrot.slane %v3877, 5
        %v4064 = vrot.slane %v3879, 5
        %v4065 = vrot.slane %v3881, 5
        %v4066 = vrot.slane %v3883, 5
        %v4067 = vrot.slane %v3885, 5
        %v4068 = vrot.slane %v3887, 5
        %v4069 = vrot.slane %v3889, 5
        %v4070 = vrot.slane %v3891, 5
        %v4071 = vrot.slane %v3893, 5
        %v4072 = vrot.slane %v3895, 5
        %v4073 = vrot.slane %v3897, 5
        %v4090 = vrot.slane %v3867, 4
        %v4091 = vrot.slane %v3869, 4
        %v4092 = vrot.slane %v3871, 4
        %v4093 = vrot.slane %v3873, 4
        %v4094 = vrot.slane %v3875, 4
        %v4095 = vrot.slane %v3877, 4
        %v4096 = vrot.slane %v3879, 4
        %v4097 = vrot.slane %v3881, 4
        %v4098 = vrot.slane %v3883, 4
        %v4099 = vrot.slane %v3885, 4
        %v4100 = vrot.slane %v3887, 4
        %v4101 = vrot.slane %v3889, 4
        %v4102 = vrot.slane %v3891, 4
        %v4103 = vrot.slane %v3893, 4
        %v4104 = vrot.slane %v3895, 4
        %v4105 = vrot.slane %v3897, 4
        %v4122 = vsel %vm1601, %v3866, %v3914
        %v4123 = vsel %vm1601, %v3868, %v3915
        %v4124 = vsel %vm1601, %v3870, %v3916
        %v4125 = vsel %vm1601, %v3872, %v3917
        %v4126 = vsel %vm1601, %v3874, %v3918
        %v4127 = vsel %vm1601, %v3876, %v3919
        %v4128 = vsel %vm1601, %v3878, %v3920
        %v4129 = vsel %vm1601, %v3880, %v3921
        %v4130 = vsel %vm1601, %v3882, %v3922
        %v4131 = vsel %vm1601, %v3884, %v3923
        %v4132 = vsel %vm1601, %v3886, %v3924
        %v4133 = vsel %vm1601, %v3888, %v3925
        %v4134 = vsel %vm1601, %v3890, %v3926
        %v4135 = vsel %vm1601, %v3892, %v3927
        %v4136 = vsel %vm1601, %v3894, %v3928
        %v4137 = vsel %vm1601, %v3896, %v3929
        %v4138 = vsel %vm1440, %v4122, %v3962
        %v4139 = vsel %vm1440, %v4123, %v3965
        %v4140 = vsel %vm1440, %v4124, %v3968
        %v4141 = vsel %vm1440, %v4125, %v3971
        %v4142 = vsel %vm1440, %v4126, %v3974
        %v4143 = vsel %vm1440, %v4127, %v3977
        %v4144 = vsel %vm1440, %v4128, %v3980
        %v4145 = vsel %vm1440, %v4129, %v3983
        %v4146 = vsel %vm1440, %v4130, %v3986
        %v4147 = vsel %vm1440, %v4131, %v3989
        %v4148 = vsel %vm1440, %v4132, %v3992
        %v4149 = vsel %vm1440, %v4133, %v3995
        %v4150 = vsel %vm1440, %v4134, %v3998
        %v4151 = vsel %vm1440, %v4135, %v4001
        %v4152 = vsel %vm1440, %v4136, %v4004
        %v4153 = vsel %vm1440, %v4137, %v4007
        %v4154 = vsel %vm1440, %v3963, %v4058
        %v4155 = vsel %vm1440, %v3966, %v4059
        %v4156 = vsel %vm1440, %v3969, %v4060
        %v4157 = vsel %vm1440, %v3972, %v4061
        %v4158 = vsel %vm1440, %v3975, %v4062
        %v4159 = vsel %vm1440, %v3978, %v4063
        %v4160 = vsel %vm1440, %v3981, %v4064
        %v4161 = vsel %vm1440, %v3984, %v4065
        %v4162 = vsel %vm1440, %v3987, %v4066
        %v4163 = vsel %vm1440, %v3990, %v4067
        %v4164 = vsel %vm1440, %v3993, %v4068
        %v4165 = vsel %vm1440, %v3996, %v4069
        %v4166 = vsel %vm1440, %v3999, %v4070
        %v4167 = vsel %vm1440, %v4002, %v4071
        %v4168 = vsel %vm1440, %v4005, %v4072
        %v4169 = vsel %vm1440, %v4008, %v4073
        %v4170 = vsel %vm1650, %v4154, %v4090
        %v4171 = vsel %vm1650, %v4155, %v4091
        %v4172 = vsel %vm1650, %v4156, %v4092
        %v4173 = vsel %vm1650, %v4157, %v4093
        %v4174 = vsel %vm1650, %v4158, %v4094
        %v4175 = vsel %vm1650, %v4159, %v4095
        %v4176 = vsel %vm1650, %v4160, %v4096
        %v4177 = vsel %vm1650, %v4161, %v4097
        %v4178 = vsel %vm1650, %v4162, %v4098
        %v4179 = vsel %vm1650, %v4163, %v4099
        %v4180 = vsel %vm1650, %v4164, %v4100
        %v4181 = vsel %vm1650, %v4165, %v4101
        %v4182 = vsel %vm1650, %v4166, %v4102
        %v4183 = vsel %vm1650, %v4167, %v4103
        %v4184 = vsel %vm1650, %v4168, %v4104
        %v4185 = vsel %vm1650, %v4169, %v4105
        %v4186 = vmax.f32 %v3866, %v4138
        %v4187 = vmax.f32 %v3867, %v3964
        %v4188 = vmax.f32 %v3868, %v4139
        %v4189 = vmax.f32 %v3869, %v3967
        %v4190 = vmax.f32 %v3870, %v4140
        %v4191 = vmax.f32 %v3871, %v3970
        %v4192 = vmax.f32 %v3872, %v4141
        %v4193 = vmax.f32 %v3873, %v3973
        %v4194 = vmax.f32 %v3874, %v4142
        %v4195 = vmax.f32 %v3875, %v3976
        %v4196 = vmax.f32 %v3876, %v4143
        %v4197 = vmax.f32 %v3877, %v3979
        %v4198 = vmax.f32 %v3878, %v4144
        %v4199 = vmax.f32 %v3879, %v3982
        %v4200 = vmax.f32 %v3880, %v4145
        %v4201 = vmax.f32 %v3881, %v3985
        %v4202 = vmax.f32 %v3882, %v4146
        %v4203 = vmax.f32 %v3883, %v3988
        %v4204 = vmax.f32 %v3884, %v4147
        %v4205 = vmax.f32 %v3885, %v3991
        %v4206 = vmax.f32 %v3886, %v4148
        %v4207 = vmax.f32 %v3887, %v3994
        %v4208 = vmax.f32 %v3888, %v4149
        %v4209 = vmax.f32 %v3889, %v3997
        %v4210 = vmax.f32 %v3890, %v4150
        %v4211 = vmax.f32 %v3891, %v4000
        %v4212 = vmax.f32 %v3892, %v4151
        %v4213 = vmax.f32 %v3893, %v4003
        %v4214 = vmax.f32 %v3894, %v4152
        %v4215 = vmax.f32 %v3895, %v4006
        %v4216 = vmax.f32 %v3896, %v4153
        %v4217 = vmax.f32 %v3897, %v4009
        %v4250 = vrot.slane %v4138, 1
        %v4251 = vrot.slane %v3964, 1
        %v4252 = vsel %vm1731, %v4250, %v4251
        %v4253 = vrot.slane %v4170, 1
        %v4254 = vsel %vm1731, %v4251, %v4253
        %v4255 = vrot.slane %v4139, 1
        %v4256 = vrot.slane %v3967, 1
        %v4257 = vsel %vm1731, %v4255, %v4256
        %v4258 = vrot.slane %v4171, 1
        %v4259 = vsel %vm1731, %v4256, %v4258
        %v4260 = vrot.slane %v4140, 1
        %v4261 = vrot.slane %v3970, 1
        %v4262 = vsel %vm1731, %v4260, %v4261
        %v4263 = vrot.slane %v4172, 1
        %v4264 = vsel %vm1731, %v4261, %v4263
        %v4265 = vrot.slane %v4141, 1
        %v4266 = vrot.slane %v3973, 1
        %v4267 = vsel %vm1731, %v4265, %v4266
        %v4268 = vrot.slane %v4173, 1
        %v4269 = vsel %vm1731, %v4266, %v4268
        %v4270 = vrot.slane %v4142, 1
        %v4271 = vrot.slane %v3976, 1
        %v4272 = vsel %vm1731, %v4270, %v4271
        %v4273 = vrot.slane %v4174, 1
        %v4274 = vsel %vm1731, %v4271, %v4273
        %v4275 = vrot.slane %v4143, 1
        %v4276 = vrot.slane %v3979, 1
        %v4277 = vsel %vm1731, %v4275, %v4276
        %v4278 = vrot.slane %v4175, 1
        %v4279 = vsel %vm1731, %v4276, %v4278
        %v4280 = vrot.slane %v4144, 1
        %v4281 = vrot.slane %v3982, 1
        %v4282 = vsel %vm1731, %v4280, %v4281
        %v4283 = vrot.slane %v4176, 1
        %v4284 = vsel %vm1731, %v4281, %v4283
        %v4285 = vrot.slane %v4145, 1
        %v4286 = vrot.slane %v3985, 1
        %v4287 = vsel %vm1731, %v4285, %v4286
        %v4288 = vrot.slane %v4177, 1
        %v4289 = vsel %vm1731, %v4286, %v4288
        %v4290 = vrot.slane %v4146, 1
        %v4291 = vrot.slane %v3988, 1
        %v4292 = vsel %vm1731, %v4290, %v4291
        %v4293 = vrot.slane %v4178, 1
        %v4294 = vsel %vm1731, %v4291, %v4293
        %v4295 = vrot.slane %v4147, 1
        %v4296 = vrot.slane %v3991, 1
        %v4297 = vsel %vm1731, %v4295, %v4296
        %v4298 = vrot.slane %v4179, 1
        %v4299 = vsel %vm1731, %v4296, %v4298
        %v4300 = vrot.slane %v4148, 1
        %v4301 = vrot.slane %v3994, 1
        %v4302 = vsel %vm1731, %v4300, %v4301
        %v4303 = vrot.slane %v4180, 1
        %v4304 = vsel %vm1731, %v4301, %v4303
        %v4305 = vrot.slane %v4149, 1
        %v4306 = vrot.slane %v3997, 1
        %v4307 = vsel %vm1731, %v4305, %v4306
        %v4308 = vrot.slane %v4181, 1
        %v4309 = vsel %vm1731, %v4306, %v4308
        %v4310 = vrot.slane %v4150, 1
        %v4311 = vrot.slane %v4000, 1
        %v4312 = vsel %vm1731, %v4310, %v4311
        %v4313 = vrot.slane %v4182, 1
        %v4314 = vsel %vm1731, %v4311, %v4313
        %v4315 = vrot.slane %v4151, 1
        %v4316 = vrot.slane %v4003, 1
        %v4317 = vsel %vm1731, %v4315, %v4316
        %v4318 = vrot.slane %v4183, 1
        %v4319 = vsel %vm1731, %v4316, %v4318
        %v4320 = vrot.slane %v4152, 1
        %v4321 = vrot.slane %v4006, 1
        %v4322 = vsel %vm1731, %v4320, %v4321
        %v4323 = vrot.slane %v4184, 1
        %v4324 = vsel %vm1731, %v4321, %v4323
        %v4325 = vrot.slane %v4153, 1
        %v4326 = vrot.slane %v4009, 1
        %v4327 = vsel %vm1731, %v4325, %v4326
        %v4328 = vrot.slane %v4185, 1
        %v4329 = vsel %vm1731, %v4326, %v4328
        %v4362 = vmax.f32 %v4186, %v4252
        %v4363 = vmax.f32 %v4187, %v4254
        %v4364 = vmax.f32 %v4188, %v4257
        %v4365 = vmax.f32 %v4189, %v4259
        %v4366 = vmax.f32 %v4190, %v4262
        %v4367 = vmax.f32 %v4191, %v4264
        %v4368 = vmax.f32 %v4192, %v4267
        %v4369 = vmax.f32 %v4193, %v4269
        %v4370 = vmax.f32 %v4194, %v4272
        %v4371 = vmax.f32 %v4195, %v4274
        %v4372 = vmax.f32 %v4196, %v4277
        %v4373 = vmax.f32 %v4197, %v4279
        %v4374 = vmax.f32 %v4198, %v4282
        %v4375 = vmax.f32 %v4199, %v4284
        %v4376 = vmax.f32 %v4200, %v4287
        %v4377 = vmax.f32 %v4201, %v4289
        %v4378 = vmax.f32 %v4202, %v4292
        %v4379 = vmax.f32 %v4203, %v4294
        %v4380 = vmax.f32 %v4204, %v4297
        %v4381 = vmax.f32 %v4205, %v4299
        %v4382 = vmax.f32 %v4206, %v4302
        %v4383 = vmax.f32 %v4207, %v4304
        %v4384 = vmax.f32 %v4208, %v4307
        %v4385 = vmax.f32 %v4209, %v4309
        %v4386 = vmax.f32 %v4210, %v4312
        %v4387 = vmax.f32 %v4211, %v4314
        %v4388 = vmax.f32 %v4212, %v4317
        %v4389 = vmax.f32 %v4213, %v4319
        %v4390 = vmax.f32 %v4214, %v4322
        %v4391 = vmax.f32 %v4215, %v4324
        %v4392 = vmax.f32 %v4216, %v4327
        %v4393 = vmax.f32 %v4217, %v4329
        %v4394 = vrot.slane %v4138, 3
        %v4395 = vrot.slane %v3964, 3
        %v4396 = vsel %vm1876, %v4394, %v4395
        %v4397 = vrot.slane %v4170, 3
        %v4398 = vsel %vm1876, %v4395, %v4397
        %v4399 = vrot.slane %v4139, 3
        %v4400 = vrot.slane %v3967, 3
        %v4401 = vsel %vm1876, %v4399, %v4400
        %v4402 = vrot.slane %v4171, 3
        %v4403 = vsel %vm1876, %v4400, %v4402
        %v4404 = vrot.slane %v4140, 3
        %v4405 = vrot.slane %v3970, 3
        %v4406 = vsel %vm1876, %v4404, %v4405
        %v4407 = vrot.slane %v4172, 3
        %v4408 = vsel %vm1876, %v4405, %v4407
        %v4409 = vrot.slane %v4141, 3
        %v4410 = vrot.slane %v3973, 3
        %v4411 = vsel %vm1876, %v4409, %v4410
        %v4412 = vrot.slane %v4173, 3
        %v4413 = vsel %vm1876, %v4410, %v4412
        %v4414 = vrot.slane %v4142, 3
        %v4415 = vrot.slane %v3976, 3
        %v4416 = vsel %vm1876, %v4414, %v4415
        %v4417 = vrot.slane %v4174, 3
        %v4418 = vsel %vm1876, %v4415, %v4417
        %v4419 = vrot.slane %v4143, 3
        %v4420 = vrot.slane %v3979, 3
        %v4421 = vsel %vm1876, %v4419, %v4420
        %v4422 = vrot.slane %v4175, 3
        %v4423 = vsel %vm1876, %v4420, %v4422
        %v4424 = vrot.slane %v4144, 3
        %v4425 = vrot.slane %v3982, 3
        %v4426 = vsel %vm1876, %v4424, %v4425
        %v4427 = vrot.slane %v4176, 3
        %v4428 = vsel %vm1876, %v4425, %v4427
        %v4429 = vrot.slane %v4145, 3
        %v4430 = vrot.slane %v3985, 3
        %v4431 = vsel %vm1876, %v4429, %v4430
        %v4432 = vrot.slane %v4177, 3
        %v4433 = vsel %vm1876, %v4430, %v4432
        %v4434 = vrot.slane %v4146, 3
        %v4435 = vrot.slane %v3988, 3
        %v4436 = vsel %vm1876, %v4434, %v4435
        %v4437 = vrot.slane %v4178, 3
        %v4438 = vsel %vm1876, %v4435, %v4437
        %v4439 = vrot.slane %v4147, 3
        %v4440 = vrot.slane %v3991, 3
        %v4441 = vsel %vm1876, %v4439, %v4440
        %v4442 = vrot.slane %v4179, 3
        %v4443 = vsel %vm1876, %v4440, %v4442
        %v4444 = vrot.slane %v4148, 3
        %v4445 = vrot.slane %v3994, 3
        %v4446 = vsel %vm1876, %v4444, %v4445
        %v4447 = vrot.slane %v4180, 3
        %v4448 = vsel %vm1876, %v4445, %v4447
        %v4449 = vrot.slane %v4149, 3
        %v4450 = vrot.slane %v3997, 3
        %v4451 = vsel %vm1876, %v4449, %v4450
        %v4452 = vrot.slane %v4181, 3
        %v4453 = vsel %vm1876, %v4450, %v4452
        %v4454 = vrot.slane %v4150, 3
        %v4455 = vrot.slane %v4000, 3
        %v4456 = vsel %vm1876, %v4454, %v4455
        %v4457 = vrot.slane %v4182, 3
        %v4458 = vsel %vm1876, %v4455, %v4457
        %v4459 = vrot.slane %v4151, 3
        %v4460 = vrot.slane %v4003, 3
        %v4461 = vsel %vm1876, %v4459, %v4460
        %v4462 = vrot.slane %v4183, 3
        %v4463 = vsel %vm1876, %v4460, %v4462
        %v4464 = vrot.slane %v4152, 3
        %v4465 = vrot.slane %v4006, 3
        %v4466 = vsel %vm1876, %v4464, %v4465
        %v4467 = vrot.slane %v4184, 3
        %v4468 = vsel %vm1876, %v4465, %v4467
        %v4469 = vrot.slane %v4153, 3
        %v4470 = vrot.slane %v4009, 3
        %v4471 = vsel %vm1876, %v4469, %v4470
        %v4472 = vrot.slane %v4185, 3
        %v4473 = vsel %vm1876, %v4470, %v4472
        %v4506 = vmax.f32 %v4362, %v4396
        %v4507 = vmax.f32 %v4363, %v4398
        %v4508 = vmax.f32 %v4364, %v4401
        %v4509 = vmax.f32 %v4365, %v4403
        %v4510 = vmax.f32 %v4366, %v4406
        %v4511 = vmax.f32 %v4367, %v4408
        %v4512 = vmax.f32 %v4368, %v4411
        %v4513 = vmax.f32 %v4369, %v4413
        %v4514 = vmax.f32 %v4370, %v4416
        %v4515 = vmax.f32 %v4371, %v4418
        %v4516 = vmax.f32 %v4372, %v4421
        %v4517 = vmax.f32 %v4373, %v4423
        %v4518 = vmax.f32 %v4374, %v4426
        %v4519 = vmax.f32 %v4375, %v4428
        %v4520 = vmax.f32 %v4376, %v4431
        %v4521 = vmax.f32 %v4377, %v4433
        %v4522 = vmax.f32 %v4378, %v4436
        %v4523 = vmax.f32 %v4379, %v4438
        %v4524 = vmax.f32 %v4380, %v4441
        %v4525 = vmax.f32 %v4381, %v4443
        %v4526 = vmax.f32 %v4382, %v4446
        %v4527 = vmax.f32 %v4383, %v4448
        %v4528 = vmax.f32 %v4384, %v4451
        %v4529 = vmax.f32 %v4385, %v4453
        %v4530 = vmax.f32 %v4386, %v4456
        %v4531 = vmax.f32 %v4387, %v4458
        %v4532 = vmax.f32 %v4388, %v4461
        %v4533 = vmax.f32 %v4389, %v4463
        %v4534 = vmax.f32 %v4390, %v4466
        %v4535 = vmax.f32 %v4391, %v4468
        %v4536 = vmax.f32 %v4392, %v4471
        %v4537 = vmax.f32 %v4393, %v4473
        %v4538 = vrot.slane %v4138, 4
        %v4539 = vrot.slane %v3964, 4
        %v4540 = vsel %vm2021, %v4538, %v4539
        %v4541 = vrot.slane %v4170, 4
        %v4542 = vsel %vm2021, %v4539, %v4541
        %v4543 = vrot.slane %v4139, 4
        %v4544 = vrot.slane %v3967, 4
        %v4545 = vsel %vm2021, %v4543, %v4544
        %v4546 = vrot.slane %v4171, 4
        %v4547 = vsel %vm2021, %v4544, %v4546
        %v4548 = vrot.slane %v4140, 4
        %v4549 = vrot.slane %v3970, 4
        %v4550 = vsel %vm2021, %v4548, %v4549
        %v4551 = vrot.slane %v4172, 4
        %v4552 = vsel %vm2021, %v4549, %v4551
        %v4553 = vrot.slane %v4141, 4
        %v4554 = vrot.slane %v3973, 4
        %v4555 = vsel %vm2021, %v4553, %v4554
        %v4556 = vrot.slane %v4173, 4
        %v4557 = vsel %vm2021, %v4554, %v4556
        %v4558 = vrot.slane %v4142, 4
        %v4559 = vrot.slane %v3976, 4
        %v4560 = vsel %vm2021, %v4558, %v4559
        %v4561 = vrot.slane %v4174, 4
        %v4562 = vsel %vm2021, %v4559, %v4561
        %v4563 = vrot.slane %v4143, 4
        %v4564 = vrot.slane %v3979, 4
        %v4565 = vsel %vm2021, %v4563, %v4564
        %v4566 = vrot.slane %v4175, 4
        %v4567 = vsel %vm2021, %v4564, %v4566
        %v4568 = vrot.slane %v4144, 4
        %v4569 = vrot.slane %v3982, 4
        %v4570 = vsel %vm2021, %v4568, %v4569
        %v4571 = vrot.slane %v4176, 4
        %v4572 = vsel %vm2021, %v4569, %v4571
        %v4573 = vrot.slane %v4145, 4
        %v4574 = vrot.slane %v3985, 4
        %v4575 = vsel %vm2021, %v4573, %v4574
        %v4576 = vrot.slane %v4177, 4
        %v4577 = vsel %vm2021, %v4574, %v4576
        %v4578 = vrot.slane %v4146, 4
        %v4579 = vrot.slane %v3988, 4
        %v4580 = vsel %vm2021, %v4578, %v4579
        %v4581 = vrot.slane %v4178, 4
        %v4582 = vsel %vm2021, %v4579, %v4581
        %v4583 = vrot.slane %v4147, 4
        %v4584 = vrot.slane %v3991, 4
        %v4585 = vsel %vm2021, %v4583, %v4584
        %v4586 = vrot.slane %v4179, 4
        %v4587 = vsel %vm2021, %v4584, %v4586
        %v4588 = vrot.slane %v4148, 4
        %v4589 = vrot.slane %v3994, 4
        %v4590 = vsel %vm2021, %v4588, %v4589
        %v4591 = vrot.slane %v4180, 4
        %v4592 = vsel %vm2021, %v4589, %v4591
        %v4593 = vrot.slane %v4149, 4
        %v4594 = vrot.slane %v3997, 4
        %v4595 = vsel %vm2021, %v4593, %v4594
        %v4596 = vrot.slane %v4181, 4
        %v4597 = vsel %vm2021, %v4594, %v4596
        %v4598 = vrot.slane %v4150, 4
        %v4599 = vrot.slane %v4000, 4
        %v4600 = vsel %vm2021, %v4598, %v4599
        %v4601 = vrot.slane %v4182, 4
        %v4602 = vsel %vm2021, %v4599, %v4601
        %v4603 = vrot.slane %v4151, 4
        %v4604 = vrot.slane %v4003, 4
        %v4605 = vsel %vm2021, %v4603, %v4604
        %v4606 = vrot.slane %v4183, 4
        %v4607 = vsel %vm2021, %v4604, %v4606
        %v4608 = vrot.slane %v4152, 4
        %v4609 = vrot.slane %v4006, 4
        %v4610 = vsel %vm2021, %v4608, %v4609
        %v4611 = vrot.slane %v4184, 4
        %v4612 = vsel %vm2021, %v4609, %v4611
        %v4613 = vrot.slane %v4153, 4
        %v4614 = vrot.slane %v4009, 4
        %v4615 = vsel %vm2021, %v4613, %v4614
        %v4616 = vrot.slane %v4185, 4
        %v4617 = vsel %vm2021, %v4614, %v4616
        %v4650 = vmax.f32 %v4506, %v4540
        %v4651 = vmax.f32 %v4507, %v4542
        %v4652 = vmax.f32 %v4508, %v4545
        %v4653 = vmax.f32 %v4509, %v4547
        %v4654 = vmax.f32 %v4510, %v4550
        %v4655 = vmax.f32 %v4511, %v4552
        %v4656 = vmax.f32 %v4512, %v4555
        %v4657 = vmax.f32 %v4513, %v4557
        %v4658 = vmax.f32 %v4514, %v4560
        %v4659 = vmax.f32 %v4515, %v4562
        %v4660 = vmax.f32 %v4516, %v4565
        %v4661 = vmax.f32 %v4517, %v4567
        %v4662 = vmax.f32 %v4518, %v4570
        %v4663 = vmax.f32 %v4519, %v4572
        %v4664 = vmax.f32 %v4520, %v4575
        %v4665 = vmax.f32 %v4521, %v4577
        %v4666 = vmax.f32 %v4522, %v4580
        %v4667 = vmax.f32 %v4523, %v4582
        %v4668 = vmax.f32 %v4524, %v4585
        %v4669 = vmax.f32 %v4525, %v4587
        %v4670 = vmax.f32 %v4526, %v4590
        %v4671 = vmax.f32 %v4527, %v4592
        %v4672 = vmax.f32 %v4528, %v4595
        %v4673 = vmax.f32 %v4529, %v4597
        %v4674 = vmax.f32 %v4530, %v4600
        %v4675 = vmax.f32 %v4531, %v4602
        %v4676 = vmax.f32 %v4532, %v4605
        %v4677 = vmax.f32 %v4533, %v4607
        %v4678 = vmax.f32 %v4534, %v4610
        %v4679 = vmax.f32 %v4535, %v4612
        %v4680 = vmax.f32 %v4536, %v4615
        %v4681 = vmax.f32 %v4537, %v4617
        %v4682 = vpack.c.bf16 %v4651, %v4650
        %v4683 = vpack.c.bf16 %v4653, %v4652
        %v4684 = vpack.c.bf16 %v4655, %v4654
        %v4685 = vpack.c.bf16 %v4657, %v4656
        %v4686 = vpack.c.bf16 %v4659, %v4658
        %v4687 = vpack.c.bf16 %v4661, %v4660
        %v4688 = vpack.c.bf16 %v4663, %v4662
        %v4689 = vpack.c.bf16 %v4665, %v4664
        %v4690 = vpack.c.bf16 %v4667, %v4666
        %v4691 = vpack.c.bf16 %v4669, %v4668
        %v4692 = vpack.c.bf16 %v4671, %v4670
        %v4693 = vpack.c.bf16 %v4673, %v4672
        %v4694 = vpack.c.bf16 %v4675, %v4674
        %v4695 = vpack.c.bf16 %v4677, %v4676
        %v4696 = vpack.c.bf16 %v4679, %v4678
        %v4697 = vpack.c.bf16 %v4681, %v4680
        %s4698 = scalar_lea.vmem %s5, 12
        %v4699 = vld [vmem:[%s4698] sm:$0xf]
        %v4701 = vsel %vm646, %v4682, 0
        %v4704 = vsel %vm646, %v4683, 0
        %v4707 = vsel %vm646, %v4684, 0
        %v4710 = vsel %vm646, %v4685, 0
        %v4713 = vsel %vm646, %v4686, 0
        %v4716 = vsel %vm646, %v4687, 0
        %v4719 = vsel %vm646, %v4688, 0
        %v4722 = vsel %vm646, %v4689, 0
        %v4725 = vsel %vm646, %v4690, 0
        %v4728 = vsel %vm646, %v4691, 0
        %v4731 = vsel %vm646, %v4692, 0
        %v4734 = vsel %vm646, %v4693, 0
        %v4737 = vsel %vm646, %v4694, 0
        %v4740 = vsel %vm646, %v4695, 0
        %v4743 = vsel %vm646, %v4696, 0
        %v4746 = vsel %vm646, %v4697, 0
        %v4749 = vsel %vm2021, %v4699, 0
        %4751 = vmatprep.subr.bf16.mxu0 0
        %4752 = vmatpush1.bf16.msra.mxu0 %v4749
        %4753 = vmatprep.subr.bf16.mxu0 0
        %4754 = vmatpush1.bf16.msra.mxu0 0
        %4755 = vmatprep.subr.bf16.mxu0 0
        %4756 = vmatpush1.bf16.msra.mxu0 0
        %4757 = vmatprep.subr.bf16.mxu0 0
        %4758 = vmatpush1.bf16.msra.mxu0 0
        %4759 = vmatprep.subr.bf16.mxu0 0
        %4760 = vmatpush1.bf16.msra.mxu0 0
        %4761 = vmatprep.subr.bf16.mxu0 0
        %4762 = vmatpush1.bf16.msra.mxu0 0
        %4763 = vmatprep.subr.bf16.mxu0 0
        %4764 = vmatpush1.bf16.msra.mxu0 0
        %4765 = vmatprep.subr.bf16.mxu0 0
        %4766 = vmatpush1.bf16.msra.mxu0 0
        %4767 = vmatprep.subr.bf16.mxu0 0
        %4768 = vmatpush1.bf16.msra.mxu0 0
        %4769 = vmatprep.subr.bf16.mxu0 0
        %4770 = vmatpush1.bf16.msra.mxu0 0
        %4771 = vmatprep.subr.bf16.mxu0 0
        %4772 = vmatpush1.bf16.msra.mxu0 0
        %4773 = vmatprep.subr.bf16.mxu0 0
        %4774 = vmatpush1.bf16.msra.mxu0 0
        %4775 = vmatprep.subr.bf16.mxu0 0
        %4776 = vmatpush1.bf16.msra.mxu0 0
        %4777 = vmatprep.subr.bf16.mxu0 0
        %4778 = vmatpush1.bf16.msra.mxu0 0
        %4779 = vmatprep.subr.bf16.mxu0 0
        %4780 = vmatpush1.bf16.msra.mxu0 0
        %4781 = vmatprep.subr.bf16.mxu0 0
        %4782 = vmatpush1.bf16.msra.mxu0 0
        %4783 = vmatprep.mubr.bf16.mxu0 0
        %4784 = vmatmul.mubr.bf16.gmra.mrb[0].mxu0 %v4701
        %v4785 = vpop.f32.mrb[0].mxu0
        %v4786 = vadd.f32 0.0, %v4785
        %v4787 = vpop.f32.mrb[0].mxu0
        %v4788 = vpop.f32.mrb[0].mxu0
        %v4789 = vadd.f32 0.0, %v4788
        %v4790 = vpop.f32.mrb[0].mxu0
        %4791 = vmatprep.mubr.bf16.mxu0 0
        %4792 = vmatmul.mubr.bf16.gmra.mrb[0].mxu0 %v4704
        %v4793 = vpop.f32.mrb[0].mxu0
        %v4794 = vadd.f32 0.0, %v4793
        %v4795 = vpop.f32.mrb[0].mxu0
        %v4796 = vpop.f32.mrb[0].mxu0
        %v4797 = vadd.f32 0.0, %v4796
        %v4798 = vpop.f32.mrb[0].mxu0
        %4799 = vmatprep.mubr.bf16.mxu0 0
        %4800 = vmatmul.mubr.bf16.gmra.mrb[0].mxu0 %v4707
        %v4801 = vpop.f32.mrb[0].mxu0
        %v4802 = vadd.f32 0.0, %v4801
        %v4803 = vpop.f32.mrb[0].mxu0
        %v4804 = vpop.f32.mrb[0].mxu0
        %v4805 = vadd.f32 0.0, %v4804
        %v4806 = vpop.f32.mrb[0].mxu0
        %4807 = vmatprep.mubr.bf16.mxu0 0
        %4808 = vmatmul.mubr.bf16.gmra.mrb[0].mxu0 %v4710
        %v4809 = vpop.f32.mrb[0].mxu0
        %v4810 = vadd.f32 0.0, %v4809
        %v4811 = vpop.f32.mrb[0].mxu0
        %v4812 = vpop.f32.mrb[0].mxu0
        %v4813 = vadd.f32 0.0, %v4812
        %v4814 = vpop.f32.mrb[0].mxu0
        %4815 = vmatprep.mubr.bf16.mxu0 0
        %4816 = vmatmul.mubr.bf16.gmra.mrb[0].mxu0 %v4713
        %v4817 = vpop.f32.mrb[0].mxu0
        %v4818 = vadd.f32 0.0, %v4817
        %v4819 = vpop.f32.mrb[0].mxu0
        %v4820 = vpop.f32.mrb[0].mxu0
        %v4821 = vadd.f32 0.0, %v4820
        %v4822 = vpop.f32.mrb[0].mxu0
        %4823 = vmatprep.mubr.bf16.mxu0 0
        %4824 = vmatmul.mubr.bf16.gmra.mrb[0].mxu0 %v4716
        %v4825 = vpop.f32.mrb[0].mxu0
        %v4826 = vadd.f32 0.0, %v4825
        %v4827 = vpop.f32.mrb[0].mxu0
        %v4828 = vpop.f32.mrb[0].mxu0
        %v4829 = vadd.f32 0.0, %v4828
        %v4830 = vpop.f32.mrb[0].mxu0
        %4831 = vmatprep.mubr.bf16.mxu0 0
        %4832 = vmatmul.mubr.bf16.gmra.mrb[0].mxu0 %v4719
        %v4833 = vpop.f32.mrb[0].mxu0
        %v4834 = vadd.f32 0.0, %v4833
        %v4835 = vpop.f32.mrb[0].mxu0
        %v4836 = vpop.f32.mrb[0].mxu0
        %v4837 = vadd.f32 0.0, %v4836
        %v4838 = vpop.f32.mrb[0].mxu0
        %4839 = vmatprep.mubr.bf16.mxu0 0
        %4840 = vmatmul.mubr.bf16.gmra.mrb[0].mxu0 %v4722
        %v4841 = vpop.f32.mrb[0].mxu0
        %v4842 = vadd.f32 0.0, %v4841
        %v4843 = vpop.f32.mrb[0].mxu0
        %v4844 = vpop.f32.mrb[0].mxu0
        %v4845 = vadd.f32 0.0, %v4844
        %v4846 = vpop.f32.mrb[0].mxu0
        %4847 = vmatprep.mubr.bf16.mxu0 0
        %4848 = vmatmul.mubr.bf16.gmra.mrb[0].mxu0 %v4725
        %v4849 = vpop.f32.mrb[0].mxu0
        %v4850 = vadd.f32 0.0, %v4849
        %v4851 = vpop.f32.mrb[0].mxu0
        %v4852 = vpop.f32.mrb[0].mxu0
        %v4853 = vadd.f32 0.0, %v4852
        %v4854 = vpop.f32.mrb[0].mxu0
        %4855 = vmatprep.mubr.bf16.mxu0 0
        %4856 = vmatmul.mubr.bf16.gmra.mrb[0].mxu0 %v4728
        %v4857 = vpop.f32.mrb[0].mxu0
        %v4858 = vadd.f32 0.0, %v4857
        %v4859 = vpop.f32.mrb[0].mxu0
        %v4860 = vpop.f32.mrb[0].mxu0
        %v4861 = vadd.f32 0.0, %v4860
        %v4862 = vpop.f32.mrb[0].mxu0
        %4863 = vmatprep.mubr.bf16.mxu0 0
        %4864 = vmatmul.mubr.bf16.gmra.mrb[0].mxu0 %v4731
        %v4865 = vpop.f32.mrb[0].mxu0
        %v4866 = vadd.f32 0.0, %v4865
        %v4867 = vpop.f32.mrb[0].mxu0
        %v4868 = vpop.f32.mrb[0].mxu0
        %v4869 = vadd.f32 0.0, %v4868
        %v4870 = vpop.f32.mrb[0].mxu0
        %4871 = vmatprep.mubr.bf16.mxu0 0
        %4872 = vmatmul.mubr.bf16.gmra.mrb[0].mxu0 %v4734
        %v4873 = vpop.f32.mrb[0].mxu0
        %v4874 = vadd.f32 0.0, %v4873
        %v4875 = vpop.f32.mrb[0].mxu0
        %v4876 = vpop.f32.mrb[0].mxu0
        %v4877 = vadd.f32 0.0, %v4876
        %v4878 = vpop.f32.mrb[0].mxu0
        %4879 = vmatprep.mubr.bf16.mxu0 0
        %4880 = vmatmul.mubr.bf16.gmra.mrb[0].mxu0 %v4737
        %v4881 = vpop.f32.mrb[0].mxu0
        %v4882 = vadd.f32 0.0, %v4881
        %v4883 = vpop.f32.mrb[0].mxu0
        %v4884 = vpop.f32.mrb[0].mxu0
        %v4885 = vadd.f32 0.0, %v4884
        %v4886 = vpop.f32.mrb[0].mxu0
        %4887 = vmatprep.mubr.bf16.mxu0 0
        %4888 = vmatmul.mubr.bf16.gmra.mrb[0].mxu0 %v4740
        %v4889 = vpop.f32.mrb[0].mxu0
        %v4890 = vadd.f32 0.0, %v4889
        %v4891 = vpop.f32.mrb[0].mxu0
        %v4892 = vpop.f32.mrb[0].mxu0
        %v4893 = vadd.f32 0.0, %v4892
        %v4894 = vpop.f32.mrb[0].mxu0
        %4895 = vmatprep.mubr.bf16.mxu0 0
        %4896 = vmatmul.mubr.bf16.gmra.mrb[0].mxu0 %v4743
        %v4897 = vpop.f32.mrb[0].mxu0
        %v4898 = vadd.f32 0.0, %v4897
        %v4899 = vpop.f32.mrb[0].mxu0
        %v4900 = vpop.f32.mrb[0].mxu0
        %v4901 = vadd.f32 0.0, %v4900
        %v4902 = vpop.f32.mrb[0].mxu0
        %4903 = vmatprep.mubr.bf16.mxu0 0
        %4904 = vmatmul.mubr.bf16.gmra.mrb[0].mxu0 %v4746
        %v4905 = vpop.f32.mrb[0].mxu0
        %v4906 = vadd.f32 0.0, %v4905
        %v4907 = vpop.f32.mrb[0].mxu0
        %v4908 = vpop.f32.mrb[0].mxu0
        %v4909 = vadd.f32 0.0, %v4908
        %v4910 = vpop.f32.mrb[0].mxu0
        %4911 = vdwg.mxu0
        %v4912 = vadd.f32 %v3744, %v4786
        %v4913 = vadd.f32 %v3745, %v4789
        %v4914 = vadd.f32 %v3746, %v4794
        %v4915 = vadd.f32 %v3747, %v4797
        %v4916 = vadd.f32 %v3748, %v4802
        %v4917 = vadd.f32 %v3749, %v4805
        %v4918 = vadd.f32 %v3750, %v4810
        %v4919 = vadd.f32 %v3751, %v4813
        %v4920 = vadd.f32 %v3752, %v4818
        %v4921 = vadd.f32 %v3753, %v4821
        %v4922 = vadd.f32 %v3754, %v4826
        %v4923 = vadd.f32 %v3755, %v4829
        %v4924 = vadd.f32 %v3756, %v4834
        %v4925 = vadd.f32 %v3757, %v4837
        %v4926 = vadd.f32 %v3758, %v4842
        %v4927 = vadd.f32 %v3759, %v4845
        %v4928 = vadd.f32 %v3760, %v4850
        %v4929 = vadd.f32 %v3761, %v4853
        %v4930 = vadd.f32 %v3762, %v4858
        %v4931 = vadd.f32 %v3763, %v4861
        %v4932 = vadd.f32 %v3764, %v4866
        %v4933 = vadd.f32 %v3765, %v4869
        %v4934 = vadd.f32 %v3766, %v4874
        %v4935 = vadd.f32 %v3767, %v4877
        %v4936 = vadd.f32 %v3768, %v4882
        %v4937 = vadd.f32 %v3769, %v4885
        %v4938 = vadd.f32 %v3770, %v4890
        %v4939 = vadd.f32 %v3771, %v4893
        %v4940 = vadd.f32 %v3772, %v4898
        %v4941 = vadd.f32 %v3773, %v4901
        %v4942 = vadd.f32 %v3774, %v4906
        %v4943 = vadd.f32 %v3775, %v4909
        %v4944 = vld [vmem:[%s8] sm:$0xff]
        %v4945 = vld [vmem:[%s8 + $0x8] sm:$0xff]
        %v4946 = vld [vmem:[#allocation7] sm:$0x1]
        %v4947 = vld [vmem:[%s7] sm:$0x1]
        %v4948 = vsel %vm433, %v4912, 0.0
        %v4949 = vsel %vm433, %v4913, 0.0
        %v4950 = vadd.f32 %v4948, %v4949
        %v4951 = vsel %vm433, %v4914, 0.0
        %v4952 = vadd.f32 %v4950, %v4951
        %v4953 = vsel %vm433, %v4915, 0.0
        %v4954 = vadd.f32 %v4952, %v4953
        %v4955 = vsel %vm433, %v4916, 0.0
        %v4956 = vadd.f32 %v4954, %v4955
        %v4957 = vsel %vm433, %v4917, 0.0
        %v4958 = vadd.f32 %v4956, %v4957
        %v4959 = vsel %vm433, %v4918, 0.0
        %v4960 = vadd.f32 %v4958, %v4959
        %v4961 = vsel %vm433, %v4919, 0.0
        %v4962 = vadd.f32 %v4960, %v4961
        %v4963 = vsel %vm433, %v4920, 0.0
        %v4964 = vadd.f32 %v4962, %v4963
        %v4965 = vsel %vm433, %v4921, 0.0
        %v4966 = vadd.f32 %v4964, %v4965
        %v4967 = vsel %vm433, %v4922, 0.0
        %v4968 = vadd.f32 %v4966, %v4967
        %v4969 = vsel %vm433, %v4923, 0.0
        %v4970 = vadd.f32 %v4968, %v4969
        %v4971 = vsel %vm433, %v4924, 0.0
        %v4972 = vadd.f32 %v4970, %v4971
        %v4973 = vsel %vm433, %v4925, 0.0
        %v4974 = vadd.f32 %v4972, %v4973
        %v4975 = vsel %vm433, %v4926, 0.0
        %v4976 = vadd.f32 %v4974, %v4975
        %v4977 = vsel %vm433, %v4927, 0.0
        %v4978 = vadd.f32 %v4976, %v4977
        %v4979 = vsel %vm433, %v4928, 0.0
        %v4980 = vadd.f32 %v4978, %v4979
        %v4981 = vsel %vm433, %v4929, 0.0
        %v4982 = vadd.f32 %v4980, %v4981
        %v4983 = vsel %vm433, %v4930, 0.0
        %v4984 = vadd.f32 %v4982, %v4983
        %v4985 = vsel %vm433, %v4931, 0.0
        %v4986 = vadd.f32 %v4984, %v4985
        %v4987 = vsel %vm433, %v4932, 0.0
        %v4988 = vadd.f32 %v4986, %v4987
        %v4989 = vsel %vm433, %v4933, 0.0
        %v4990 = vadd.f32 %v4988, %v4989
        %v4991 = vsel %vm433, %v4934, 0.0
        %v4992 = vadd.f32 %v4990, %v4991
        %v4993 = vsel %vm433, %v4935, 0.0
        %v4994 = vadd.f32 %v4992, %v4993
        %v4995 = vsel %vm433, %v4936, 0.0
        %v4996 = vadd.f32 %v4994, %v4995
        %v4997 = vsel %vm433, %v4937, 0.0
        %v4998 = vadd.f32 %v4996, %v4997
        %v4999 = vsel %vm433, %v4938, 0.0
        %v5000 = vadd.f32 %v4998, %v4999
        %v5001 = vsel %vm433, %v4939, 0.0
        %v5002 = vadd.f32 %v5000, %v5001
        %v5003 = vsel %vm433, %v4940, 0.0
        %v5004 = vadd.f32 %v5002, %v5003
        %v5005 = vsel %vm433, %v4941, 0.0
        %v5006 = vadd.f32 %v5004, %v5005
        %v5007 = vsel %vm433, %v4942, 0.0
        %v5008 = vadd.f32 %v5006, %v5007
        %v5009 = vsel %vm433, %v4943, 0.0
        %v5010 = vadd.f32 %v5008, %v5009
        %v5011 = vrot.slane %v5010, 4
        %v5012 = vadd.f32 %v5010, %v5011
        %v5013 = vrot.slane %v5012, 2
        %v5014 = vadd.f32 %v5012, %v5013
        %v5015 = vrot.slane %v5014, 1
        %v5016 = vadd.f32 %v5014, %v5015
        %v5017 = vmul.f32 %v4912, %v4912
        %v5018 = vmul.f32 %v4913, %v4913
        %v5019 = vmul.f32 %v4914, %v4914
        %v5020 = vmul.f32 %v4915, %v4915
        %v5021 = vmul.f32 %v4916, %v4916
        %v5022 = vmul.f32 %v4917, %v4917
        %v5023 = vmul.f32 %v4918, %v4918
        %v5024 = vmul.f32 %v4919, %v4919
        %v5025 = vmul.f32 %v4920, %v4920
        %v5026 = vmul.f32 %v4921, %v4921
        %v5027 = vmul.f32 %v4922, %v4922
        %v5028 = vmul.f32 %v4923, %v4923
        %v5029 = vmul.f32 %v4924, %v4924
        %v5030 = vmul.f32 %v4925, %v4925
        %v5031 = vmul.f32 %v4926, %v4926
        %v5032 = vmul.f32 %v4927, %v4927
        %v5033 = vmul.f32 %v4928, %v4928
        %v5034 = vmul.f32 %v4929, %v4929
        %v5035 = vmul.f32 %v4930, %v4930
        %v5036 = vmul.f32 %v4931, %v4931
        %v5037 = vmul.f32 %v4932, %v4932
        %v5038 = vmul.f32 %v4933, %v4933
        %v5039 = vmul.f32 %v4934, %v4934
        %v5040 = vmul.f32 %v4935, %v4935
        %v5041 = vmul.f32 %v4936, %v4936
        %v5042 = vmul.f32 %v4937, %v4937
        %v5043 = vmul.f32 %v4938, %v4938
        %v5044 = vmul.f32 %v4939, %v4939
        %v5045 = vmul.f32 %v4940, %v4940
        %v5046 = vmul.f32 %v4941, %v4941
        %v5047 = vmul.f32 %v4942, %v4942
        %v5048 = vmul.f32 %v4943, %v4943
        %v5049 = vsel %vm433, %v5017, 0.0
        %v5050 = vsel %vm433, %v5018, 0.0
        %v5051 = vadd.f32 %v5049, %v5050
        %v5052 = vsel %vm433, %v5019, 0.0
        %v5053 = vadd.f32 %v5051, %v5052
        %v5054 = vsel %vm433, %v5020, 0.0
        %v5055 = vadd.f32 %v5053, %v5054
        %v5056 = vsel %vm433, %v5021, 0.0
        %v5057 = vadd.f32 %v5055, %v5056
        %v5058 = vsel %vm433, %v5022, 0.0
        %v5059 = vadd.f32 %v5057, %v5058
        %v5060 = vsel %vm433, %v5023, 0.0
        %v5061 = vadd.f32 %v5059, %v5060
        %v5062 = vsel %vm433, %v5024, 0.0
        %v5063 = vadd.f32 %v5061, %v5062
        %v5064 = vsel %vm433, %v5025, 0.0
        %v5065 = vadd.f32 %v5063, %v5064
        %v5066 = vsel %vm433, %v5026, 0.0
        %v5067 = vadd.f32 %v5065, %v5066
        %v5068 = vsel %vm433, %v5027, 0.0
        %v5069 = vadd.f32 %v5067, %v5068
        %v5070 = vsel %vm433, %v5028, 0.0
        %v5071 = vadd.f32 %v5069, %v5070
        %v5072 = vsel %vm433, %v5029, 0.0
        %v5073 = vadd.f32 %v5071, %v5072
        %v5074 = vsel %vm433, %v5030, 0.0
        %v5075 = vadd.f32 %v5073, %v5074
        %v5076 = vsel %vm433, %v5031, 0.0
        %v5077 = vadd.f32 %v5075, %v5076
        %v5078 = vsel %vm433, %v5032, 0.0
        %v5079 = vadd.f32 %v5077, %v5078
        %v5080 = vsel %vm433, %v5033, 0.0
        %v5081 = vadd.f32 %v5079, %v5080
        %v5082 = vsel %vm433, %v5034, 0.0
        %v5083 = vadd.f32 %v5081, %v5082
        %v5084 = vsel %vm433, %v5035, 0.0
        %v5085 = vadd.f32 %v5083, %v5084
        %v5086 = vsel %vm433, %v5036, 0.0
        %v5087 = vadd.f32 %v5085, %v5086
        %v5088 = vsel %vm433, %v5037, 0.0
        %v5089 = vadd.f32 %v5087, %v5088
        %v5090 = vsel %vm433, %v5038, 0.0
        %v5091 = vadd.f32 %v5089, %v5090
        %v5092 = vsel %vm433, %v5039, 0.0
        %v5093 = vadd.f32 %v5091, %v5092
        %v5094 = vsel %vm433, %v5040, 0.0
        %v5095 = vadd.f32 %v5093, %v5094
        %v5096 = vsel %vm433, %v5041, 0.0
        %v5097 = vadd.f32 %v5095, %v5096
        %v5098 = vsel %vm433, %v5042, 0.0
        %v5099 = vadd.f32 %v5097, %v5098
        %v5100 = vsel %vm433, %v5043, 0.0
        %v5101 = vadd.f32 %v5099, %v5100
        %v5102 = vsel %vm433, %v5044, 0.0
        %v5103 = vadd.f32 %v5101, %v5102
        %v5104 = vsel %vm433, %v5045, 0.0
        %v5105 = vadd.f32 %v5103, %v5104
        %v5106 = vsel %vm433, %v5046, 0.0
        %v5107 = vadd.f32 %v5105, %v5106
        %v5108 = vsel %vm433, %v5047, 0.0
        %v5109 = vadd.f32 %v5107, %v5108
        %v5110 = vsel %vm433, %v5048, 0.0
        %v5111 = vadd.f32 %v5109, %v5110
        %v5112 = vrot.slane %v5111, 4
        %v5113 = vadd.f32 %v5111, %v5112
        %v5114 = vrot.slane %v5113, 2
        %v5115 = vadd.f32 %v5113, %v5114
        %v5116 = vrot.slane %v5115, 1
        %v5117 = vadd.f32 %v5115, %v5116
        %v5119 = vsel %vm433, %v5016, 0
        %5121 = vmatprep.subr.mxu0 0.0
        %5122 = vmatpush1.msra.mxu0 %v4944
        %5123 = vmatprep.subr.mxu0 0.0
        %5124 = vmatpush1.msra.mxu0 %v4945
        %5125 = vmatprep.subr.mxu0 0.0
        %5126 = vmatpush1.msra.mxu0 0.0
        %5127 = vmatprep.subr.mxu0 0.0
        %5128 = vmatpush1.msra.mxu0 0.0
        %5129 = vmatprep.subr.mxu0 0.0
        %5130 = vmatpush1.msra.mxu0 0.0
        %5131 = vmatprep.subr.mxu0 0.0
        %5132 = vmatpush1.msra.mxu0 0.0
        %5133 = vmatprep.subr.mxu0 0.0
        %5134 = vmatpush1.msra.mxu0 0.0
        %5135 = vmatprep.subr.mxu0 0.0
        %5136 = vmatpush1.msra.mxu0 0.0
        %5137 = vmatprep.subr.mxu0 0.0
        %5138 = vmatpush1.msra.mxu0 0.0
        %5139 = vmatprep.subr.mxu0 0.0
        %5140 = vmatpush1.msra.mxu0 0.0
        %5141 = vmatprep.subr.mxu0 0.0
        %5142 = vmatpush1.msra.mxu0 0.0
        %5143 = vmatprep.subr.mxu0 0.0
        %5144 = vmatpush1.msra.mxu0 0.0
        %5145 = vmatprep.subr.mxu0 0.0
        %5146 = vmatpush1.msra.mxu0 0.0
        %5147 = vmatprep.subr.mxu0 0.0
        %5148 = vmatpush1.msra.mxu0 0.0
        %5149 = vmatprep.subr.mxu0 0.0
        %5150 = vmatpush1.msra.mxu0 0.0
        %5151 = vmatprep.subr.mxu0 0.0
        %5152 = vmatpush1.msra.mxu0 0.0
        %5153 = vmatprep.subr.mxu0 0.0
        %5154 = vmatpush1.msra.mxu0 0.0
        %5155 = vmatprep.subr.mxu0 0.0
        %5156 = vmatpush1.msra.mxu0 0.0
        %5157 = vmatprep.subr.mxu0 0.0
        %5158 = vmatpush1.msra.mxu0 0.0
        %5159 = vmatprep.subr.mxu0 0.0
        %5160 = vmatpush1.msra.mxu0 0.0
        %5161 = vmatprep.subr.mxu0 0.0
        %5162 = vmatpush1.msra.mxu0 0.0
        %5163 = vmatprep.subr.mxu0 0.0
        %5164 = vmatpush1.msra.mxu0 0.0
        %5165 = vmatprep.subr.mxu0 0.0
        %5166 = vmatpush1.msra.mxu0 0.0
        %5167 = vmatprep.subr.mxu0 0.0
        %5168 = vmatpush1.msra.mxu0 0.0
        %5169 = vmatprep.subr.mxu0 0.0
        %5170 = vmatpush1.msra.mxu0 0.0
        %5171 = vmatprep.subr.mxu0 0.0
        %5172 = vmatpush1.msra.mxu0 0.0
        %5173 = vmatprep.subr.mxu0 0.0
        %5174 = vmatpush1.msra.mxu0 0.0
        %5175 = vmatprep.subr.mxu0 0.0
        %5176 = vmatpush1.msra.mxu0 0.0
        %5177 = vmatprep.subr.mxu0 0.0
        %5178 = vmatpush1.msra.mxu0 0.0
        %5179 = vmatprep.subr.mxu0 0.0
        %5180 = vmatpush1.msra.mxu0 0.0
        %5181 = vmatprep.subr.mxu0 0.0
        %5182 = vmatpush1.msra.mxu0 0.0
        %5183 = vmatprep.subr.mxu0 0.0
        %5184 = vmatpush1.msra.mxu0 0.0
        %5185 = vmatprep.mubr.f32.mxu0 0.0
        %5186 = vmatmul.mubr.f32.gmra.mrb[0].mxu0 %v5119
        %v5187 = vpop.f32.mrb[0].mxu0
        %v5188 = vadd.f32 0.0, %v5187
        %v5189 = vpop.f32.mrb[0].mxu0
        %5190 = vdwg.mxu0
        %v5192 = vsel %vm433, %v5117, 0
        %5194 = vmatprep.subr.mxu0 0.0
        %5195 = vmatpush1.msra.mxu0 %v4944
        %5196 = vmatprep.subr.mxu0 0.0
        %5197 = vmatpush1.msra.mxu0 %v4945
        %5198 = vmatprep.subr.mxu0 0.0
        %5199 = vmatpush1.msra.mxu0 0.0
        %5200 = vmatprep.subr.mxu0 0.0
        %5201 = vmatpush1.msra.mxu0 0.0
        %5202 = vmatprep.subr.mxu0 0.0
        %5203 = vmatpush1.msra.mxu0 0.0
        %5204 = vmatprep.subr.mxu0 0.0
        %5205 = vmatpush1.msra.mxu0 0.0
        %5206 = vmatprep.subr.mxu0 0.0
        %5207 = vmatpush1.msra.mxu0 0.0
        %5208 = vmatprep.subr.mxu0 0.0
        %5209 = vmatpush1.msra.mxu0 0.0
        %5210 = vmatprep.subr.mxu0 0.0
        %5211 = vmatpush1.msra.mxu0 0.0
        %5212 = vmatprep.subr.mxu0 0.0
        %5213 = vmatpush1.msra.mxu0 0.0
        %5214 = vmatprep.subr.mxu0 0.0
        %5215 = vmatpush1.msra.mxu0 0.0
        %5216 = vmatprep.subr.mxu0 0.0
        %5217 = vmatpush1.msra.mxu0 0.0
        %5218 = vmatprep.subr.mxu0 0.0
        %5219 = vmatpush1.msra.mxu0 0.0
        %5220 = vmatprep.subr.mxu0 0.0
        %5221 = vmatpush1.msra.mxu0 0.0
        %5222 = vmatprep.subr.mxu0 0.0
        %5223 = vmatpush1.msra.mxu0 0.0
        %5224 = vmatprep.subr.mxu0 0.0
        %5225 = vmatpush1.msra.mxu0 0.0
        %5226 = vmatprep.subr.mxu0 0.0
        %5227 = vmatpush1.msra.mxu0 0.0
        %5228 = vmatprep.subr.mxu0 0.0
        %5229 = vmatpush1.msra.mxu0 0.0
        %5230 = vmatprep.subr.mxu0 0.0
        %5231 = vmatpush1.msra.mxu0 0.0
        %5232 = vmatprep.subr.mxu0 0.0
        %5233 = vmatpush1.msra.mxu0 0.0
        %5234 = vmatprep.subr.mxu0 0.0
        %5235 = vmatpush1.msra.mxu0 0.0
        %5236 = vmatprep.subr.mxu0 0.0
        %5237 = vmatpush1.msra.mxu0 0.0
        %5238 = vmatprep.subr.mxu0 0.0
        %5239 = vmatpush1.msra.mxu0 0.0
        %5240 = vmatprep.subr.mxu0 0.0
        %5241 = vmatpush1.msra.mxu0 0.0
        %5242 = vmatprep.subr.mxu0 0.0
        %5243 = vmatpush1.msra.mxu0 0.0
        %5244 = vmatprep.subr.mxu0 0.0
        %5245 = vmatpush1.msra.mxu0 0.0
        %5246 = vmatprep.subr.mxu0 0.0
        %5247 = vmatpush1.msra.mxu0 0.0
        %5248 = vmatprep.subr.mxu0 0.0
        %5249 = vmatpush1.msra.mxu0 0.0
        %5250 = vmatprep.subr.mxu0 0.0
        %5251 = vmatpush1.msra.mxu0 0.0
        %5252 = vmatprep.subr.mxu0 0.0
        %5253 = vmatpush1.msra.mxu0 0.0
        %5254 = vmatprep.subr.mxu0 0.0
        %5255 = vmatpush1.msra.mxu0 0.0
        %5256 = vmatprep.subr.mxu0 0.0
        %5257 = vmatpush1.msra.mxu0 0.0
        %5258 = vmatprep.mubr.f32.mxu0 0.0
        %5259 = vmatmul.mubr.f32.gmra.mrb[0].mxu0 %v5192
        %v5260 = vpop.f32.mrb[0].mxu0
        %v5261 = vadd.f32 0.0, %v5260
        %v5262 = vpop.f32.mrb[0].mxu0
        %5263 = vdwg.mxu0
        %v5264 = vmul.f32 %v5188, %v5188
        %v5265 = vsub.f32 %v5261, %v5264
        %v5266 = vmax.f32 %v5265, 0.0
        %v5267 = vadd.f32 %v5266, 1e-05
        %v5268 = vrsqrt.pop %v5267
        %v5269 = vmul.f32 %v5268, %v4946
        %v5270 = vmul.f32 %v5188, %v5269
        %v5271 = vsub.f32 %v4947, %v5270
        %v5272 = vlaneseq
        %v5273 = vshrl.u32 %v5272, 7
        %v5274 = vsub.s32 0, %v5273
        %v5275 = vrot.slane %v5269, %v5274
        %v5276 = vmul.f32 %v4912, %v5275
        %v5277 = vmul.f32 %v4913, %v5275
        %v5278 = vmul.f32 %v4914, %v5275
        %v5279 = vmul.f32 %v4915, %v5275
        %v5280 = vmul.f32 %v4916, %v5275
        %v5281 = vmul.f32 %v4917, %v5275
        %v5282 = vmul.f32 %v4918, %v5275
        %v5283 = vmul.f32 %v4919, %v5275
        %v5284 = vmul.f32 %v4920, %v5275
        %v5285 = vmul.f32 %v4921, %v5275
        %v5286 = vmul.f32 %v4922, %v5275
        %v5287 = vmul.f32 %v4923, %v5275
        %v5288 = vmul.f32 %v4924, %v5275
        %v5289 = vmul.f32 %v4925, %v5275
        %v5290 = vmul.f32 %v4926, %v5275
        %v5291 = vmul.f32 %v4927, %v5275
        %v5292 = vmul.f32 %v4928, %v5275
        %v5293 = vmul.f32 %v4929, %v5275
        %v5294 = vmul.f32 %v4930, %v5275
        %v5295 = vmul.f32 %v4931, %v5275
        %v5296 = vmul.f32 %v4932, %v5275
        %v5297 = vmul.f32 %v4933, %v5275
        %v5298 = vmul.f32 %v4934, %v5275
        %v5299 = vmul.f32 %v4935, %v5275
        %v5300 = vmul.f32 %v4936, %v5275
        %v5301 = vmul.f32 %v4937, %v5275
        %v5302 = vmul.f32 %v4938, %v5275
        %v5303 = vmul.f32 %v4939, %v5275
        %v5304 = vmul.f32 %v4940, %v5275
        %v5305 = vmul.f32 %v4941, %v5275
        %v5306 = vmul.f32 %v4942, %v5275
        %v5307 = vmul.f32 %v4943, %v5275
        %v5309 = vlaneseq
        %v5310 = vshrl.u32 %v5309, 7
        %v5311 = vsub.s32 0, %v5310
        %v5312 = vrot.slane %v5271, %v5311
        %v5314 = vadd.f32 %v5276, %v5312
        %v5315 = vadd.f32 %v5277, %v5312
        %v5316 = vadd.f32 %v5278, %v5312
        %v5317 = vadd.f32 %v5279, %v5312
        %v5318 = vadd.f32 %v5280, %v5312
        %v5319 = vadd.f32 %v5281, %v5312
        %v5320 = vadd.f32 %v5282, %v5312
        %v5321 = vadd.f32 %v5283, %v5312
        %v5322 = vadd.f32 %v5284, %v5312
        %v5323 = vadd.f32 %v5285, %v5312
        %v5324 = vadd.f32 %v5286, %v5312
        %v5325 = vadd.f32 %v5287, %v5312
        %v5326 = vadd.f32 %v5288, %v5312
        %v5327 = vadd.f32 %v5289, %v5312
        %v5328 = vadd.f32 %v5290, %v5312
        %v5329 = vadd.f32 %v5291, %v5312
        %v5330 = vadd.f32 %v5292, %v5312
        %v5331 = vadd.f32 %v5293, %v5312
        %v5332 = vadd.f32 %v5294, %v5312
        %v5333 = vadd.f32 %v5295, %v5312
        %v5334 = vadd.f32 %v5296, %v5312
        %v5335 = vadd.f32 %v5297, %v5312
        %v5336 = vadd.f32 %v5298, %v5312
        %v5337 = vadd.f32 %v5299, %v5312
        %v5338 = vadd.f32 %v5300, %v5312
        %v5339 = vadd.f32 %v5301, %v5312
        %v5340 = vadd.f32 %v5302, %v5312
        %v5341 = vadd.f32 %v5303, %v5312
        %v5342 = vadd.f32 %v5304, %v5312
        %v5343 = vadd.f32 %v5305, %v5312
        %v5344 = vadd.f32 %v5306, %v5312
        %v5345 = vadd.f32 %v5307, %v5312
        %v5346 = vsub.f32 0.0, %v5314
        %v5347 = vsub.f32 0.0, %v5315
        %v5348 = vsub.f32 0.0, %v5316
        %v5349 = vsub.f32 0.0, %v5317
        %v5350 = vsub.f32 0.0, %v5318
        %v5351 = vsub.f32 0.0, %v5319
        %v5352 = vsub.f32 0.0, %v5320
        %v5353 = vsub.f32 0.0, %v5321
        %v5354 = vsub.f32 0.0, %v5322
        %v5355 = vsub.f32 0.0, %v5323
        %v5356 = vsub.f32 0.0, %v5324
        %v5357 = vsub.f32 0.0, %v5325
        %v5358 = vsub.f32 0.0, %v5326
        %v5359 = vsub.f32 0.0, %v5327
        %v5360 = vsub.f32 0.0, %v5328
        %v5361 = vsub.f32 0.0, %v5329
        %v5362 = vsub.f32 0.0, %v5330
        %v5363 = vsub.f32 0.0, %v5331
        %v5364 = vsub.f32 0.0, %v5332
        %v5365 = vsub.f32 0.0, %v5333
        %v5366 = vsub.f32 0.0, %v5334
        %v5367 = vsub.f32 0.0, %v5335
        %v5368 = vsub.f32 0.0, %v5336
        %v5369 = vsub.f32 0.0, %v5337
        %v5370 = vsub.f32 0.0, %v5338
        %v5371 = vsub.f32 0.0, %v5339
        %v5372 = vsub.f32 0.0, %v5340
        %v5373 = vsub.f32 0.0, %v5341
        %v5374 = vsub.f32 0.0, %v5342
        %v5375 = vsub.f32 0.0, %v5343
        %v5376 = vsub.f32 0.0, %v5344
        %v5377 = vsub.f32 0.0, %v5345
        %v5378 = vmul.f32 %v5346, 1.442695
        %v5379 = vpow.pop %v5378
        %v5380 = vmul.f32 %v5347, 1.442695
        %v5381 = vpow.pop %v5380
        %v5382 = vmul.f32 %v5348, 1.442695
        %v5383 = vpow.pop %v5382
        %v5384 = vmul.f32 %v5349, 1.442695
        %v5385 = vpow.pop %v5384
        %v5386 = vmul.f32 %v5350, 1.442695
        %v5387 = vpow.pop %v5386
        %v5388 = vmul.f32 %v5351, 1.442695
        %v5389 = vpow.pop %v5388
        %v5390 = vmul.f32 %v5352, 1.442695
        %v5391 = vpow.pop %v5390
        %v5392 = vmul.f32 %v5353, 1.442695
        %v5393 = vpow.pop %v5392
        %v5394 = vmul.f32 %v5354, 1.442695
        %v5395 = vpow.pop %v5394
        %v5396 = vmul.f32 %v5355, 1.442695
        %v5397 = vpow.pop %v5396
        %v5398 = vmul.f32 %v5356, 1.442695
        %v5399 = vpow.pop %v5398
        %v5400 = vmul.f32 %v5357, 1.442695
        %v5401 = vpow.pop %v5400
        %v5402 = vmul.f32 %v5358, 1.442695
        %v5403 = vpow.pop %v5402
        %v5404 = vmul.f32 %v5359, 1.442695
        %v5405 = vpow.pop %v5404
        %v5406 = vmul.f32 %v5360, 1.442695
        %v5407 = vpow.pop %v5406
        %v5408 = vmul.f32 %v5361, 1.442695
        %v5409 = vpow.pop %v5408
        %v5410 = vmul.f32 %v5362, 1.442695
        %v5411 = vpow.pop %v5410
        %v5412 = vmul.f32 %v5363, 1.442695
        %v5413 = vpow.pop %v5412
        %v5414 = vmul.f32 %v5364, 1.442695
        %v5415 = vpow.pop %v5414
        %v5416 = vmul.f32 %v5365, 1.442695
        %v5417 = vpow.pop %v5416
        %v5418 = vmul.f32 %v5366, 1.442695
        %v5419 = vpow.pop %v5418
        %v5420 = vmul.f32 %v5367, 1.442695
        %v5421 = vpow.pop %v5420
        %v5422 = vmul.f32 %v5368, 1.442695
        %v5423 = vpow.pop %v5422
        %v5424 = vmul.f32 %v5369, 1.442695
        %v5425 = vpow.pop %v5424
        %v5426 = vmul.f32 %v5370, 1.442695
        %v5427 = vpow.pop %v5426
        %v5428 = vmul.f32 %v5371, 1.442695
        %v5429 = vpow.pop %v5428
        %v5430 = vmul.f32 %v5372, 1.442695
        %v5431 = vpow.pop %v5430
        %v5432 = vmul.f32 %v5373, 1.442695
        %v5433 = vpow.pop %v5432
        %v5434 = vmul.f32 %v5374, 1.442695
        %v5435 = vpow.pop %v5434
        %v5436 = vmul.f32 %v5375, 1.442695
        %v5437 = vpow.pop %v5436
        %v5438 = vmul.f32 %v5376, 1.442695
        %v5439 = vpow.pop %v5438
        %v5440 = vmul.f32 %v5377, 1.442695
        %v5441 = vpow.pop %v5440
        %v5442 = vadd.f32 %v5379, 1.0
        %v5443 = vadd.f32 %v5381, 1.0
        %v5444 = vadd.f32 %v5383, 1.0
        %v5445 = vadd.f32 %v5385, 1.0
        %v5446 = vadd.f32 %v5387, 1.0
        %v5447 = vadd.f32 %v5389, 1.0
        %v5448 = vadd.f32 %v5391, 1.0
        %v5449 = vadd.f32 %v5393, 1.0
        %v5450 = vadd.f32 %v5395, 1.0
        %v5451 = vadd.f32 %v5397, 1.0
        %v5452 = vadd.f32 %v5399, 1.0
        %v5453 = vadd.f32 %v5401, 1.0
        %v5454 = vadd.f32 %v5403, 1.0
        %v5455 = vadd.f32 %v5405, 1.0
        %v5456 = vadd.f32 %v5407, 1.0
        %v5457 = vadd.f32 %v5409, 1.0
        %v5458 = vadd.f32 %v5411, 1.0
        %v5459 = vadd.f32 %v5413, 1.0
        %v5460 = vadd.f32 %v5415, 1.0
        %v5461 = vadd.f32 %v5417, 1.0
        %v5462 = vadd.f32 %v5419, 1.0
        %v5463 = vadd.f32 %v5421, 1.0
        %v5464 = vadd.f32 %v5423, 1.0
        %v5465 = vadd.f32 %v5425, 1.0
        %v5466 = vadd.f32 %v5427, 1.0
        %v5467 = vadd.f32 %v5429, 1.0
        %v5468 = vadd.f32 %v5431, 1.0
        %v5469 = vadd.f32 %v5433, 1.0
        %v5470 = vadd.f32 %v5435, 1.0
        %v5471 = vadd.f32 %v5437, 1.0
        %v5472 = vadd.f32 %v5439, 1.0
        %v5473 = vadd.f32 %v5441, 1.0
        %v5474 = vrcp.pop %v5442
        %v5475 = vrcp.pop %v5443
        %v5476 = vrcp.pop %v5444
        %v5477 = vrcp.pop %v5445
        %v5478 = vrcp.pop %v5446
        %v5479 = vrcp.pop %v5447
        %v5480 = vrcp.pop %v5448
        %v5481 = vrcp.pop %v5449
        %v5482 = vrcp.pop %v5450
        %v5483 = vrcp.pop %v5451
        %v5484 = vrcp.pop %v5452
        %v5485 = vrcp.pop %v5453
        %v5486 = vrcp.pop %v5454
        %v5487 = vrcp.pop %v5455
        %v5488 = vrcp.pop %v5456
        %v5489 = vrcp.pop %v5457
        %v5490 = vrcp.pop %v5458
        %v5491 = vrcp.pop %v5459
        %v5492 = vrcp.pop %v5460
        %v5493 = vrcp.pop %v5461
        %v5494 = vrcp.pop %v5462
        %v5495 = vrcp.pop %v5463
        %v5496 = vrcp.pop %v5464
        %v5497 = vrcp.pop %v5465
        %v5498 = vrcp.pop %v5466
        %v5499 = vrcp.pop %v5467
        %v5500 = vrcp.pop %v5468
        %v5501 = vrcp.pop %v5469
        %v5502 = vrcp.pop %v5470
        %v5503 = vrcp.pop %v5471
        %v5504 = vrcp.pop %v5472
        %v5505 = vrcp.pop %v5473
        %v5506 = vmul.f32 %v5314, %v5474
        %v5507 = vmul.f32 %v5315, %v5475
        %v5508 = vmul.f32 %v5316, %v5476
        %v5509 = vmul.f32 %v5317, %v5477
        %v5510 = vmul.f32 %v5318, %v5478
        %v5511 = vmul.f32 %v5319, %v5479
        %v5512 = vmul.f32 %v5320, %v5480
        %v5513 = vmul.f32 %v5321, %v5481
        %v5514 = vmul.f32 %v5322, %v5482
        %v5515 = vmul.f32 %v5323, %v5483
        %v5516 = vmul.f32 %v5324, %v5484
        %v5517 = vmul.f32 %v5325, %v5485
        %v5518 = vmul.f32 %v5326, %v5486
        %v5519 = vmul.f32 %v5327, %v5487
        %v5520 = vmul.f32 %v5328, %v5488
        %v5521 = vmul.f32 %v5329, %v5489
        %v5522 = vmul.f32 %v5330, %v5490
        %v5523 = vmul.f32 %v5331, %v5491
        %v5524 = vmul.f32 %v5332, %v5492
        %v5525 = vmul.f32 %v5333, %v5493
        %v5526 = vmul.f32 %v5334, %v5494
        %v5527 = vmul.f32 %v5335, %v5495
        %v5528 = vmul.f32 %v5336, %v5496
        %v5529 = vmul.f32 %v5337, %v5497
        %v5530 = vmul.f32 %v5338, %v5498
        %v5531 = vmul.f32 %v5339, %v5499
        %v5532 = vmul.f32 %v5340, %v5500
        %v5533 = vmul.f32 %v5341, %v5501
        %v5534 = vmul.f32 %v5342, %v5502
        %v5535 = vmul.f32 %v5343, %v5503
        %v5536 = vmul.f32 %v5344, %v5504
        %v5537 = vmul.f32 %v5345, %v5505
        %5538 = vst.msk [vmem:[%s375] sm:$0xff] %vm433, %v5506
        %5539 = vst.msk [vmem:[%s375 + $0x8] sm:$0xff] %vm433, %v5507
        %5540 = vst.msk [vmem:[%s375 + $0x10] sm:$0xff] %vm433, %v5508
        %5541 = vst.msk [vmem:[%s375 + $0x18] sm:$0xff] %vm433, %v5509
        %5542 = vst.msk [vmem:[%s375 + $0x20] sm:$0xff] %vm433, %v5510
        %5543 = vst.msk [vmem:[%s375 + $0x28] sm:$0xff] %vm433, %v5511
        %5544 = vst.msk [vmem:[%s375 + $0x30] sm:$0xff] %vm433, %v5512
        %5545 = vst.msk [vmem:[%s375 + $0x38] sm:$0xff] %vm433, %v5513
        %5546 = vst.msk [vmem:[%s375 + $0x40] sm:$0xff] %vm433, %v5514
        %5547 = vst.msk [vmem:[%s375 + $0x48] sm:$0xff] %vm433, %v5515
        %5548 = vst.msk [vmem:[%s375 + $0x50] sm:$0xff] %vm433, %v5516
        %5549 = vst.msk [vmem:[%s375 + $0x58] sm:$0xff] %vm433, %v5517
        %5550 = vst.msk [vmem:[%s375 + $0x60] sm:$0xff] %vm433, %v5518
        %5551 = vst.msk [vmem:[%s375 + $0x68] sm:$0xff] %vm433, %v5519
        %5552 = vst.msk [vmem:[%s375 + $0x70] sm:$0xff] %vm433, %v5520
        %5553 = vst.msk [vmem:[%s375 + $0x78] sm:$0xff] %vm433, %v5521
        %5554 = vst.msk [vmem:[%s375 + $0x80] sm:$0xff] %vm433, %v5522
        %5555 = vst.msk [vmem:[%s375 + $0x88] sm:$0xff] %vm433, %v5523
        %5556 = vst.msk [vmem:[%s375 + $0x90] sm:$0xff] %vm433, %v5524
        %5557 = vst.msk [vmem:[%s375 + $0x98] sm:$0xff] %vm433, %v5525
        %5558 = vst.msk [vmem:[%s375 + $0xa0] sm:$0xff] %vm433, %v5526
        %5559 = vst.msk [vmem:[%s375 + $0xa8] sm:$0xff] %vm433, %v5527
        %5560 = vst.msk [vmem:[%s375 + $0xb0] sm:$0xff] %vm433, %v5528
        %5561 = vst.msk [vmem:[%s375 + $0xb8] sm:$0xff] %vm433, %v5529
        %5562 = vst.msk [vmem:[%s375 + $0xc0] sm:$0xff] %vm433, %v5530
        %5563 = vst.msk [vmem:[%s375 + $0xc8] sm:$0xff] %vm433, %v5531
        %5564 = vst.msk [vmem:[%s375 + $0xd0] sm:$0xff] %vm433, %v5532
        %5565 = vst.msk [vmem:[%s375 + $0xd8] sm:$0xff] %vm433, %v5533
        %5566 = vst.msk [vmem:[%s375 + $0xe0] sm:$0xff] %vm433, %v5534
        %5567 = vst.msk [vmem:[%s375 + $0xe8] sm:$0xff] %vm433, %v5535
        %5568 = vst.msk [vmem:[%s375 + $0xf0] sm:$0xff] %vm433, %v5536
        %5569 = vst.msk [vmem:[%s375 + $0xf8] sm:$0xff] %vm433, %v5537
        %s5570 = sand.u32 %s229, 1
        %s5571 = scalar_lea.sflag [#allocation4], %s5570
        %s5572 = sand.u32 %s229, 1
        %s5573 = smul.addr %s5572, 256
        %s5574 = scalar_lea.vmem [#allocation8], %s5573
        // Predicated region
        $region69: #{tpu_custom_call.1} parent=55 // pred_check
          %p5575 = pneg %p239
        $region70: #{tpu_custom_call.1} parent=55 // pred_check_branch
          %5577 = sbr.rel (%p5575) target = $region72
        $region71: #{tpu_custom_call.1} parent=55 // pred_region
          %s5579 = ssub.s32 4096, 4096
          %5580 = vsyncadd %s5571, %s5579
          %s5581 = smul.addr %s27, 32
          %s5582 = smul.addr %s5581, 128
          %s5583 = scalar_lea.hbm %s9, %s5582
          %s5584 = sshll.u32 %s5574, 4
          %s5585 = int_to_ptr.vmem [resolvable:$true] %s5584
          %5590 = dma.vmem_to_hbm [thread:$0]  %s5585, 4096, %s5583, %s5571, 128, 128, 8
        $region72: #{tpu_custom_call.1} parent=55 // pred_fallthru
          _
      $region56: #{tpu_custom_call.1} parent=5 // pred_fallthru
        _
      %p5591 = scmp.le.s32.totalorder 2, %s22
      // Predicated region
      $region73: #{tpu_custom_call.1} parent=5 // pred_check
        %p5592 = pneg %p5591
      $region74: #{tpu_custom_call.1} parent=5 // pred_check_branch
        %5594 = sbr.rel (%p5592) target = $region76
      $region75: #{tpu_custom_call.1} parent=5 // pred_region
        %s5595 = ssub.s32 %s22, 2
        // Predicated region
        $region77: #{tpu_custom_call.1} parent=75 // pred_check
          %p5596 = pneg %p245
        $region78: #{tpu_custom_call.1} parent=75 // pred_check_branch
          %5598 = sbr.rel (%p5596) target = $region80
        $region79: #{tpu_custom_call.1} parent=75 // pred_region
          %s5599 = sand.u32 %s230, 1
          %s5600 = scalar_lea.sflag [#allocation4], %s5599
          %s5601 = sand.u32 %s230, 1
          %s5602 = smul.addr %s5601, 256
          %s5603 = scalar_lea.vmem [#allocation8], %s5602
          %5604 = dma.done %s5600, 4096
        $region80: #{tpu_custom_call.1} parent=75 // pred_fallthru
          _
      $region76: #{tpu_custom_call.1} parent=5 // pred_fallthru
        _
    $region6: #{tpu_custom_call.1} parent=1 // loop_footer
      %s26 = sadd.s32 1, %s22
    $region7: #{tpu_custom_call.1} parent=1 // loop_footer_branch
      %21 = sbr.rel target = $region3
    $region8: #{tpu_custom_call.1} parent=1 // loop_exit
      _
    %5605 = vsyncpa [#allocation3], 1
    %s5606 = scalar_lea.sflag [#allocation3], 1
    %5607 = vsyncpa %s5606, 1
    %5608 = vsyncpa [#allocation6], 1
    %5609 = vsyncpa [#allocation4], 1
    %s5610 = scalar_lea.sflag [#allocation4], 1
    %5611 = vsyncpa %s5610, 1

</llo_original>
